<compile_context>
chip_gen: v5e
topology: v5e:2x2
jax: 0.10.0
libtpu: 0.0.40
codegen_flags: <defaults>
</compile_context>

<pallas_src>
import jax
import jax.numpy as jnp
from jax.experimental import pallas as pl
from jax.experimental.pallas import tpu as pltpu

EPS = 1e-5                      # nn.BatchNorm2d default eps
_LANE = 128                     # lane width / channel padding unit
_MAX_BLOCK_ROWS = 8             # toy setting; production: size against VMEM per gen
_VMEM_LIMIT = 48 * 1024 * 1024  # explicit scoped-VMEM cap (fits v5e/v6e/v7x)


# --------------------------------------------------------------------------
# Kernels
# --------------------------------------------------------------------------
def _conv_body(xm_ref, xt_ref, xb_ref, w_ref, b_ref, scale_ref, shift_ref,
               y_ref, stats_ref, *, prenorm):
    """One (batch n, cout-tile co, row-tile r) grid cell of a 3x3 'same' conv.

    xm_ref : (1, h, W, Cin_p)   main row tile          (bf16)
    xt_ref : (1, 1, W, Cin_p)   row above the tile     (bf16, zeroed if OOB)
    xb_ref : (1, 1, W, Cin_p)   row below the tile     (bf16, zeroed if OOB)
    w_ref  : (9*Cin_p, Cout_t)  im2col weight slab     (bf16)
    b_ref  : (1, 1, 1, Cout_t)  conv bias              (f32)
    scale/shift_ref (prenorm only): per-channel BN affine for the *input*
    y_ref  : (1, h, W, Cout_t)  conv+bias output       (bf16)
    stats_ref : (1, 2, Cout_t)  per-channel [sum, sumsq], accumulated over r
    """
    r = pl.program_id(2)
    nr = pl.num_programs(2)
    _, h, w_cols, cin = xm_ref.shape
    cout_blk = y_ref.shape[-1]

    def _maybe_pre(v):
        if prenorm:  # fused BN+ReLU of the previous stage (f32 math, bf16 matmul in)
            v = jnp.maximum(v.astype(jnp.float32) * scale_ref[...] + shift_ref[...], 0.0)
        return v.astype(jnp.bfloat16)

    xm = _maybe_pre(xm_ref[...])
    xt = _maybe_pre(xt_ref[...])
    xb = _maybe_pre(xb_ref[...])
    # Halo rows outside the image behave as zero padding (padding=1 semantics).
    xt = jnp.where(r > 0, xt, jnp.zeros_like(xt))
    xb = jnp.where(r + 1 < nr, xb, jnp.zeros_like(xb))

    rows = jnp.concatenate([xt, xm, xb], axis=1)              # (1, h+2, W, Cin)
    zcol = jnp.zeros((1, h + 2, 1, cin), jnp.bfloat16)
    xpad = jnp.concatenate([zcol, rows, zcol], axis=2)        # (1, h+2, W+2, Cin)

    # im2col: one MXU matmul with K = 9*Cin_p (bf16 in, f32 accumulation).
    patches = [xpad[0, dy:dy + h, dx:dx + w_cols, :]
               for dy in range(3) for dx in range(3)]
    lhs = jnp.concatenate(patches, axis=-1).reshape(h * w_cols, 9 * cin)
    acc = jnp.dot(lhs, w_ref[...], preferred_element_type=jnp.float32)
    acc = acc + b_ref[...].reshape(1, cout_blk)

    y_ref[...] = acc.reshape(1, h, w_cols, cout_blk).astype(y_ref.dtype)

    # One-pass BN statistics: per-channel sum and sum of squares.
    s = jnp.sum(acc, axis=0, keepdims=True)                   # (1, Cout_t)
    sq = jnp.sum(acc * acc, axis=0, keepdims=True)            # (1, Cout_t)

    @pl.when(r == 0)
    def _():
        stats_ref[...] = jnp.zeros_like(stats_ref)

    stats_ref[...] += jnp.concatenate([s, sq], axis=0)[None]  # (1, 2, Cout_t)


def _conv_kernel_plain(xm, xt, xb, w, b, y, st):
    _conv_body(xm, xt, xb, w, b, None, None, y, st, prenorm=False)


def _conv_kernel_fused_bn_relu(xm, xt, xb, w, b, sc, sh, y, st):
    _conv_body(xm, xt, xb, w, b, sc, sh, y, st, prenorm=True)


def _bn_relu_kernel(y_ref, scale_ref, shift_ref, o_ref):
    """Per-channel scale/shift (folded bias+gamma+beta+mean+invstd) + ReLU."""
    y = y_ref[...].astype(jnp.float32)
    o_ref[...] = jnp.maximum(y * scale_ref[...] + shift_ref[...], 0.0).astype(o_ref.dtype)


# --------------------------------------------------------------------------
# Pallas wrappers
# --------------------------------------------------------------------------
def _round_up(v, m):
    return (v + m - 1) // m * m


def _pick_block_rows(h_total):
    br = min(_MAX_BLOCK_ROWS, h_total)
    while h_total % br:
        br -= 1
    return br


def _pad_channels(x, cp):
    n, h, w, c = x.shape
    x = x.astype(jnp.bfloat16)
    if c == cp:
        return x
    return jnp.pad(x, ((0, 0), (0, 0), (0, 0), (0, cp - c)))


def _pad_weight(w_hwio, cin_p, cout_p):
    kh, kw, cin, cout = w_hwio.shape
    wp = jnp.zeros((kh, kw, cin_p, cout_p), jnp.float32)
    wp = wp.at[:, :, :cin, :cout].set(w_hwio)
    return wp.reshape(kh * kw * cin_p, cout_p).astype(jnp.bfloat16)


def _pad_vec(v, cp):
    return jnp.zeros((cp,), jnp.float32).at[: v.shape[0]].set(v.astype(jnp.float32))


def _bn_scale_shift(stats, gamma_p, beta_p, count):
    """Fold batch mean/var + gamma/beta into one per-channel scale & shift."""
    ssum = jnp.sum(stats[:, 0, :], axis=0)
    ssq = jnp.sum(stats[:, 1, :], axis=0)
    mean = ssum / count
    var = jnp.maximum(ssq / count - mean * mean, 0.0)   # biased var (BN training norm)
    scale = gamma_p * jax.lax.rsqrt(var + EPS)
    shift = beta_p - mean * scale
    cp = gamma_p.shape[0]
    return scale.reshape(1, 1, 1, cp), shift.reshape(1, 1, 1, cp)


def _conv_bias_stats(x, w_slab, bias, cout_p, block_rows, pre=None):
    """Tiled 3x3 conv + bias; returns (y bf16, per-batch per-channel [sum,sumsq]).

    pre = (scale, shift): fuse a BN affine + ReLU of the *input* into this pass.
    """
    n, h_total, w_total, cin_p = x.shape
    h = block_rows
    nr = h_total // h
    co_t = 256 if cout_p % 256 == 0 else 128     # 256-aligned MXU tiles when possible
    nco = cout_p // co_t

    x_main = pl.BlockSpec((1, h, w_total, cin_p), lambda b, co, r: (b, r, 0, 0))
    x_top = pl.BlockSpec((1, 1, w_total, cin_p),
                         lambda b, co, r: (b, jnp.maximum(r * h - 1, 0), 0, 0))
    x_bot = pl.BlockSpec((1, 1, w_total, cin_p),
                         lambda b, co, r: (b, jnp.minimum(r * h + h, h_total - 1), 0, 0))
    w_spec = pl.BlockSpec((9 * cin_p, co_t), lambda b, co, r: (0, co))
    b_spec = pl.BlockSpec((1, 1, 1, co_t), lambda b, co, r: (0, 0, 0, co))
    vec_in = pl.BlockSpec((1, 1, 1, cin_p), lambda b, co, r: (0, 0, 0, 0))

    if pre is None:
        kernel = _conv_kernel_plain
        in_specs = [x_main, x_top, x_bot, w_spec, b_spec]
        operands = (x, x, x, w_slab, bias)
    else:
        kernel = _conv_kernel_fused_bn_relu
        in_specs = [x_main, x_top, x_bot, w_spec, b_spec, vec_in, vec_in]
        operands = (x, x, x, w_slab, bias, pre[0], pre[1])

    y, stats = pl.pallas_call(
        kernel,
        grid_spec=pltpu.PrefetchScalarGridSpec(
            num_scalar_prefetch=0,
            grid=(n, nco, nr),
            in_specs=in_specs,
            out_specs=[
                pl.BlockSpec((1, h, w_total, co_t), lambda b, co, r: (b, r, 0, co)),
                pl.BlockSpec((1, 2, co_t), lambda b, co, r: (b, 0, co)),
            ],
        ),
        out_shape=[
            jax.ShapeDtypeStruct((n, h_total, w_total, cout_p), jnp.bfloat16),
            jax.ShapeDtypeStruct((n, 2, cout_p), jnp.float32),
        ],
        compiler_params=pltpu.CompilerParams(
            dimension_semantics=("parallel", "parallel", "arbitrary"),
            vmem_limit_bytes=_VMEM_LIMIT),
    )(*operands)
    return y, stats


def _bn_relu(y, scale, shift, out_dtype):
    n, h_total, w_total, c = y.shape
    br = _pick_block_rows(h_total)
    return pl.pallas_call(
        _bn_relu_kernel,
        grid_spec=pltpu.PrefetchScalarGridSpec(
            num_scalar_prefetch=0,
            grid=(n, h_total // br),
            in_specs=[
                pl.BlockSpec((1, br, w_total, c), lambda b, r: (b, r, 0, 0)),
                pl.BlockSpec((1, 1, 1, c), lambda b, r: (0, 0, 0, 0)),
                pl.BlockSpec((1, 1, 1, c), lambda b, r: (0, 0, 0, 0)),
            ],
            out_specs=pl.BlockSpec((1, br, w_total, c), lambda b, r: (b, r, 0, 0)),
        ),
        out_shape=jax.ShapeDtypeStruct(y.shape, out_dtype),
        compiler_params=pltpu.CompilerParams(
            dimension_semantics=("parallel", "parallel"),
            vmem_limit_bytes=_VMEM_LIMIT),
    )(y, scale, shift)


def double_conv_nhwc(x, p):
    """DoubleConv forward: (conv3x3 -> BN(train) -> ReLU) x 2.  NHWC f32 in/out."""
    n, h_total, w_total, cin = x.shape
    cout1 = p['w1'].shape[-1]
    cout2 = p['w2'].shape[-1]
    cin_p = _round_up(cin, _LANE)
    c1_p = _round_up(cout1, _LANE)
    c2_p = _round_up(cout2, _LANE)
    br = _pick_block_rows(h_total)
    count = n * h_total * w_total

    xq = _pad_channels(x, cin_p)
    w1 = _pad_weight(p['w1'], cin_p, c1_p)
    b1 = _pad_vec(p['b1'], c1_p).reshape(1, 1, 1, c1_p)
    w2 = _pad_weight(p['w2'], c1_p, c2_p)
    b2 = _pad_vec(p['b2'], c2_p).reshape(1, 1, 1, c2_p)
    g1, be1 = _pad_vec(p['g1'], c1_p), _pad_vec(p['beta1'], c1_p)
    g2, be2 = _pad_vec(p['g2'], c2_p), _pad_vec(p['beta2'], c2_p)

    # P1: conv1 + bias, accumulate per-channel sum/sumsq across row tiles.
    y1, st1 = _conv_bias_stats(xq, w1, b1, c1_p, br)
    sc1, sh1 = _bn_scale_shift(st1, g1, be1, count)
    # P2: BN1 + ReLU fused into conv2 + bias (stage-1 activation never makes a
    #     normalized round-trip through HBM), accumulate stats for BN2.
    y2, st2 = _conv_bias_stats(y1, w2, b2, c2_p, br, pre=(sc1, sh1))
    sc2, sh2 = _bn_scale_shift(st2, g2, be2, count)
    # P3: BN2 + ReLU (single fused per-channel FMA + max).
    out = _bn_relu(y2, sc2, sh2, jnp.float32)
    return out[..., :cout2]


def double_conv(x_nchw, p):
    """NCHW wrapper matching the PyTorch DoubleConv interface."""
    x = jnp.transpose(x_nchw, (0, 2, 3, 1))
    y = double_conv_nhwc(x, p)
    return jnp.transpose(y, (0, 3, 1, 2))


# --------------------------------------------------------------------------
# UNet glue (plain JAX) + forward
# --------------------------------------------------------------------------
def _maxpool2x2(x):                              # NHWC
    n, h, w, c = x.shape
    return x.reshape(n, h // 2, 2, w // 2, 2, c).max(axis=(2, 4))


def _up_conv2x2(x, w, b):                        # w: (Cin, Cout, 2, 2) (PyTorch layout)
    y = jnp.einsum('nijc,coab->niajbo', x, w)
    n, h, _, wdt, _, o = y.shape
    return y.reshape(n, 2 * h, 2 * wdt, o) + b.reshape(1, 1, 1, o)


def _conv1x1(x, w, b):                           # w: (Cin, Cout)
    return jnp.einsum('nhwc,co->nhwo', x, w) + b.reshape(1, 1, 1, -1)


def _init_double_conv(key, cin, cout):
    ks = jax.random.split(key, 8)
    s1 = (cin * 9) ** -0.5
    s2 = (cout * 9) ** -0.5
    return dict(
        w1=jax.random.normal(ks[0], (3, 3, cin, cout), jnp.float32) * s1,
        b1=jax.random.normal(ks[1], (cout,), jnp.float32) * s1,
        g1=1.0 + 0.1 * jax.random.normal(ks[2], (cout,), jnp.float32),
        beta1=0.1 * jax.random.normal(ks[3], (cout,), jnp.float32),
        w2=jax.random.normal(ks[4], (3, 3, cout, cout), jnp.float32) * s2,
        b2=jax.random.normal(ks[5], (cout,), jnp.float32) * s2,
        g2=1.0 + 0.1 * jax.random.normal(ks[6], (cout,), jnp.float32),
        beta2=0.1 * jax.random.normal(ks[7], (cout,), jnp.float32),
    )


def _init_up(key, cin, cout):
    return dict(w=jax.random.normal(key, (cin, cout, 2, 2), jnp.float32) * (cin * 4) ** -0.5,
                b=jnp.zeros((cout,), jnp.float32))


def init_unet_params(key, in_ch, out_ch):
    ks = jax.random.split(key, 15)
    p = {}
    p['conv1'] = _init_double_conv(ks[0], in_ch, 64)
    p['conv2'] = _init_double_conv(ks[1], 64, 128)
    p['conv3'] = _init_double_conv(ks[2], 128, 256)
    p['conv4'] = _init_double_conv(ks[3], 256, 512)
    p['conv5'] = _init_double_conv(ks[4], 512, 1024)
    p['up1'] = _init_up(ks[5], 1024, 512)
    p['conv6'] = _init_double_conv(ks[6], 1024, 512)
    p['up2'] = _init_up(ks[7], 512, 256)
    p['conv7'] = _init_double_conv(ks[8], 512, 256)
    p['up3'] = _init_up(ks[9], 256, 128)
    p['conv8'] = _init_double_conv(ks[10], 256, 128)
    p['up4'] = _init_up(ks[11], 128, 64)
    p['conv9'] = _init_double_conv(ks[12], 128, 64)
    p['conv10'] = dict(w=jax.random.normal(ks[13], (64, out_ch), jnp.float32) * 64 ** -0.5,
                       b=jnp.zeros((out_ch,), jnp.float32))
    return p


def unet_forward(x_nchw, p):
    x = jnp.transpose(x_nchw, (0, 2, 3, 1))      # NCHW -> NHWC
    c1 = double_conv_nhwc(x, p['conv1'])
    c2 = double_conv_nhwc(_maxpool2x2(c1), p['conv2'])
    c3 = double_conv_nhwc(_maxpool2x2(c2), p['conv3'])
    c4 = double_conv_nhwc(_maxpool2x2(c3), p['conv4'])
    c5 = double_conv_nhwc(_maxpool2x2(c4), p['conv5'])
    u1 = _up_conv2x2(c5, p['up1']['w'], p['up1']['b'])
    c6 = double_conv_nhwc(jnp.concatenate([u1, c4], axis=-1), p['conv6'])
    u2 = _up_conv2x2(c6, p['up2']['w'], p['up2']['b'])
    c7 = double_conv_nhwc(jnp.concatenate([u2, c3], axis=-1), p['conv7'])
    u3 = _up_conv2x2(c7, p['up3']['w'], p['up3']['b'])
    c8 = double_conv_nhwc(jnp.concatenate([u3, c2], axis=-1), p['conv8'])
    u4 = _up_conv2x2(c8, p['up4']['w'], p['up4']['b'])
    c9 = double_conv_nhwc(jnp.concatenate([u4, c1], axis=-1), p['conv9'])
    c10 = _conv1x1(c9, p['conv10']['w'], p['conv10']['b'])
    return jnp.transpose(c10, (0, 3, 1, 2))      # NHWC -> NCHW


# --------------------------------------------------------------------------
# Precision-matched pure-JAX reference (correctness check for DoubleConv)
# --------------------------------------------------------------------------
def _ref_stage(x, w, b, gamma, beta):
    y = jax.lax.conv_general_dilated(
        x.astype(jnp.bfloat16), w.astype(jnp.bfloat16),
        window_strides=(1, 1), padding='SAME',
        dimension_numbers=('NHWC', 'HWIO', 'NHWC'),
        preferred_element_type=jnp.float32)
    y = y + b.reshape(1, 1, 1, -1)
    mean = jnp.mean(y, axis=(0, 1, 2))
    var = jnp.maximum(jnp.mean(jnp.square(y), axis=(0, 1, 2)) - mean * mean, 0.0)
    scale = gamma * jax.lax.rsqrt(var + EPS)
    shift = beta - mean * scale
    yq = y.astype(jnp.bfloat16).astype(jnp.float32)   # matches kernel's bf16 staging
    return jnp.maximum(yq * scale + shift, 0.0)


def ref_double_conv(x_nchw, p):
    x = jnp.transpose(x_nchw, (0, 2, 3, 1))
    a = _ref_stage(x, p['w1'], p['b1'], p['g1'], p['beta1'])
    a = _ref_stage(a, p['w2'], p['b2'], p['g2'], p['beta2'])
    return jnp.transpose(a, (0, 3, 1, 2))


# --------------------------------------------------------------------------
if __name__ == "__main__":
    key = jax.random.PRNGKey(0)
    k_x, k_p, k_u, k_xu = jax.random.split(key, 4)

    # ---- DoubleConv: Pallas vs precision-matched JAX reference ----
    N, Cin, Cout, H, W = 2, 4, 8, 16, 16
    x = jax.random.normal(k_x, (N, Cin, H, W), jnp.float32)
    dc_params = _init_double_conv(k_p, Cin, Cout)

    out = jax.jit(double_conv)(x, dc_params)
    out = jax.block_until_ready(out)
    ref = ref_double_conv(x, dc_params)
    assert out.shape == (N, Cout, H, W), out.shape
    err = float(jnp.max(jnp.abs(out - ref)))
    assert err < 2e-2, f"max abs err {err}"

    # ---- Full UNet forward: Pallas DoubleConv blocks + JAX glue ----
    in_ch, out_ch, S = 4, 3, 32
    xu = jax.random.normal(k_xu, (2, in_ch, S, S), jnp.float32)
    uparams = init_unet_params(k_u, in_ch, out_ch)
    y = jax.jit(unet_forward)(xu, uparams)
    y = jax.block_until_ready(y)
    assert y.shape == (2, out_ch, S, S), y.shape
    assert bool(jnp.all(jnp.isfinite(y)))

    print("KERNEL_OK")
</pallas_src>

<mosaic_0001>
module attributes {stable_mosaic.version = 11 : i64} {
  func.func @_conv_kernel_plain(%arg0: i32, %arg1: i32, %arg2: i32, %arg3: memref<1x8x16x128xbf16, #tpu.memory_space<vmem>>, %arg4: memref<1x1x16x128xbf16, #tpu.memory_space<vmem>>, %arg5: memref<1x1x16x128xbf16, #tpu.memory_space<vmem>>, %arg6: memref<1152x128xbf16, #tpu.memory_space<vmem>>, %arg7: memref<1x1x1x128xf32, #tpu.memory_space<vmem>>, %arg8: memref<1x8x16x128xbf16, #tpu.memory_space<vmem>>, %arg9: memref<1x2x128xf32, #tpu.memory_space<vmem>>) attributes {dimension_semantics = [#tpu.dimension_semantics<parallel>, #tpu.dimension_semantics<parallel>, #tpu.dimension_semantics<arbitrary>], iteration_bounds = array<i64: 2, 1, 2>, scalar_prefetch = 0 : i64, scratch_operands = 0 : i64, tpu.core_type = #tpu.core_type<tc>, window_params = [{transform_indices = @transform_0, window_bounds = array<i64: 1, 8, 16, 128>}, {transform_indices = @transform_1, window_bounds = array<i64: 1, 1, 16, 128>}, {transform_indices = @transform_2, window_bounds = array<i64: 1, 1, 16, 128>}, {transform_indices = @transform_3, window_bounds = array<i64: 1152, 128>}, {transform_indices = @transform_4, window_bounds = array<i64: 1, 1, 1, 128>}, {transform_indices = @transform_5, window_bounds = array<i64: 1, 8, 16, 128>}, {transform_indices = @transform_6, window_bounds = array<i64: 1, 2, 128>}]} {
    %c0 = arith.constant 0 : index
    %c0_0 = arith.constant 0 : index
    %c0_1 = arith.constant 0 : index
    %c0_2 = arith.constant 0 : index
    %0 = vector.load %arg3[%c0, %c0_0, %c0_1, %c0_2] : memref<1x8x16x128xbf16, #tpu.memory_space<vmem>>, vector<1x8x16x128xbf16>
    %c0_3 = arith.constant 0 : index
    %c0_4 = arith.constant 0 : index
    %c0_5 = arith.constant 0 : index
    %c0_6 = arith.constant 0 : index
    %1 = vector.load %arg4[%c0_3, %c0_4, %c0_5, %c0_6] : memref<1x1x16x128xbf16, #tpu.memory_space<vmem>>, vector<1x1x16x128xbf16>
    %c0_7 = arith.constant 0 : index
    %c0_8 = arith.constant 0 : index
    %c0_9 = arith.constant 0 : index
    %c0_10 = arith.constant 0 : index
    %2 = vector.load %arg5[%c0_7, %c0_8, %c0_9, %c0_10] : memref<1x1x16x128xbf16, #tpu.memory_space<vmem>>, vector<1x1x16x128xbf16>
    %c0_i32 = arith.constant 0 : i32
    %3 = arith.cmpi sgt, %arg2, %c0_i32 : i32
    %cst = arith.constant 0.000000e+00 : bf16
    %4 = vector.broadcast %cst : bf16 to vector<1x1x16x128xbf16>
    %5 = arith.select %3, %1, %4 : vector<1x1x16x128xbf16>
    %c1_i32 = arith.constant 1 : i32
    %6 = arith.addi %arg2, %c1_i32 : i32
    %c2_i32 = arith.constant 2 : i32
    %7 = arith.cmpi slt, %6, %c2_i32 : i32
    %cst_11 = arith.constant 0.000000e+00 : bf16
    %8 = vector.broadcast %cst_11 : bf16 to vector<1x1x16x128xbf16>
    %9 = arith.select %7, %2, %8 : vector<1x1x16x128xbf16>
    %10 = tpu.concatenate %5, %0, %9 in 1 : vector<1x1x16x128xbf16>, vector<1x8x16x128xbf16>, vector<1x1x16x128xbf16> -> vector<1x10x16x128xbf16>
    %cst_12 = arith.constant 0.000000e+00 : bf16
    %11 = vector.broadcast %cst_12 : bf16 to vector<1x10x1x128xbf16>
    %12 = tpu.concatenate %11, %10, %11 in 2 : vector<1x10x1x128xbf16>, vector<1x10x16x128xbf16>, vector<1x10x1x128xbf16> -> vector<1x10x18x128xbf16>
    %13 = vector.extract_strided_slice %12 {offsets = [0, 0, 0, 0], sizes = [1, 8, 16, 128], strides = [1, 1, 1, 1]} : vector<1x10x18x128xbf16> to vector<1x8x16x128xbf16>
    %14 = vector.shape_cast %13 : vector<1x8x16x128xbf16> to vector<8x16x128xbf16>
    %15 = vector.extract_strided_slice %12 {offsets = [0, 0, 1, 0], sizes = [1, 8, 16, 128], strides = [1, 1, 1, 1]} : vector<1x10x18x128xbf16> to vector<1x8x16x128xbf16>
    %16 = vector.shape_cast %15 : vector<1x8x16x128xbf16> to vector<8x16x128xbf16>
    %17 = vector.extract_strided_slice %12 {offsets = [0, 0, 2, 0], sizes = [1, 8, 16, 128], strides = [1, 1, 1, 1]} : vector<1x10x18x128xbf16> to vector<1x8x16x128xbf16>
    %18 = vector.shape_cast %17 : vector<1x8x16x128xbf16> to vector<8x16x128xbf16>
    %19 = vector.extract_strided_slice %12 {offsets = [0, 1, 0, 0], sizes = [1, 8, 16, 128], strides = [1, 1, 1, 1]} : vector<1x10x18x128xbf16> to vector<1x8x16x128xbf16>
    %20 = vector.shape_cast %19 : vector<1x8x16x128xbf16> to vector<8x16x128xbf16>
    %21 = vector.extract_strided_slice %12 {offsets = [0, 1, 1, 0], sizes = [1, 8, 16, 128], strides = [1, 1, 1, 1]} : vector<1x10x18x128xbf16> to vector<1x8x16x128xbf16>
    %22 = vector.shape_cast %21 : vector<1x8x16x128xbf16> to vector<8x16x128xbf16>
    %23 = vector.extract_strided_slice %12 {offsets = [0, 1, 2, 0], sizes = [1, 8, 16, 128], strides = [1, 1, 1, 1]} : vector<1x10x18x128xbf16> to vector<1x8x16x128xbf16>
    %24 = vector.shape_cast %23 : vector<1x8x16x128xbf16> to vector<8x16x128xbf16>
    %25 = vector.extract_strided_slice %12 {offsets = [0, 2, 0, 0], sizes = [1, 8, 16, 128], strides = [1, 1, 1, 1]} : vector<1x10x18x128xbf16> to vector<1x8x16x128xbf16>
    %26 = vector.shape_cast %25 : vector<1x8x16x128xbf16> to vector<8x16x128xbf16>
    %27 = vector.extract_strided_slice %12 {offsets = [0, 2, 1, 0], sizes = [1, 8, 16, 128], strides = [1, 1, 1, 1]} : vector<1x10x18x128xbf16> to vector<1x8x16x128xbf16>
    %28 = vector.shape_cast %27 : vector<1x8x16x128xbf16> to vector<8x16x128xbf16>
    %29 = vector.extract_strided_slice %12 {offsets = [0, 2, 2, 0], sizes = [1, 8, 16, 128], strides = [1, 1, 1, 1]} : vector<1x10x18x128xbf16> to vector<1x8x16x128xbf16>
    %30 = vector.shape_cast %29 : vector<1x8x16x128xbf16> to vector<8x16x128xbf16>
    %31 = tpu.concatenate %14, %16, %18, %20, %22, %24, %26, %28, %30 in 2 : vector<8x16x128xbf16>, vector<8x16x128xbf16>, vector<8x16x128xbf16>, vector<8x16x128xbf16>, vector<8x16x128xbf16>, vector<8x16x128xbf16>, vector<8x16x128xbf16>, vector<8x16x128xbf16>, vector<8x16x128xbf16> -> vector<8x16x1152xbf16>
    %32 = vector.shape_cast %31 : vector<8x16x1152xbf16> to vector<128x1152xbf16>
    %c0_13 = arith.constant 0 : index
    %c0_14 = arith.constant 0 : index
    %33 = vector.load %arg6[%c0_13, %c0_14] : memref<1152x128xbf16, #tpu.memory_space<vmem>>, vector<1152x128xbf16>
    %cst_15 = arith.constant dense<0.000000e+00> : vector<128x128xf32>
    %34 = tpu.matmul %32, %33, %cst_15 {dimension_numbers = #tpu.dot_dimension_numbers<[1], [0], [0], [1], [0, 0, 1, 1], [], []>} : vector<128x1152xbf16>, vector<1152x128xbf16>, vector<128x128xf32> -> vector<128x128xf32>
    %c0_16 = arith.constant 0 : index
    %c0_17 = arith.constant 0 : index
    %c0_18 = arith.constant 0 : index
    %c0_19 = arith.constant 0 : index
    %35 = vector.load %arg7[%c0_16, %c0_17, %c0_18, %c0_19] : memref<1x1x1x128xf32, #tpu.memory_space<vmem>>, vector<1x1x1x128xf32>
    %36 = vector.shape_cast %35 : vector<1x1x1x128xf32> to vector<1x128xf32>
    %37 = vector.broadcast %36 : vector<1x128xf32> to vector<128x128xf32>
    %38 = arith.addf %34, %37 : vector<128x128xf32>
    %39 = vector.shape_cast %38 : vector<128x128xf32> to vector<1x8x16x128xf32>
    %40 = arith.truncf %39 : vector<1x8x16x128xf32> to vector<1x8x16x128xbf16>
    %c0_20 = arith.constant 0 : index
    %c0_21 = arith.constant 0 : index
    %c0_22 = arith.constant 0 : index
    %c0_23 = arith.constant 0 : index
    %41 = vector.load %arg8[%c0_20, %c0_21, %c0_22, %c0_23] : memref<1x8x16x128xbf16, #tpu.memory_space<vmem>>, vector<1x8x16x128xbf16>
    tpu.vector_store %arg8[%c0_20, %c0_21, %c0_22, %c0_23], %40 {strides = array<i32>} : memref<1x8x16x128xbf16, #tpu.memory_space<vmem>>, vector<1x8x16x128xbf16>,
    %cst_24 = arith.constant dense<0.000000e+00> : vector<128xf32>
    %42 = vector.multi_reduction <add>, %38, %cst_24 [0] : vector<128x128xf32> to vector<128xf32>
    %43 = vector.shape_cast %42 : vector<128xf32> to vector<1x128xf32>
    %44 = arith.mulf %38, %38 : vector<128x128xf32>
    %cst_25 = arith.constant dense<0.000000e+00> : vector<128xf32>
    %45 = vector.multi_reduction <add>, %44, %cst_25 [0] : vector<128x128xf32> to vector<128xf32>
    %46 = vector.shape_cast %45 : vector<128xf32> to vector<1x128xf32>
    %c0_i32_26 = arith.constant 0 : i32
    %47 = arith.cmpi eq, %arg2, %c0_i32_26 : i32
    %48 = arith.extui %47 : i1 to i32
    %c0_i32_27 = arith.constant 0 : i32
    %49 = arith.cmpi ne, %48, %c0_i32_27 : i32
    scf.if %49 {
      %cst_34 = arith.constant 0.000000e+00 : f32
      %55 = vector.broadcast %cst_34 : f32 to vector<1x2x128xf32>
      %c0_35 = arith.constant 0 : index
      %c0_36 = arith.constant 0 : index
      %c0_37 = arith.constant 0 : index
      %56 = vector.load %arg9[%c0_35, %c0_36, %c0_37] : memref<1x2x128xf32, #tpu.memory_space<vmem>>, vector<1x2x128xf32>
      tpu.vector_store %arg9[%c0_35, %c0_36, %c0_37], %55 {strides = array<i32>} : memref<1x2x128xf32, #tpu.memory_space<vmem>>, vector<1x2x128xf32>,
    } else {
    }
    %c0_28 = arith.constant 0 : index
    %c0_29 = arith.constant 0 : index
    %c0_30 = arith.constant 0 : index
    %50 = vector.load %arg9[%c0_28, %c0_29, %c0_30] : memref<1x2x128xf32, #tpu.memory_space<vmem>>, vector<1x2x128xf32>
    %51 = tpu.concatenate %43, %46 in 0 : vector<1x128xf32>, vector<1x128xf32> -> vector<2x128xf32>
    %52 = vector.shape_cast %51 : vector<2x128xf32> to vector<1x2x128xf32>
    %53 = arith.addf %50, %52 : vector<1x2x128xf32>
    %c0_31 = arith.constant 0 : index
    %c0_32 = arith.constant 0 : index
    %c0_33 = arith.constant 0 : index
    %54 = vector.load %arg9[%c0_31, %c0_32, %c0_33] : memref<1x2x128xf32, #tpu.memory_space<vmem>>, vector<1x2x128xf32>
    tpu.vector_store %arg9[%c0_31, %c0_32, %c0_33], %53 {strides = array<i32>} : memref<1x2x128xf32, #tpu.memory_space<vmem>>, vector<1x2x128xf32>,
    return
  }
  func.func @transform_0(%arg0: i32, %arg1: i32, %arg2: i32) -> (i32, i32, i32, i32) {
    %c0_i32 = arith.constant 0 : i32
    %c0_i32_0 = arith.constant 0 : i32
    %c0_i32_1 = arith.constant 0 : i32
    return %arg0, %arg2, %c0_i32, %c0_i32_0 : i32, i32, i32, i32
  }
  func.func @transform_1(%arg0: i32, %arg1: i32, %arg2: i32) -> (i32, i32, i32, i32) {
    %c8_i32 = arith.constant 8 : i32
    %0 = arith.muli %arg2, %c8_i32 : i32
    %c1_i32 = arith.constant 1 : i32
    %1 = arith.subi %0, %c1_i32 : i32
    %c0_i32 = arith.constant 0 : i32
    %2 = arith.maxsi %1, %c0_i32 : i32
    %c0_i32_0 = arith.constant 0 : i32
    %c0_i32_1 = arith.constant 0 : i32
    %c0_i32_2 = arith.constant 0 : i32
    return %arg0, %2, %c0_i32_0, %c0_i32_1 : i32, i32, i32, i32
  }
  func.func @transform_2(%arg0: i32, %arg1: i32, %arg2: i32) -> (i32, i32, i32, i32) {
    %c8_i32 = arith.constant 8 : i32
    %0 = arith.muli %arg2, %c8_i32 : i32
    %c8_i32_0 = arith.constant 8 : i32
    %1 = arith.addi %0, %c8_i32_0 : i32
    %c15_i32 = arith.constant 15 : i32
    %2 = arith.minsi %1, %c15_i32 : i32
    %c0_i32 = arith.constant 0 : i32
    %c0_i32_1 = arith.constant 0 : i32
    %c0_i32_2 = arith.constant 0 : i32
    return %arg0, %2, %c0_i32, %c0_i32_1 : i32, i32, i32, i32
  }
  func.func @transform_3(%arg0: i32, %arg1: i32, %arg2: i32) -> (i32, i32) {
    %c0_i32 = arith.constant 0 : i32
    %c0_i32_0 = arith.constant 0 : i32
    return %c0_i32, %arg1 : i32, i32
  }
  func.func @transform_4(%arg0: i32, %arg1: i32, %arg2: i32) -> (i32, i32, i32, i32) {
    %c0_i32 = arith.constant 0 : i32
    %c0_i32_0 = arith.constant 0 : i32
    %c0_i32_1 = arith.constant 0 : i32
    %c0_i32_2 = arith.constant 0 : i32
    return %c0_i32, %c0_i32_0, %c0_i32_1, %arg1 : i32, i32, i32, i32
  }
  func.func @transform_5(%arg0: i32, %arg1: i32, %arg2: i32) -> (i32, i32, i32, i32) {
    %c0_i32 = arith.constant 0 : i32
    %c0_i32_0 = arith.constant 0 : i32
    return %arg0, %arg2, %c0_i32, %arg1 : i32, i32, i32, i32
  }
  func.func @transform_6(%arg0: i32, %arg1: i32, %arg2: i32) -> (i32, i32, i32) {
    %c0_i32 = arith.constant 0 : i32
    %c0_i32_0 = arith.constant 0 : i32
    return %arg0, %c0_i32, %arg1 : i32, i32, i32
  }
}

module attributes {stable_mosaic.version = 11 : i64} {
  func.func @_bn_relu_kernel(%arg0: i32, %arg1: i32, %arg2: memref<1x8x16x128xbf16, #tpu.memory_space<vmem>>, %arg3: memref<1x1x1x128xf32, #tpu.memory_space<vmem>>, %arg4: memref<1x1x1x128xf32, #tpu.memory_space<vmem>>, %arg5: memref<1x8x16x128xf32, #tpu.memory_space<vmem>>) attributes {dimension_semantics = [#tpu.dimension_semantics<parallel>, #tpu.dimension_semantics<parallel>], iteration_bounds = array<i64: 2, 2>, scalar_prefetch = 0 : i64, scratch_operands = 0 : i64, tpu.core_type = #tpu.core_type<tc>, window_params = [{transform_indices = @transform_0, window_bounds = array<i64: 1, 8, 16, 128>}, {pipeline_mode = #tpu.pipeline_mode<synchronous>, transform_indices = @transform_1, window_bounds = array<i64: 1, 1, 1, 128>}, {pipeline_mode = #tpu.pipeline_mode<synchronous>, transform_indices = @transform_2, window_bounds = array<i64: 1, 1, 1, 128>}, {transform_indices = @transform_3, window_bounds = array<i64: 1, 8, 16, 128>}]} {
    %c0 = arith.constant 0 : index
    %c0_0 = arith.constant 0 : index
    %c0_1 = arith.constant 0 : index
    %c0_2 = arith.constant 0 : index
    %0 = vector.load %arg2[%c0, %c0_0, %c0_1, %c0_2] : memref<1x8x16x128xbf16, #tpu.memory_space<vmem>>, vector<1x8x16x128xbf16>
    %1 = arith.extf %0 : vector<1x8x16x128xbf16> to vector<1x8x16x128xf32>
    %c0_3 = arith.constant 0 : index
    %c0_4 = arith.constant 0 : index
    %c0_5 = arith.constant 0 : index
    %c0_6 = arith.constant 0 : index
    %2 = vector.load %arg3[%c0_3, %c0_4, %c0_5, %c0_6] : memref<1x1x1x128xf32, #tpu.memory_space<vmem>>, vector<1x1x1x128xf32>
    %3 = vector.broadcast %2 : vector<1x1x1x128xf32> to vector<1x8x16x128xf32>
    %4 = arith.mulf %1, %3 : vector<1x8x16x128xf32>
    %c0_7 = arith.constant 0 : index
    %c0_8 = arith.constant 0 : index
    %c0_9 = arith.constant 0 : index
    %c0_10 = arith.constant 0 : index
    %5 = vector.load %arg4[%c0_7, %c0_8, %c0_9, %c0_10] : memref<1x1x1x128xf32, #tpu.memory_space<vmem>>, vector<1x1x1x128xf32>
    %6 = vector.broadcast %5 : vector<1x1x1x128xf32> to vector<1x8x16x128xf32>
    %7 = arith.addf %4, %6 : vector<1x8x16x128xf32>
    %cst = arith.constant 0.000000e+00 : f32
    %8 = vector.broadcast %cst : f32 to vector<1x8x16x128xf32>
    %9 = arith.maximumf %7, %8 : vector<1x8x16x128xf32>
    %c0_11 = arith.constant 0 : index
    %c0_12 = arith.constant 0 : index
    %c0_13 = arith.constant 0 : index
    %c0_14 = arith.constant 0 : index
    %10 = vector.load %arg5[%c0_11, %c0_12, %c0_13, %c0_14] : memref<1x8x16x128xf32, #tpu.memory_space<vmem>>, vector<1x8x16x128xf32>
    tpu.vector_store %arg5[%c0_11, %c0_12, %c0_13, %c0_14], %9 {strides = array<i32>} : memref<1x8x16x128xf32, #tpu.memory_space<vmem>>, vector<1x8x16x128xf32>,
    return
  }
  func.func @transform_0(%arg0: i32, %arg1: i32) -> (i32, i32, i32, i32) {
    %c0_i32 = arith.constant 0 : i32
    %c0_i32_0 = arith.constant 0 : i32
    %c0_i32_1 = arith.constant 0 : i32
    return %arg0, %arg1, %c0_i32, %c0_i32_0 : i32, i32, i32, i32
  }
  func.func @transform_1(%arg0: i32, %arg1: i32) -> (i32, i32, i32, i32) {
    %c0_i32 = arith.constant 0 : i32
    %c0_i32_0 = arith.constant 0 : i32
    %c0_i32_1 = arith.constant 0 : i32
    %c0_i32_2 = arith.constant 0 : i32
    %c0_i32_3 = arith.constant 0 : i32
    return %c0_i32, %c0_i32_0, %c0_i32_1, %c0_i32_2 : i32, i32, i32, i32
  }
  func.func @transform_2(%arg0: i32, %arg1: i32) -> (i32, i32, i32, i32) {
    %c0_i32 = arith.constant 0 : i32
    %c0_i32_0 = arith.constant 0 : i32
    %c0_i32_1 = arith.constant 0 : i32
    %c0_i32_2 = arith.constant 0 : i32
    %c0_i32_3 = arith.constant 0 : i32
    return %c0_i32, %c0_i32_0, %c0_i32_1, %c0_i32_2 : i32, i32, i32, i32
  }
  func.func @transform_3(%arg0: i32, %arg1: i32) -> (i32, i32, i32, i32) {
    %c0_i32 = arith.constant 0 : i32
    %c0_i32_0 = arith.constant 0 : i32
    %c0_i32_1 = arith.constant 0 : i32
    return %arg0, %arg1, %c0_i32, %c0_i32_0 : i32, i32, i32, i32
  }
}

module attributes {stable_mosaic.version = 11 : i64} {
  func.func @_conv_kernel_fused_bn_relu(%arg0: i32, %arg1: i32, %arg2: i32, %arg3: memref<1x8x16x128xbf16, #tpu.memory_space<vmem>>, %arg4: memref<1x1x16x128xbf16, #tpu.memory_space<vmem>>, %arg5: memref<1x1x16x128xbf16, #tpu.memory_space<vmem>>, %arg6: memref<1152x128xbf16, #tpu.memory_space<vmem>>, %arg7: memref<1x1x1x128xf32, #tpu.memory_space<vmem>>, %arg8: memref<1x1x1x128xf32, #tpu.memory_space<vmem>>, %arg9: memref<1x1x1x128xf32, #tpu.memory_space<vmem>>, %arg10: memref<1x8x16x128xbf16, #tpu.memory_space<vmem>>, %arg11: memref<1x2x128xf32, #tpu.memory_space<vmem>>) attributes {dimension_semantics = [#tpu.dimension_semantics<parallel>, #tpu.dimension_semantics<parallel>, #tpu.dimension_semantics<arbitrary>], iteration_bounds = array<i64: 2, 1, 2>, scalar_prefetch = 0 : i64, scratch_operands = 0 : i64, tpu.core_type = #tpu.core_type<tc>, window_params = [{transform_indices = @transform_0, window_bounds = array<i64: 1, 8, 16, 128>}, {transform_indices = @transform_1, window_bounds = array<i64: 1, 1, 16, 128>}, {transform_indices = @transform_2, window_bounds = array<i64: 1, 1, 16, 128>}, {transform_indices = @transform_3, window_bounds = array<i64: 1152, 128>}, {transform_indices = @transform_4, window_bounds = array<i64: 1, 1, 1, 128>}, {pipeline_mode = #tpu.pipeline_mode<synchronous>, transform_indices = @transform_5, window_bounds = array<i64: 1, 1, 1, 128>}, {pipeline_mode = #tpu.pipeline_mode<synchronous>, transform_indices = @transform_6, window_bounds = array<i64: 1, 1, 1, 128>}, {transform_indices = @transform_7, window_bounds = array<i64: 1, 8, 16, 128>}, {transform_indices = @transform_8, window_bounds = array<i64: 1, 2, 128>}]} {
    %c0 = arith.constant 0 : index
    %c0_0 = arith.constant 0 : index
    %c0_1 = arith.constant 0 : index
    %c0_2 = arith.constant 0 : index
    %0 = vector.load %arg3[%c0, %c0_0, %c0_1, %c0_2] : memref<1x8x16x128xbf16, #tpu.memory_space<vmem>>, vector<1x8x16x128xbf16>
    %1 = arith.extf %0 : vector<1x8x16x128xbf16> to vector<1x8x16x128xf32>
    %c0_3 = arith.constant 0 : index
    %c0_4 = arith.constant 0 : index
    %c0_5 = arith.constant 0 : index
    %c0_6 = arith.constant 0 : index
    %2 = vector.load %arg8[%c0_3, %c0_4, %c0_5, %c0_6] : memref<1x1x1x128xf32, #tpu.memory_space<vmem>>, vector<1x1x1x128xf32>
    %3 = vector.broadcast %2 : vector<1x1x1x128xf32> to vector<1x8x16x128xf32>
    %4 = arith.mulf %1, %3 : vector<1x8x16x128xf32>
    %c0_7 = arith.constant 0 : index
    %c0_8 = arith.constant 0 : index
    %c0_9 = arith.constant 0 : index
    %c0_10 = arith.constant 0 : index
    %5 = vector.load %arg9[%c0_7, %c0_8, %c0_9, %c0_10] : memref<1x1x1x128xf32, #tpu.memory_space<vmem>>, vector<1x1x1x128xf32>
    %6 = vector.broadcast %5 : vector<1x1x1x128xf32> to vector<1x8x16x128xf32>
    %7 = arith.addf %4, %6 : vector<1x8x16x128xf32>
    %cst = arith.constant 0.000000e+00 : f32
    %8 = vector.broadcast %cst : f32 to vector<1x8x16x128xf32>
    %9 = arith.maximumf %7, %8 : vector<1x8x16x128xf32>
    %10 = arith.truncf %9 : vector<1x8x16x128xf32> to vector<1x8x16x128xbf16>
    %c0_11 = arith.constant 0 : index
    %c0_12 = arith.constant 0 : index
    %c0_13 = arith.constant 0 : index
    %c0_14 = arith.constant 0 : index
    %11 = vector.load %arg4[%c0_11, %c0_12, %c0_13, %c0_14] : memref<1x1x16x128xbf16, #tpu.memory_space<vmem>>, vector<1x1x16x128xbf16>
    %12 = arith.extf %11 : vector<1x1x16x128xbf16> to vector<1x1x16x128xf32>
    %c0_15 = arith.constant 0 : index
    %c0_16 = arith.constant 0 : index
    %c0_17 = arith.constant 0 : index
    %c0_18 = arith.constant 0 : index
    %13 = vector.load %arg8[%c0_15, %c0_16, %c0_17, %c0_18] : memref<1x1x1x128xf32, #tpu.memory_space<vmem>>, vector<1x1x1x128xf32>
    %14 = vector.broadcast %13 : vector<1x1x1x128xf32> to vector<1x1x16x128xf32>
    %15 = arith.mulf %12, %14 : vector<1x1x16x128xf32>
    %c0_19 = arith.constant 0 : index
    %c0_20 = arith.constant 0 : index
    %c0_21 = arith.constant 0 : index
    %c0_22 = arith.constant 0 : index
    %16 = vector.load %arg9[%c0_19, %c0_20, %c0_21, %c0_22] : memref<1x1x1x128xf32, #tpu.memory_space<vmem>>, vector<1x1x1x128xf32>
    %17 = vector.broadcast %16 : vector<1x1x1x128xf32> to vector<1x1x16x128xf32>
    %18 = arith.addf %15, %17 : vector<1x1x16x128xf32>
    %cst_23 = arith.constant 0.000000e+00 : f32
    %19 = vector.broadcast %cst_23 : f32 to vector<1x1x16x128xf32>
    %20 = arith.maximumf %18, %19 : vector<1x1x16x128xf32>
    %21 = arith.truncf %20 : vector<1x1x16x128xf32> to vector<1x1x16x128xbf16>
    %c0_24 = arith.constant 0 : index
    %c0_25 = arith.constant 0 : index
    %c0_26 = arith.constant 0 : index
    %c0_27 = arith.constant 0 : index
    %22 = vector.load %arg5[%c0_24, %c0_25, %c0_26, %c0_27] : memref<1x1x16x128xbf16, #tpu.memory_space<vmem>>, vector<1x1x16x128xbf16>
    %23 = arith.extf %22 : vector<1x1x16x128xbf16> to vector<1x1x16x128xf32>
    %c0_28 = arith.constant 0 : index
    %c0_29 = arith.constant 0 : index
    %c0_30 = arith.constant 0 : index
    %c0_31 = arith.constant 0 : index
    %24 = vector.load %arg8[%c0_28, %c0_29, %c0_30, %c0_31] : memref<1x1x1x128xf32, #tpu.memory_space<vmem>>, vector<1x1x1x128xf32>
    %25 = vector.broadcast %24 : vector<1x1x1x128xf32> to vector<1x1x16x128xf32>
    %26 = arith.mulf %23, %25 : vector<1x1x16x128xf32>
    %c0_32 = arith.constant 0 : index
    %c0_33 = arith.constant 0 : index
    %c0_34 = arith.constant 0 : index
    %c0_35 = arith.constant 0 : index
    %27 = vector.load %arg9[%c0_32, %c0_33, %c0_34, %c0_35] : memref<1x1x1x128xf32, #tpu.memory_space<vmem>>, vector<1x1x1x128xf32>
    %28 = vector.broadcast %27 : vector<1x1x1x128xf32> to vector<1x1x16x128xf32>
    %29 = arith.addf %26, %28 : vector<1x1x16x128xf32>
    %cst_36 = arith.constant 0.000000e+00 : f32
    %30 = vector.broadcast %cst_36 : f32 to vector<1x1x16x128xf32>
    %31 = arith.maximumf %29, %30 : vector<1x1x16x128xf32>
    %32 = arith.truncf %31 : vector<1x1x16x128xf32> to vector<1x1x16x128xbf16>
    %c0_i32 = arith.constant 0 : i32
    %33 = arith.cmpi sgt, %arg2, %c0_i32 : i32
    %cst_37 = arith.constant 0.000000e+00 : bf16
    %34 = vector.broadcast %cst_37 : bf16 to vector<1x1x16x128xbf16>
    %35 = arith.select %33, %21, %34 : vector<1x1x16x128xbf16>
    %c1_i32 = arith.constant 1 : i32
    %36 = arith.addi %arg2, %c1_i32 : i32
    %c2_i32 = arith.constant 2 : i32
    %37 = arith.cmpi slt, %36, %c2_i32 : i32
    %cst_38 = arith.constant 0.000000e+00 : bf16
    %38 = vector.broadcast %cst_38 : bf16 to vector<1x1x16x128xbf16>
    %39 = arith.select %37, %32, %38 : vector<1x1x16x128xbf16>
    %40 = tpu.concatenate %35, %10, %39 in 1 : vector<1x1x16x128xbf16>, vector<1x8x16x128xbf16>, vector<1x1x16x128xbf16> -> vector<1x10x16x128xbf16>
    %cst_39 = arith.constant 0.000000e+00 : bf16
    %41 = vector.broadcast %cst_39 : bf16 to vector<1x10x1x128xbf16>
    %42 = tpu.concatenate %41, %40, %41 in 2 : vector<1x10x1x128xbf16>, vector<1x10x16x128xbf16>, vector<1x10x1x128xbf16> -> vector<1x10x18x128xbf16>
    %43 = vector.extract_strided_slice %42 {offsets = [0, 0, 0, 0], sizes = [1, 8, 16, 128], strides = [1, 1, 1, 1]} : vector<1x10x18x128xbf16> to vector<1x8x16x128xbf16>
    %44 = vector.shape_cast %43 : vector<1x8x16x128xbf16> to vector<8x16x128xbf16>
    %45 = vector.extract_strided_slice %42 {offsets = [0, 0, 1, 0], sizes = [1, 8, 16, 128], strides = [1, 1, 1, 1]} : vector<1x10x18x128xbf16> to vector<1x8x16x128xbf16>
    %46 = vector.shape_cast %45 : vector<1x8x16x128xbf16> to vector<8x16x128xbf16>
    %47 = vector.extract_strided_slice %42 {offsets = [0, 0, 2, 0], sizes = [1, 8, 16, 128], strides = [1, 1, 1, 1]} : vector<1x10x18x128xbf16> to vector<1x8x16x128xbf16>
    %48 = vector.shape_cast %47 : vector<1x8x16x128xbf16> to vector<8x16x128xbf16>
    %49 = vector.extract_strided_slice %42 {offsets = [0, 1, 0, 0], sizes = [1, 8, 16, 128], strides = [1, 1, 1, 1]} : vector<1x10x18x128xbf16> to vector<1x8x16x128xbf16>
    %50 = vector.shape_cast %49 : vector<1x8x16x128xbf16> to vector<8x16x128xbf16>
    %51 = vector.extract_strided_slice %42 {offsets = [0, 1, 1, 0], sizes = [1, 8, 16, 128], strides = [1, 1, 1, 1]} : vector<1x10x18x128xbf16> to vector<1x8x16x128xbf16>
    %52 = vector.shape_cast %51 : vector<1x8x16x128xbf16> to vector<8x16x128xbf16>
    %53 = vector.extract_strided_slice %42 {offsets = [0, 1, 2, 0], sizes = [1, 8, 16, 128], strides = [1, 1, 1, 1]} : vector<1x10x18x128xbf16> to vector<1x8x16x128xbf16>
    %54 = vector.shape_cast %53 : vector<1x8x16x128xbf16> to vector<8x16x128xbf16>
    %55 = vector.extract_strided_slice %42 {offsets = [0, 2, 0, 0], sizes = [1, 8, 16, 128], strides = [1, 1, 1, 1]} : vector<1x10x18x128xbf16> to vector<1x8x16x128xbf16>
    %56 = vector.shape_cast %55 : vector<1x8x16x128xbf16> to vector<8x16x128xbf16>
    %57 = vector.extract_strided_slice %42 {offsets = [0, 2, 1, 0], sizes = [1, 8, 16, 128], strides = [1, 1, 1, 1]} : vector<1x10x18x128xbf16> to vector<1x8x16x128xbf16>
    %58 = vector.shape_cast %57 : vector<1x8x16x128xbf16> to vector<8x16x128xbf16>
    %59 = vector.extract_strided_slice %42 {offsets = [0, 2, 2, 0], sizes = [1, 8, 16, 128], strides = [1, 1, 1, 1]} : vector<1x10x18x128xbf16> to vector<1x8x16x128xbf16>
    %60 = vector.shape_cast %59 : vector<1x8x16x128xbf16> to vector<8x16x128xbf16>
    %61 = tpu.concatenate %44, %46, %48, %50, %52, %54, %56, %58, %60 in 2 : vector<8x16x128xbf16>, vector<8x16x128xbf16>, vector<8x16x128xbf16>, vector<8x16x128xbf16>, vector<8x16x128xbf16>, vector<8x16x128xbf16>, vector<8x16x128xbf16>, vector<8x16x128xbf16>, vector<8x16x128xbf16> -> vector<8x16x1152xbf16>
    %62 = vector.shape_cast %61 : vector<8x16x1152xbf16> to vector<128x1152xbf16>
    %c0_40 = arith.constant 0 : index
    %c0_41 = arith.constant 0 : index
    %63 = vector.load %arg6[%c0_40, %c0_41] : memref<1152x128xbf16, #tpu.memory_space<vmem>>, vector<1152x128xbf16>
    %cst_42 = arith.constant dense<0.000000e+00> : vector<128x128xf32>
    %64 = tpu.matmul %62, %63, %cst_42 {dimension_numbers = #tpu.dot_dimension_numbers<[1], [0], [0], [1], [0, 0, 1, 1], [], []>} : vector<128x1152xbf16>, vector<1152x128xbf16>, vector<128x128xf32> -> vector<128x128xf32>
    %c0_43 = arith.constant 0 : index
    %c0_44 = arith.constant 0 : index
    %c0_45 = arith.constant 0 : index
    %c0_46 = arith.constant 0 : index
    %65 = vector.load %arg7[%c0_43, %c0_44, %c0_45, %c0_46] : memref<1x1x1x128xf32, #tpu.memory_space<vmem>>, vector<1x1x1x128xf32>
    %66 = vector.shape_cast %65 : vector<1x1x1x128xf32> to vector<1x128xf32>
    %67 = vector.broadcast %66 : vector<1x128xf32> to vector<128x128xf32>
    %68 = arith.addf %64, %67 : vector<128x128xf32>
    %69 = vector.shape_cast %68 : vector<128x128xf32> to vector<1x8x16x128xf32>
    %70 = arith.truncf %69 : vector<1x8x16x128xf32> to vector<1x8x16x128xbf16>
    %c0_47 = arith.constant 0 : index
    %c0_48 = arith.constant 0 : index
    %c0_49 = arith.constant 0 : index
    %c0_50 = arith.constant 0 : index
    %71 = vector.load %arg10[%c0_47, %c0_48, %c0_49, %c0_50] : memref<1x8x16x128xbf16, #tpu.memory_space<vmem>>, vector<1x8x16x128xbf16>
    tpu.vector_store %arg10[%c0_47, %c0_48, %c0_49, %c0_50], %70 {strides = array<i32>} : memref<1x8x16x128xbf16, #tpu.memory_space<vmem>>, vector<1x8x16x128xbf16>,
    %cst_51 = arith.constant dense<0.000000e+00> : vector<128xf32>
    %72 = vector.multi_reduction <add>, %68, %cst_51 [0] : vector<128x128xf32> to vector<128xf32>
    %73 = vector.shape_cast %72 : vector<128xf32> to vector<1x128xf32>
    %74 = arith.mulf %68, %68 : vector<128x128xf32>
    %cst_52 = arith.constant dense<0.000000e+00> : vector<128xf32>
    %75 = vector.multi_reduction <add>, %74, %cst_52 [0] : vector<128x128xf32> to vector<128xf32>
    %76 = vector.shape_cast %75 : vector<128xf32> to vector<1x128xf32>
    %c0_i32_53 = arith.constant 0 : i32
    %77 = arith.cmpi eq, %arg2, %c0_i32_53 : i32
    %78 = arith.extui %77 : i1 to i32
    %c0_i32_54 = arith.constant 0 : i32
    %79 = arith.cmpi ne, %78, %c0_i32_54 : i32
    scf.if %79 {
      %cst_61 = arith.constant 0.000000e+00 : f32
      %85 = vector.broadcast %cst_61 : f32 to vector<1x2x128xf32>
      %c0_62 = arith.constant 0 : index
      %c0_63 = arith.constant 0 : index
      %c0_64 = arith.constant 0 : index
      %86 = vector.load %arg11[%c0_62, %c0_63, %c0_64] : memref<1x2x128xf32, #tpu.memory_space<vmem>>, vector<1x2x128xf32>
      tpu.vector_store %arg11[%c0_62, %c0_63, %c0_64], %85 {strides = array<i32>} : memref<1x2x128xf32, #tpu.memory_space<vmem>>, vector<1x2x128xf32>,
    } else {
    }
    %c0_55 = arith.constant 0 : index
    %c0_56 = arith.constant 0 : index
    %c0_57 = arith.constant 0 : index
    %80 = vector.load %arg11[%c0_55, %c0_56, %c0_57] : memref<1x2x128xf32, #tpu.memory_space<vmem>>, vector<1x2x128xf32>
    %81 = tpu.concatenate %73, %76 in 0 : vector<1x128xf32>, vector<1x128xf32> -> vector<2x128xf32>
    %82 = vector.shape_cast %81 : vector<2x128xf32> to vector<1x2x128xf32>
    %83 = arith.addf %80, %82 : vector<1x2x128xf32>
    %c0_58 = arith.constant 0 : index
    %c0_59 = arith.constant 0 : index
    %c0_60 = arith.constant 0 : index
    %84 = vector.load %arg11[%c0_58, %c0_59, %c0_60] : memref<1x2x128xf32, #tpu.memory_space<vmem>>, vector<1x2x128xf32>
    tpu.vector_store %arg11[%c0_58, %c0_59, %c0_60], %83 {strides = array<i32>} : memref<1x2x128xf32, #tpu.memory_space<vmem>>, vector<1x2x128xf32>,
    return
  }
  func.func @transform_0(%arg0: i32, %arg1: i32, %arg2: i32) -> (i32, i32, i32, i32) {
    %c0_i32 = arith.constant 0 : i32
    %c0_i32_0 = arith.constant 0 : i32
    %c0_i32_1 = arith.constant 0 : i32
    return %arg0, %arg2, %c0_i32, %c0_i32_0 : i32, i32, i32, i32
  }
  func.func @transform_1(%arg0: i32, %arg1: i32, %arg2: i32) -> (i32, i32, i32, i32) {
    %c8_i32 = arith.constant 8 : i32
    %0 = arith.muli %arg2, %c8_i32 : i32
    %c1_i32 = arith.constant 1 : i32
    %1 = arith.subi %0, %c1_i32 : i32
    %c0_i32 = arith.constant 0 : i32
    %2 = arith.maxsi %1, %c0_i32 : i32
    %c0_i32_0 = arith.constant 0 : i32
    %c0_i32_1 = arith.constant 0 : i32
    %c0_i32_2 = arith.constant 0 : i32
    return %arg0, %2, %c0_i32_0, %c0_i32_1 : i32, i32, i32, i32
  }
  func.func @transform_2(%arg0: i32, %arg1: i32, %arg2: i32) -> (i32, i32, i32, i32) {
    %c8_i32 = arith.constant 8 : i32
    %0 = arith.muli %arg2, %c8_i32 : i32
    %c8_i32_0 = arith.constant 8 : i32
    %1 = arith.addi %0, %c8_i32_0 : i32
    %c15_i32 = arith.constant 15 : i32
    %2 = arith.minsi %1, %c15_i32 : i32
    %c0_i32 = arith.constant 0 : i32
    %c0_i32_1 = arith.constant 0 : i32
    %c0_i32_2 = arith.constant 0 : i32
    return %arg0, %2, %c0_i32, %c0_i32_1 : i32, i32, i32, i32
  }
  func.func @transform_3(%arg0: i32, %arg1: i32, %arg2: i32) -> (i32, i32) {
    %c0_i32 = arith.constant 0 : i32
    %c0_i32_0 = arith.constant 0 : i32
    return %c0_i32, %arg1 : i32, i32
  }
  func.func @transform_4(%arg0: i32, %arg1: i32, %arg2: i32) -> (i32, i32, i32, i32) {
    %c0_i32 = arith.constant 0 : i32
    %c0_i32_0 = arith.constant 0 : i32
    %c0_i32_1 = arith.constant 0 : i32
    %c0_i32_2 = arith.constant 0 : i32
    return %c0_i32, %c0_i32_0, %c0_i32_1, %arg1 : i32, i32, i32, i32
  }
  func.func @transform_5(%arg0: i32, %arg1: i32, %arg2: i32) -> (i32, i32, i32, i32) {
    %c0_i32 = arith.constant 0 : i32
    %c0_i32_0 = arith.constant 0 : i32
    %c0_i32_1 = arith.constant 0 : i32
    %c0_i32_2 = arith.constant 0 : i32
    %c0_i32_3 = arith.constant 0 : i32
    return %c0_i32, %c0_i32_0, %c0_i32_1, %c0_i32_2 : i32, i32, i32, i32
  }
  func.func @transform_6(%arg0: i32, %arg1: i32, %arg2: i32) -> (i32, i32, i32, i32) {
    %c0_i32 = arith.constant 0 : i32
    %c0_i32_0 = arith.constant 0 : i32
    %c0_i32_1 = arith.constant 0 : i32
    %c0_i32_2 = arith.constant 0 : i32
    %c0_i32_3 = arith.constant 0 : i32
    return %c0_i32, %c0_i32_0, %c0_i32_1, %c0_i32_2 : i32, i32, i32, i32
  }
  func.func @transform_7(%arg0: i32, %arg1: i32, %arg2: i32) -> (i32, i32, i32, i32) {
    %c0_i32 = arith.constant 0 : i32
    %c0_i32_0 = arith.constant 0 : i32
    return %arg0, %arg2, %c0_i32, %arg1 : i32, i32, i32, i32
  }
  func.func @transform_8(%arg0: i32, %arg1: i32, %arg2: i32) -> (i32, i32, i32) {
    %c0_i32 = arith.constant 0 : i32
    %c0_i32_0 = arith.constant 0 : i32
    return %arg0, %c0_i32, %arg1 : i32, i32, i32
  }
}

</mosaic_0001>

<llo_original>
// kernel: double_conv.5
$region0: #{double_conv.5}
  #allocation0 [shape = 'u32[]', space=smem, size = 0x4, offset = 0x4, fixed_abs, tag = 'smem constant byte address 0x4 - core index']
  #allocation1 [shape = 'u32[72,128]{1,0:T(1,128)}', space=vmem, size = 0x9000, scoped, tag = 'internal scratch']
  %s0 = inlined_call_operand.vmem [shape: bf16[2,16,16,128], index: 0, kind: input, shape index: {}]
  %s1 = inlined_call_operand.vmem [shape: f32[1,1,1,128], index: 1, kind: input, shape index: {}]
  %s2 = inlined_call_operand.vmem [shape: f32[1,1,1,128], index: 2, kind: input, shape index: {}]
  %s3 = inlined_call_operand.vmem [shape: f32[2,16,16,128], index: 3, kind: output, shape index: {}]
  %s4 = sld [smem:[#allocation0]]
  $region45: #{double_conv.5} parent=0
    _
  %s6 = ssub.s32 1, %s4
  %s7 = scalar_select 0, %s6, %s4
  loop: start=0, step=1, limit=6
  $region2: #{double_conv.5} parent=0 // loop_pre_header
    _
  $region3: #{double_conv.5} parent=0 // loop_header
    %s9 = sphi 0, %s13
    %p10 = scmp.ge.s32.totalorder %s9, 6
    %s16 = sphi 0, %s28
    %s17 = sphi 0, %s24
    %s18 = sphi 0, %s16
    %s19 = sphi 0, %s17
    %s20 = sphi 0, %s18
    %s21 = sphi 0, %s19
    %s33 = sphi 0, %s35
    %s36 = sphi 0, %s33
    %s37 = sphi 0, %s36
    %s53 = sphi 0, %s37
    %s57 = sphi 0, %s57
    %s59 = sphi 0, %s57
    %s60 = sphi 0, %s59
    %s74 = sphi 0, %s60
    %s78 = sphi 0, %s78
    %s80 = sphi 0, %s78
    %s81 = sphi 0, %s80
    %s95 = sphi 0, %s81
    %s103 = sphi 0, %s105
    %s106 = sphi 0, %s103
    %s107 = sphi 0, %s106
    %s123 = sphi 0, %s107
  $region4: #{double_conv.5} parent=0 // loop_header_branch
    %12 = sbr.rel (%p10) target = $region8
  $region5: #{double_conv.5} parent=0 // loop_body
    %s14 = ssub.s32 %s9, 1
    %s15 = ssub.s32 %s9, 2
    %s22 = sadd.s32 1, %s17
    %p23 = scmp.ge.s32.totalorder %s22, 2
    %s24 = scalar_select %p23, 0, %s22
    %s25 = sadd.s32 1, %s16
    %s26 = scalar_select %p23, %s25, %s16
    %p27 = scmp.ge.s32.totalorder %s26, 2
    %s28 = scalar_select %p27, 0, %s26
    %s29 = ssub.s32 %s16, %s28
    %s30 = ssub.s32 %s17, %s24
    %s31 = sor.u32 %s29, %s30
    %p32 = scmp.eq.s32.totalorder %s31, 0
    %s34 = sadd.s32 %s33, 1
    %s35 = scalar_select %p32, %s33, %s34
    %p38 = pneg %p32
    %p39 = scmp.eq.s32.totalorder %s9, 3
    %p40 = por %p38, %p39
    %p41 = scmp.ne.s32.totalorder %s33, %s36
    %p42 = scmp.eq.s32.totalorder %s9, 0
    %p43 = por %p41, %p42
    %p44 = scmp.ne.s32.totalorder %s33, %s36
    %p45 = scmp.eq.s32.totalorder %s14, 3
    %p46 = por %p44, %p45
    %p47 = scmp.ne.s32.totalorder %s36, %s37
    %p48 = scmp.eq.s32.totalorder %s14, 0
    %p49 = por %p47, %p48
    %p50 = scmp.ne.s32.totalorder %s36, %s37
    %p51 = scmp.eq.s32.totalorder %s15, 3
    %p52 = por %p50, %p51
    %p54 = scmp.ne.s32.totalorder %s37, %s53
    %p55 = scmp.eq.s32.totalorder %s15, 0
    %p56 = por %p54, %p55
    %s58 = sadd.s32 %s57, 1
    %p61 = scmp.eq.s32.totalorder %s9, 3
    %p62 = scmp.ne.s32.totalorder %s57, %s59
    %p63 = scmp.eq.s32.totalorder %s9, 0
    %p64 = por %p62, %p63
    %p65 = scmp.ne.s32.totalorder %s57, %s59
    %p66 = scmp.eq.s32.totalorder %s14, 3
    %p67 = por %p65, %p66
    %p68 = scmp.ne.s32.totalorder %s59, %s60
    %p69 = scmp.eq.s32.totalorder %s14, 0
    %p70 = por %p68, %p69
    %p71 = scmp.ne.s32.totalorder %s59, %s60
    %p72 = scmp.eq.s32.totalorder %s15, 3
    %p73 = por %p71, %p72
    %p75 = scmp.ne.s32.totalorder %s60, %s74
    %p76 = scmp.eq.s32.totalorder %s15, 0
    %p77 = por %p75, %p76
    %s79 = sadd.s32 %s78, 1
    %p82 = scmp.eq.s32.totalorder %s9, 3
    %p83 = scmp.ne.s32.totalorder %s78, %s80
    %p84 = scmp.eq.s32.totalorder %s9, 0
    %p85 = por %p83, %p84
    %p86 = scmp.ne.s32.totalorder %s78, %s80
    %p87 = scmp.eq.s32.totalorder %s14, 3
    %p88 = por %p86, %p87
    %p89 = scmp.ne.s32.totalorder %s80, %s81
    %p90 = scmp.eq.s32.totalorder %s14, 0
    %p91 = por %p89, %p90
    %p92 = scmp.ne.s32.totalorder %s80, %s81
    %p93 = scmp.eq.s32.totalorder %s15, 3
    %p94 = por %p92, %p93
    %p96 = scmp.ne.s32.totalorder %s81, %s95
    %p97 = scmp.eq.s32.totalorder %s15, 0
    %p98 = por %p96, %p97
    %s99 = ssub.s32 %s16, %s28
    %s100 = ssub.s32 %s17, %s24
    %s101 = sor.u32 %s99, %s100
    %p102 = scmp.eq.s32.totalorder %s101, 0
    %s104 = sadd.s32 %s103, 1
    %s105 = scalar_select %p102, %s103, %s104
    %p108 = pneg %p102
    %p109 = scmp.eq.s32.totalorder %s9, 3
    %p110 = por %p108, %p109
    %p111 = scmp.ne.s32.totalorder %s103, %s106
    %p112 = scmp.eq.s32.totalorder %s9, 0
    %p113 = por %p111, %p112
    %p114 = scmp.ne.s32.totalorder %s103, %s106
    %p115 = scmp.eq.s32.totalorder %s14, 3
    %p116 = por %p114, %p115
    %p117 = scmp.ne.s32.totalorder %s106, %s107
    %p118 = scmp.eq.s32.totalorder %s14, 0
    %p119 = por %p117, %p118
    %p120 = scmp.ne.s32.totalorder %s106, %s107
    %p121 = scmp.eq.s32.totalorder %s15, 3
    %p122 = por %p120, %p121
    %p124 = scmp.ne.s32.totalorder %s107, %s123
    %p125 = scmp.eq.s32.totalorder %s15, 0
    %p126 = por %p124, %p125
    %p127 = scmp.le.s32.totalorder 1, %s9
    %p128 = scmp.lt.s32.totalorder %s9, 5
    %p129 = pnand %p127, %p128
    %p130 = pneg %p129
    // Predicated region
    $region9: #{double_conv.5} parent=5 // pred_check
      _
    $region10: #{double_conv.5} parent=5 // pred_check_branch
      %132 = sbr.rel (%p129) target = $region12
    $region11: #{double_conv.5} parent=5 // pred_region
      %s133 = ssub.s32 %s9, 1
      // Predicated region
      $region13: #{double_conv.5} parent=11 // pred_check
        %p134 = pneg %p70
      $region14: #{double_conv.5} parent=11 // pred_check_branch
        %136 = sbr.rel (%p134) target = $region16
      $region15: #{double_conv.5} parent=11 // pred_region
        _
      $region16: #{double_conv.5} parent=11 // pred_fallthru
        _
      // Predicated region
      $region17: #{double_conv.5} parent=11 // pred_check
        %p137 = pneg %p91
      $region18: #{double_conv.5} parent=11 // pred_check_branch
        %139 = sbr.rel (%p137) target = $region20
      $region19: #{double_conv.5} parent=11 // pred_region
        _
      $region20: #{double_conv.5} parent=11 // pred_fallthru
        _
    $region12: #{double_conv.5} parent=5 // pred_fallthru
      _
    %p140 = scmp.lt.s32.totalorder %s9, 4
    // Predicated region
    $region21: #{double_conv.5} parent=5 // pred_check
      %p141 = pneg %p140
    $region22: #{double_conv.5} parent=5 // pred_check_branch
      %143 = sbr.rel (%p141) target = $region24
    $region23: #{double_conv.5} parent=5 // pred_region
      // Predicated region
      $region25: #{double_conv.5} parent=23 // pred_check
        %p144 = pneg %p43
      $region26: #{double_conv.5} parent=23 // pred_check_branch
        %146 = sbr.rel (%p144) target = $region28
      $region27: #{double_conv.5} parent=23 // pred_region
        %s147 = smul.u32 8, %s17
        %p148 = scmp.lt.s32.totalorder %s16, 1
        %s149 = scalar_select %p148, %s16, 1
        %p150 = scmp.lt.s32.totalorder %s147, 15
        %s151 = scalar_select %p150, %s147, 15
        %s152 = smul.addr %s151, 2
        %s153 = smul.addr %s149, 32
        %s154 = sadd.s32 %s152, %s153
        %s155 = smul.addr %s154, 4
        %s156 = scalar_lea.vmem %s0, %s155
        %s157 = smul.u32 8, %s17
      $region28: #{double_conv.5} parent=23 // pred_fallthru
        _
    $region24: #{double_conv.5} parent=5 // pred_fallthru
      _
    %p158 = scmp.le.s32.totalorder 1, %s9
    %p159 = scmp.lt.s32.totalorder %s9, 5
    %p160 = pnand %p158, %p159
    %p161 = pneg %p160
    // Predicated region
    $region29: #{double_conv.5} parent=5 // pred_check
      _
    $region30: #{double_conv.5} parent=5 // pred_check_branch
      %163 = sbr.rel (%p160) target = $region32
    $region31: #{double_conv.5} parent=5 // pred_region
      %s164 = ssub.s32 %s9, 1
      %s165 = smul.u32 8, %s19
      %p166 = scmp.lt.s32.totalorder %s18, 1
      %s167 = scalar_select %p166, %s18, 1
      %p168 = scmp.lt.s32.totalorder %s165, 15
      %s169 = scalar_select %p168, %s165, 15
      %s170 = smul.addr %s169, 2
      %s171 = smul.addr %s167, 32
      %s172 = sadd.s32 %s170, %s171
      %s173 = smul.addr %s172, 4
      %s174 = scalar_lea.vmem %s0, %s173
      %p175 = pneg %p49
      %p176 = pneg %p46
      %p177 = pneg %p70
      %p178 = pneg %p67
      %p179 = pneg %p91
      %p180 = pneg %p88
      %p181 = pneg %p119
      %p182 = pneg %p116
      %s183 = smul.u32 8, %s19
      %p184 = scmp.lt.s32.totalorder %s18, 1
      %s185 = scalar_select %p184, %s18, 1
      %p186 = scmp.lt.s32.totalorder %s183, 15
      %s187 = scalar_select %p186, %s183, 15
      %s188 = smul.addr %s187, 2
      %s189 = smul.addr %s185, 32
      %s190 = sadd.s32 %s188, %s189
      %s191 = smul.addr %s190, 8
      %s192 = scalar_lea.vmem %s3, %s191
      %s193 = smul.u32 8, %s19
      %p194 = scmp.lt.s32.totalorder %s18, 1
      %s195 = scalar_select %p194, %s18, 1
      %p196 = scmp.lt.s32.totalorder %s193, 15
      %s197 = scalar_select %p196, %s193, 15
      %s198 = smul.addr %s197, 2
      %s199 = smul.addr %s195, 32
      %s200 = sadd.s32 %s198, %s199
      %s201 = smul.addr %s200, 4
      %s202 = scalar_lea.vmem %s0, %s201
      %s203 = smul.u32 8, %s19
      %s204 = smul.u32 8, %s19
      %p205 = scmp.lt.s32.totalorder %s18, 1
      %s206 = scalar_select %p205, %s18, 1
      %p207 = scmp.lt.s32.totalorder %s204, 15
      %s208 = scalar_select %p207, %s204, 15
      %s209 = smul.addr %s208, 2
      %s210 = smul.addr %s206, 32
      %s211 = sadd.s32 %s209, %s210
      %s212 = smul.addr %s211, 8
      %s213 = scalar_lea.vmem %s3, %s212
      %s214 = smul.u32 8, %s19
      %v215 = vld [vmem:[%s202] sm:$0xf]
      %v216 = vld [vmem:[%s202 + $0x4] sm:$0xf]
      %v217 = vld [vmem:[%s202 + $0x8] sm:$0xf]
      %v218 = vld [vmem:[%s202 + $0xc] sm:$0xf]
      %v219 = vld [vmem:[%s202 + $0x10] sm:$0xf]
      %v220 = vld [vmem:[%s202 + $0x14] sm:$0xf]
      %v221 = vld [vmem:[%s202 + $0x18] sm:$0xf]
      %v222 = vld [vmem:[%s202 + $0x1c] sm:$0xf]
      %v223 = vld [vmem:[%s202 + $0x20] sm:$0xf]
      %v224 = vld [vmem:[%s202 + $0x24] sm:$0xf]
      %v225 = vld [vmem:[%s202 + $0x28] sm:$0xf]
      %v226 = vld [vmem:[%s202 + $0x2c] sm:$0xf]
      %v227 = vld [vmem:[%s202 + $0x30] sm:$0xf]
      %v228 = vld [vmem:[%s202 + $0x34] sm:$0xf]
      %v229 = vld [vmem:[%s202 + $0x38] sm:$0xf]
      %v230 = vld [vmem:[%s202 + $0x3c] sm:$0xf]
      %v231 = vunpack.c.l.bf16 %v215
      %v232 = vunpack.c.l.bf16 %v216
      %v233 = vunpack.c.l.bf16 %v217
      %v234 = vunpack.c.l.bf16 %v218
      %v235 = vunpack.c.l.bf16 %v219
      %v236 = vunpack.c.l.bf16 %v220
      %v237 = vunpack.c.l.bf16 %v221
      %v238 = vunpack.c.l.bf16 %v222
      %v239 = vunpack.c.l.bf16 %v223
      %v240 = vunpack.c.l.bf16 %v224
      %v241 = vunpack.c.l.bf16 %v225
      %v242 = vunpack.c.l.bf16 %v226
      %v243 = vunpack.c.l.bf16 %v227
      %v244 = vunpack.c.l.bf16 %v228
      %v245 = vunpack.c.l.bf16 %v229
      %v246 = vunpack.c.l.bf16 %v230
      %v247 = vld [vmem:[%s1] sm:$0x1]
      %v249 = vperm.slane %v247, 0
      %v251 = vmul.f32 %v231, %v249
      %v252 = vmul.f32 %v232, %v249
      %v253 = vmul.f32 %v233, %v249
      %v254 = vmul.f32 %v234, %v249
      %v255 = vmul.f32 %v235, %v249
      %v256 = vmul.f32 %v236, %v249
      %v257 = vmul.f32 %v237, %v249
      %v258 = vmul.f32 %v238, %v249
      %v259 = vmul.f32 %v239, %v249
      %v260 = vmul.f32 %v240, %v249
      %v261 = vmul.f32 %v241, %v249
      %v262 = vmul.f32 %v242, %v249
      %v263 = vmul.f32 %v243, %v249
      %v264 = vmul.f32 %v244, %v249
      %v265 = vmul.f32 %v245, %v249
      %v266 = vmul.f32 %v246, %v249
      %v267 = vld [vmem:[%s2] sm:$0x1]
      %v269 = vperm.slane %v267, 0
      %v271 = vadd.f32 %v251, %v269
      %v272 = vadd.f32 %v252, %v269
      %v273 = vadd.f32 %v253, %v269
      %v274 = vadd.f32 %v254, %v269
      %v275 = vadd.f32 %v255, %v269
      %v276 = vadd.f32 %v256, %v269
      %v277 = vadd.f32 %v257, %v269
      %v278 = vadd.f32 %v258, %v269
      %v279 = vadd.f32 %v259, %v269
      %v280 = vadd.f32 %v260, %v269
      %v281 = vadd.f32 %v261, %v269
      %v282 = vadd.f32 %v262, %v269
      %v283 = vadd.f32 %v263, %v269
      %v284 = vadd.f32 %v264, %v269
      %v285 = vadd.f32 %v265, %v269
      %v286 = vadd.f32 %v266, %v269
      %v287 = vmax.f32 %v271, 0.0
      %v288 = vmax.f32 %v272, 0.0
      %v289 = vmax.f32 %v273, 0.0
      %v290 = vmax.f32 %v274, 0.0
      %v291 = vmax.f32 %v275, 0.0
      %v292 = vmax.f32 %v276, 0.0
      %v293 = vmax.f32 %v277, 0.0
      %v294 = vmax.f32 %v278, 0.0
      %v295 = vmax.f32 %v279, 0.0
      %v296 = vmax.f32 %v280, 0.0
      %v297 = vmax.f32 %v281, 0.0
      %v298 = vmax.f32 %v282, 0.0
      %v299 = vmax.f32 %v283, 0.0
      %v300 = vmax.f32 %v284, 0.0
      %v301 = vmax.f32 %v285, 0.0
      %v302 = vmax.f32 %v286, 0.0
      %303 = vst [vmem:[%s213] sm:$0xff] %v287
      %304 = vst [vmem:[%s213 + $0x8] sm:$0xff] %v288
      %305 = vst [vmem:[%s213 + $0x10] sm:$0xff] %v289
      %306 = vst [vmem:[%s213 + $0x18] sm:$0xff] %v290
      %307 = vst [vmem:[%s213 + $0x20] sm:$0xff] %v291
      %308 = vst [vmem:[%s213 + $0x28] sm:$0xff] %v292
      %309 = vst [vmem:[%s213 + $0x30] sm:$0xff] %v293
      %310 = vst [vmem:[%s213 + $0x38] sm:$0xff] %v294
      %311 = vst [vmem:[%s213 + $0x40] sm:$0xff] %v295
      %312 = vst [vmem:[%s213 + $0x48] sm:$0xff] %v296
      %313 = vst [vmem:[%s213 + $0x50] sm:$0xff] %v297
      %314 = vst [vmem:[%s213 + $0x58] sm:$0xff] %v298
      %315 = vst [vmem:[%s213 + $0x60] sm:$0xff] %v299
      %316 = vst [vmem:[%s213 + $0x68] sm:$0xff] %v300
      %317 = vst [vmem:[%s213 + $0x70] sm:$0xff] %v301
      %318 = vst [vmem:[%s213 + $0x78] sm:$0xff] %v302
      %s319 = smul.u32 8, %s19
      %p320 = scmp.lt.s32.totalorder %s18, 1
      %s321 = scalar_select %p320, %s18, 1
      %p322 = scmp.lt.s32.totalorder %s319, 15
      %s323 = scalar_select %p322, %s319, 15
      %s324 = smul.addr %s323, 2
      %s325 = smul.addr %s321, 32
      %s326 = sadd.s32 %s324, %s325
      %s327 = smul.addr %s326, 8
      %s328 = scalar_lea.vmem %s3, %s327
      // Predicated region
      $region33: #{double_conv.5} parent=31 // pred_check
        %p329 = pneg %p116
      $region34: #{double_conv.5} parent=31 // pred_check_branch
        %331 = sbr.rel (%p329) target = $region36
      $region35: #{double_conv.5} parent=31 // pred_region
        %s332 = smul.u32 8, %s19
      $region36: #{double_conv.5} parent=31 // pred_fallthru
        _
    $region32: #{double_conv.5} parent=5 // pred_fallthru
      _
    %p333 = scmp.le.s32.totalorder 2, %s9
    // Predicated region
    $region37: #{double_conv.5} parent=5 // pred_check
      %p334 = pneg %p333
    $region38: #{double_conv.5} parent=5 // pred_check_branch
      %336 = sbr.rel (%p334) target = $region40
    $region39: #{double_conv.5} parent=5 // pred_region
      %s337 = ssub.s32 %s9, 2
      // Predicated region
      $region41: #{double_conv.5} parent=39 // pred_check
        %p338 = pneg %p122
      $region42: #{double_conv.5} parent=39 // pred_check_branch
        %340 = sbr.rel (%p338) target = $region44
      $region43: #{double_conv.5} parent=39 // pred_region
        %s341 = smul.u32 8, %s21
        %p342 = scmp.lt.s32.totalorder %s20, 1
        %s343 = scalar_select %p342, %s20, 1
        %p344 = scmp.lt.s32.totalorder %s341, 15
        %s345 = scalar_select %p344, %s341, 15
        %s346 = smul.addr %s345, 2
        %s347 = smul.addr %s343, 32
        %s348 = sadd.s32 %s346, %s347
        %s349 = smul.addr %s348, 8
        %s350 = scalar_lea.vmem %s3, %s349
      $region44: #{double_conv.5} parent=39 // pred_fallthru
        _
    $region40: #{double_conv.5} parent=5 // pred_fallthru
      _
  $region6: #{double_conv.5} parent=0 // loop_footer
    %s13 = sadd.s32 1, %s9
  $region7: #{double_conv.5} parent=0 // loop_footer_branch
    %8 = sbr.rel target = $region3
  $region8: #{double_conv.5} parent=0 // loop_exit
    _

// kernel: double_conv.3
$region0: #{double_conv.3}
  #allocation0 [shape = 'u32[]', space=smem, size = 0x4, offset = 0x4, fixed_abs, tag = 'smem constant byte address 0x4 - core index']
  #allocation1 [shape = 'u32[72,128]{1,0:T(1,128)}', space=vmem, size = 0x9000, scoped, tag = 'internal scratch']
  %s0 = inlined_call_operand.vmem [shape: bf16[2,16,16,128], index: 0, kind: input, shape index: {}, may-alias: {0,1,2}]
  %s1 = inlined_call_operand.vmem [shape: bf16[2,16,16,128], index: 1, kind: input, shape index: {}, may-alias: {0,1,2}]
  %s2 = inlined_call_operand.vmem [shape: bf16[2,16,16,128], index: 2, kind: input, shape index: {}, may-alias: {0,1,2}]
  %s3 = inlined_call_operand.vmem [shape: bf16[1152,128], index: 3, kind: input, shape index: {}]
  %s4 = inlined_call_operand.vmem [shape: f32[1,1,1,128], index: 4, kind: input, shape index: {}]
  %s5 = inlined_call_operand.vmem [shape: bf16[2,16,16,128], index: 5, kind: output, shape index: {0}]
  %s6 = inlined_call_operand.vmem [shape: f32[2,2,128], index: 6, kind: output, shape index: {1}]
  %7 = xla_tuple %s5, %s6
  %s8 = sld [smem:[#allocation0]]
  $region65: #{double_conv.3} parent=0
    _
  %s10 = ssub.s32 1, %s8
  %s11 = scalar_select 0, %s10, %s8
  loop: start=0, step=1, limit=6
  $region2: #{double_conv.3} parent=0 // loop_pre_header
    _
  $region3: #{double_conv.3} parent=0 // loop_header
    %s13 = sphi 0, %s17
    %p14 = scmp.ge.s32.totalorder %s13, 6
    %s20 = sphi 0, %s39
    %s21 = sphi 0, %s35
    %s22 = sphi 0, %s31
    %s23 = sphi 0, %s20
    %s24 = sphi 0, %s21
    %s25 = sphi 0, %s22
    %s26 = sphi 0, %s23
    %s27 = sphi 0, %s24
    %s28 = sphi 0, %s25
    %s44 = sphi 0, %s46
    %s47 = sphi 0, %s44
    %s48 = sphi 0, %s47
    %s64 = sphi 0, %s48
    %s80 = sphi 0, %s82
    %s83 = sphi 0, %s80
    %s84 = sphi 0, %s83
    %s100 = sphi 0, %s84
    %s116 = sphi 0, %s118
    %s119 = sphi 0, %s116
    %s120 = sphi 0, %s119
    %s136 = sphi 0, %s120
    %s142 = sphi 0, %s144
    %s145 = sphi 0, %s142
    %s146 = sphi 0, %s145
    %s162 = sphi 0, %s146
    %s168 = sphi 0, %s170
    %s171 = sphi 0, %s168
    %s172 = sphi 0, %s171
    %s188 = sphi 0, %s172
    %s198 = sphi 0, %s200
    %s201 = sphi 0, %s198
    %s202 = sphi 0, %s201
    %s218 = sphi 0, %s202
    %s226 = sphi 0, %s228
    %s229 = sphi 0, %s226
    %s230 = sphi 0, %s229
    %s246 = sphi 0, %s230
  $region4: #{double_conv.3} parent=0 // loop_header_branch
    %16 = sbr.rel (%p14) target = $region8
  $region5: #{double_conv.3} parent=0 // loop_body
    %s18 = ssub.s32 %s13, 1
    %s19 = ssub.s32 %s13, 2
    %s29 = sadd.s32 1, %s22
    %p30 = scmp.ge.s32.totalorder %s29, 2
    %s31 = scalar_select %p30, 0, %s29
    %s32 = sadd.s32 1, %s21
    %s33 = scalar_select %p30, %s32, %s21
    %p34 = scmp.ge.s32.totalorder %s33, 1
    %s35 = scalar_select %p34, 0, %s33
    %s36 = sadd.s32 1, %s20
    %s37 = scalar_select %p34, %s36, %s20
    %p38 = scmp.ge.s32.totalorder %s37, 2
    %s39 = scalar_select %p38, 0, %s37
    %s40 = ssub.s32 %s20, %s39
    %s41 = ssub.s32 %s22, %s31
    %s42 = sor.u32 %s40, %s41
    %p43 = scmp.eq.s32.totalorder %s42, 0
    %s45 = sadd.s32 %s44, 1
    %s46 = scalar_select %p43, %s44, %s45
    %p49 = pneg %p43
    %p50 = scmp.eq.s32.totalorder %s13, 3
    %p51 = por %p49, %p50
    %p52 = scmp.ne.s32.totalorder %s44, %s47
    %p53 = scmp.eq.s32.totalorder %s13, 0
    %p54 = por %p52, %p53
    %p55 = scmp.ne.s32.totalorder %s44, %s47
    %p56 = scmp.eq.s32.totalorder %s18, 3
    %p57 = por %p55, %p56
    %p58 = scmp.ne.s32.totalorder %s47, %s48
    %p59 = scmp.eq.s32.totalorder %s18, 0
    %p60 = por %p58, %p59
    %p61 = scmp.ne.s32.totalorder %s47, %s48
    %p62 = scmp.eq.s32.totalorder %s19, 3
    %p63 = por %p61, %p62
    %p65 = scmp.ne.s32.totalorder %s48, %s64
    %p66 = scmp.eq.s32.totalorder %s19, 0
    %p67 = por %p65, %p66
    %s68 = smul.u32 %s22, 8
    %s69 = ssub.s32 %s68, 1
    %p70 = scmp.gt.s32.totalorder %s69, 0
    %s71 = scalar_select %p70, %s69, 0
    %s72 = smul.u32 %s31, 8
    %s73 = ssub.s32 %s72, 1
    %p74 = scmp.gt.s32.totalorder %s73, 0
    %s75 = scalar_select %p74, %s73, 0
    %s76 = ssub.s32 %s20, %s39
    %s77 = ssub.s32 %s71, %s75
    %s78 = sor.u32 %s76, %s77
    %p79 = scmp.eq.s32.totalorder %s78, 0
    %s81 = sadd.s32 %s80, 1
    %s82 = scalar_select %p79, %s80, %s81
    %p85 = pneg %p79
    %p86 = scmp.eq.s32.totalorder %s13, 3
    %p87 = por %p85, %p86
    %p88 = scmp.ne.s32.totalorder %s80, %s83
    %p89 = scmp.eq.s32.totalorder %s13, 0
    %p90 = por %p88, %p89
    %p91 = scmp.ne.s32.totalorder %s80, %s83
    %p92 = scmp.eq.s32.totalorder %s18, 3
    %p93 = por %p91, %p92
    %p94 = scmp.ne.s32.totalorder %s83, %s84
    %p95 = scmp.eq.s32.totalorder %s18, 0
    %p96 = por %p94, %p95
    %p97 = scmp.ne.s32.totalorder %s83, %s84
    %p98 = scmp.eq.s32.totalorder %s19, 3
    %p99 = por %p97, %p98
    %p101 = scmp.ne.s32.totalorder %s84, %s100
    %p102 = scmp.eq.s32.totalorder %s19, 0
    %p103 = por %p101, %p102
    %s104 = smul.u32 %s22, 8
    %s105 = sadd.s32 %s104, 8
    %p106 = scmp.lt.s32.totalorder %s105, 15
    %s107 = scalar_select %p106, %s105, 15
    %s108 = smul.u32 %s31, 8
    %s109 = sadd.s32 %s108, 8
    %p110 = scmp.lt.s32.totalorder %s109, 15
    %s111 = scalar_select %p110, %s109, 15
    %s112 = ssub.s32 %s20, %s39
    %s113 = ssub.s32 %s107, %s111
    %s114 = sor.u32 %s112, %s113
    %p115 = scmp.eq.s32.totalorder %s114, 0
    %s117 = sadd.s32 %s116, 1
    %s118 = scalar_select %p115, %s116, %s117
    %p121 = pneg %p115
    %p122 = scmp.eq.s32.totalorder %s13, 3
    %p123 = por %p121, %p122
    %p124 = scmp.ne.s32.totalorder %s116, %s119
    %p125 = scmp.eq.s32.totalorder %s13, 0
    %p126 = por %p124, %p125
    %p127 = scmp.ne.s32.totalorder %s116, %s119
    %p128 = scmp.eq.s32.totalorder %s18, 3
    %p129 = por %p127, %p128
    %p130 = scmp.ne.s32.totalorder %s119, %s120
    %p131 = scmp.eq.s32.totalorder %s18, 0
    %p132 = por %p130, %p131
    %p133 = scmp.ne.s32.totalorder %s119, %s120
    %p134 = scmp.eq.s32.totalorder %s19, 3
    %p135 = por %p133, %p134
    %p137 = scmp.ne.s32.totalorder %s120, %s136
    %p138 = scmp.eq.s32.totalorder %s19, 0
    %p139 = por %p137, %p138
    %s140 = ssub.s32 %s21, %s35
    %p141 = scmp.eq.s32.totalorder %s140, 0
    %s143 = sadd.s32 %s142, 1
    %s144 = scalar_select %p141, %s142, %s143
    %p147 = pneg %p141
    %p148 = scmp.eq.s32.totalorder %s13, 3
    %p149 = por %p147, %p148
    %p150 = scmp.ne.s32.totalorder %s142, %s145
    %p151 = scmp.eq.s32.totalorder %s13, 0
    %p152 = por %p150, %p151
    %p153 = scmp.ne.s32.totalorder %s142, %s145
    %p154 = scmp.eq.s32.totalorder %s18, 3
    %p155 = por %p153, %p154
    %p156 = scmp.ne.s32.totalorder %s145, %s146
    %p157 = scmp.eq.s32.totalorder %s18, 0
    %p158 = por %p156, %p157
    %p159 = scmp.ne.s32.totalorder %s145, %s146
    %p160 = scmp.eq.s32.totalorder %s19, 3
    %p161 = por %p159, %p160
    %p163 = scmp.ne.s32.totalorder %s146, %s162
    %p164 = scmp.eq.s32.totalorder %s19, 0
    %p165 = por %p163, %p164
    %s166 = ssub.s32 %s21, %s35
    %p167 = scmp.eq.s32.totalorder %s166, 0
    %s169 = sadd.s32 %s168, 1
    %s170 = scalar_select %p167, %s168, %s169
    %p173 = pneg %p167
    %p174 = scmp.eq.s32.totalorder %s13, 3
    %p175 = por %p173, %p174
    %p176 = scmp.ne.s32.totalorder %s168, %s171
    %p177 = scmp.eq.s32.totalorder %s13, 0
    %p178 = por %p176, %p177
    %p179 = scmp.ne.s32.totalorder %s168, %s171
    %p180 = scmp.eq.s32.totalorder %s18, 3
    %p181 = por %p179, %p180
    %p182 = scmp.ne.s32.totalorder %s171, %s172
    %p183 = scmp.eq.s32.totalorder %s18, 0
    %p184 = por %p182, %p183
    %p185 = scmp.ne.s32.totalorder %s171, %s172
    %p186 = scmp.eq.s32.totalorder %s19, 3
    %p187 = por %p185, %p186
    %p189 = scmp.ne.s32.totalorder %s172, %s188
    %p190 = scmp.eq.s32.totalorder %s19, 0
    %p191 = por %p189, %p190
    %s192 = ssub.s32 %s20, %s39
    %s193 = ssub.s32 %s22, %s31
    %s194 = sor.u32 %s192, %s193
    %s195 = ssub.s32 %s21, %s35
    %s196 = sor.u32 %s194, %s195
    %p197 = scmp.eq.s32.totalorder %s196, 0
    %s199 = sadd.s32 %s198, 1
    %s200 = scalar_select %p197, %s198, %s199
    %p203 = pneg %p197
    %p204 = scmp.eq.s32.totalorder %s13, 3
    %p205 = por %p203, %p204
    %p206 = scmp.ne.s32.totalorder %s198, %s201
    %p207 = scmp.eq.s32.totalorder %s13, 0
    %p208 = por %p206, %p207
    %p209 = scmp.ne.s32.totalorder %s198, %s201
    %p210 = scmp.eq.s32.totalorder %s18, 3
    %p211 = por %p209, %p210
    %p212 = scmp.ne.s32.totalorder %s201, %s202
    %p213 = scmp.eq.s32.totalorder %s18, 0
    %p214 = por %p212, %p213
    %p215 = scmp.ne.s32.totalorder %s201, %s202
    %p216 = scmp.eq.s32.totalorder %s19, 3
    %p217 = por %p215, %p216
    %p219 = scmp.ne.s32.totalorder %s202, %s218
    %p220 = scmp.eq.s32.totalorder %s19, 0
    %p221 = por %p219, %p220
    %s222 = ssub.s32 %s20, %s39
    %s223 = ssub.s32 %s21, %s35
    %s224 = sor.u32 %s222, %s223
    %p225 = scmp.eq.s32.totalorder %s224, 0
    %s227 = sadd.s32 %s226, 1
    %s228 = scalar_select %p225, %s226, %s227
    %p231 = pneg %p225
    %p232 = scmp.eq.s32.totalorder %s13, 3
    %p233 = por %p231, %p232
    %p234 = scmp.ne.s32.totalorder %s226, %s229
    %p235 = scmp.eq.s32.totalorder %s13, 0
    %p236 = por %p234, %p235
    %p237 = scmp.ne.s32.totalorder %s226, %s229
    %p238 = scmp.eq.s32.totalorder %s18, 3
    %p239 = por %p237, %p238
    %p240 = scmp.ne.s32.totalorder %s229, %s230
    %p241 = scmp.eq.s32.totalorder %s18, 0
    %p242 = por %p240, %p241
    %p243 = scmp.ne.s32.totalorder %s229, %s230
    %p244 = scmp.eq.s32.totalorder %s19, 3
    %p245 = por %p243, %p244
    %p247 = scmp.ne.s32.totalorder %s230, %s246
    %p248 = scmp.eq.s32.totalorder %s19, 0
    %p249 = por %p247, %p248
    %p250 = scmp.le.s32.totalorder 1, %s13
    %p251 = scmp.lt.s32.totalorder %s13, 5
    %p252 = pnand %p250, %p251
    %p253 = pneg %p252
    // Predicated region
    $region9: #{double_conv.3} parent=5 // pred_check
      _
    $region10: #{double_conv.3} parent=5 // pred_check_branch
      %255 = sbr.rel (%p252) target = $region12
    $region11: #{double_conv.3} parent=5 // pred_region
      %s256 = ssub.s32 %s13, 1
      // Predicated region
      $region13: #{double_conv.3} parent=11 // pred_check
        %p257 = pneg %p158
      $region14: #{double_conv.3} parent=11 // pred_check_branch
        %259 = sbr.rel (%p257) target = $region16
      $region15: #{double_conv.3} parent=11 // pred_region
        %p260 = scmp.lt.s32.totalorder %s24, 0
        %s261 = scalar_select %p260, %s24, 0
        %s262 = smul.addr %s261, 4
        %s263 = scalar_lea.vmem %s3, %s262
      $region16: #{double_conv.3} parent=11 // pred_fallthru
        _
      // Predicated region
      $region17: #{double_conv.3} parent=11 // pred_check
        %p264 = pneg %p184
      $region18: #{double_conv.3} parent=11 // pred_check_branch
        %266 = sbr.rel (%p264) target = $region20
      $region19: #{double_conv.3} parent=11 // pred_region
        %p267 = scmp.lt.s32.totalorder %s24, 0
        %s268 = scalar_select %p267, %s24, 0
        %s269 = scalar_lea.vmem %s4, %s268
      $region20: #{double_conv.3} parent=11 // pred_fallthru
        _
    $region12: #{double_conv.3} parent=5 // pred_fallthru
      _
    %p270 = scmp.lt.s32.totalorder %s13, 4
    // Predicated region
    $region21: #{double_conv.3} parent=5 // pred_check
      %p271 = pneg %p270
    $region22: #{double_conv.3} parent=5 // pred_check_branch
      %273 = sbr.rel (%p271) target = $region24
    $region23: #{double_conv.3} parent=5 // pred_region
      // Predicated region
      $region25: #{double_conv.3} parent=23 // pred_check
        %p274 = pneg %p54
      $region26: #{double_conv.3} parent=23 // pred_check_branch
        %276 = sbr.rel (%p274) target = $region28
      $region27: #{double_conv.3} parent=23 // pred_region
        %s277 = smul.u32 8, %s22
        %p278 = scmp.lt.s32.totalorder %s20, 1
        %s279 = scalar_select %p278, %s20, 1
        %p280 = scmp.lt.s32.totalorder %s277, 15
        %s281 = scalar_select %p280, %s277, 15
        %s282 = smul.addr %s281, 2
        %s283 = smul.addr %s279, 32
        %s284 = sadd.s32 %s282, %s283
        %s285 = smul.addr %s284, 4
        %s286 = scalar_lea.vmem %s0, %s285
        %s287 = smul.u32 8, %s22
      $region28: #{double_conv.3} parent=23 // pred_fallthru
        _
      // Predicated region
      $region29: #{double_conv.3} parent=23 // pred_check
        %p288 = pneg %p90
      $region30: #{double_conv.3} parent=23 // pred_check_branch
        %290 = sbr.rel (%p288) target = $region32
      $region31: #{double_conv.3} parent=23 // pred_region
        %s291 = smul.u32 %s22, 8
        %s292 = ssub.s32 %s291, 1
        %p293 = scmp.gt.s32.totalorder %s292, 0
        %s294 = scalar_select %p293, %s292, 0
        %p295 = scmp.lt.s32.totalorder %s20, 1
        %s296 = scalar_select %p295, %s20, 1
        %p297 = scmp.lt.s32.totalorder %s294, 15
        %s298 = scalar_select %p297, %s294, 15
        %s299 = smul.addr %s298, 2
        %s300 = smul.addr %s296, 32
        %s301 = sadd.s32 %s299, %s300
        %s302 = smul.addr %s301, 4
        %s303 = scalar_lea.vmem %s1, %s302
        %s304 = smul.u32 %s22, 8
        %s305 = ssub.s32 %s304, 1
        %p306 = scmp.gt.s32.totalorder %s305, 0
        %s307 = scalar_select %p306, %s305, 0
      $region32: #{double_conv.3} parent=23 // pred_fallthru
        _
      // Predicated region
      $region33: #{double_conv.3} parent=23 // pred_check
        %p308 = pneg %p126
      $region34: #{double_conv.3} parent=23 // pred_check_branch
        %310 = sbr.rel (%p308) target = $region36
      $region35: #{double_conv.3} parent=23 // pred_region
        %s311 = smul.u32 %s22, 8
        %s312 = sadd.s32 %s311, 8
        %p313 = scmp.lt.s32.totalorder %s312, 15
        %s314 = scalar_select %p313, %s312, 15
        %p315 = scmp.lt.s32.totalorder %s20, 1
        %s316 = scalar_select %p315, %s20, 1
        %p317 = scmp.lt.s32.totalorder %s314, 15
        %s318 = scalar_select %p317, %s314, 15
        %s319 = smul.addr %s318, 2
        %s320 = smul.addr %s316, 32
        %s321 = sadd.s32 %s319, %s320
        %s322 = smul.addr %s321, 4
        %s323 = scalar_lea.vmem %s2, %s322
        %s324 = smul.u32 %s22, 8
        %s325 = sadd.s32 %s324, 8
        %p326 = scmp.lt.s32.totalorder %s325, 15
        %s327 = scalar_select %p326, %s325, 15
      $region36: #{double_conv.3} parent=23 // pred_fallthru
        _
    $region24: #{double_conv.3} parent=5 // pred_fallthru
      _
    %p328 = scmp.le.s32.totalorder 1, %s13
    %p329 = scmp.lt.s32.totalorder %s13, 5
    %p330 = pnand %p328, %p329
    %p331 = pneg %p330
    // Predicated region
    $region37: #{double_conv.3} parent=5 // pred_check
      _
    $region38: #{double_conv.3} parent=5 // pred_check_branch
      %333 = sbr.rel (%p330) target = $region40
    $region39: #{double_conv.3} parent=5 // pred_region
      %s334 = ssub.s32 %s13, 1
      %s335 = smul.u32 8, %s25
      %p336 = scmp.lt.s32.totalorder %s23, 1
      %s337 = scalar_select %p336, %s23, 1
      %p338 = scmp.lt.s32.totalorder %s335, 15
      %s339 = scalar_select %p338, %s335, 15
      %s340 = smul.addr %s339, 2
      %s341 = smul.addr %s337, 32
      %s342 = sadd.s32 %s340, %s341
      %s343 = smul.addr %s342, 4
      %s344 = scalar_lea.vmem %s0, %s343
      %p345 = pneg %p60
      %p346 = pneg %p57
      %s347 = smul.u32 %s25, 8
      %s348 = ssub.s32 %s347, 1
      %p349 = scmp.gt.s32.totalorder %s348, 0
      %s350 = scalar_select %p349, %s348, 0
      %p351 = scmp.lt.s32.totalorder %s23, 1
      %s352 = scalar_select %p351, %s23, 1
      %p353 = scmp.lt.s32.totalorder %s350, 15
      %s354 = scalar_select %p353, %s350, 15
      %s355 = smul.addr %s354, 2
      %s356 = smul.addr %s352, 32
      %s357 = sadd.s32 %s355, %s356
      %s358 = smul.addr %s357, 4
      %s359 = scalar_lea.vmem %s1, %s358
      %p360 = pneg %p96
      %p361 = pneg %p93
      %s362 = smul.u32 %s25, 8
      %s363 = sadd.s32 %s362, 8
      %p364 = scmp.lt.s32.totalorder %s363, 15
      %s365 = scalar_select %p364, %s363, 15
      %p366 = scmp.lt.s32.totalorder %s23, 1
      %s367 = scalar_select %p366, %s23, 1
      %p368 = scmp.lt.s32.totalorder %s365, 15
      %s369 = scalar_select %p368, %s365, 15
      %s370 = smul.addr %s369, 2
      %s371 = smul.addr %s367, 32
      %s372 = sadd.s32 %s370, %s371
      %s373 = smul.addr %s372, 4
      %s374 = scalar_lea.vmem %s2, %s373
      %p375 = pneg %p132
      %p376 = pneg %p129
      %p377 = scmp.lt.s32.totalorder %s24, 0
      %s378 = scalar_select %p377, %s24, 0
      %s379 = smul.addr %s378, 4
      %s380 = scalar_lea.vmem %s3, %s379
      %p381 = pneg %p158
      %p382 = pneg %p155
      %p383 = scmp.lt.s32.totalorder %s24, 0
      %s384 = scalar_select %p383, %s24, 0
      %s385 = scalar_lea.vmem %s4, %s384
      %p386 = pneg %p184
      %p387 = pneg %p181
      %p388 = pneg %p214
      %p389 = pneg %p211
      %s390 = smul.u32 8, %s25
      %p391 = scmp.lt.s32.totalorder %s23, 1
      %s392 = scalar_select %p391, %s23, 1
      %p393 = scmp.lt.s32.totalorder %s390, 15
      %s394 = scalar_select %p393, %s390, 15
      %p395 = scmp.lt.s32.totalorder %s24, 0
      %s396 = scalar_select %p395, %s24, 0
      %s397 = smul.addr %s394, 2
      %s398 = sadd.s32 %s396, %s397
      %s399 = smul.addr %s392, 32
      %s400 = sadd.s32 %s398, %s399
      %s401 = smul.addr %s400, 4
      %s402 = scalar_lea.vmem %s5, %s401
      %p403 = pneg %p242
      %p404 = pneg %p239
      %p405 = scmp.lt.s32.totalorder %s23, 1
      %s406 = scalar_select %p405, %s23, 1
      %p407 = scmp.lt.s32.totalorder %s24, 0
      %s408 = scalar_select %p407, %s24, 0
      %s409 = sadd.s32 %s408, %s406
      %s410 = smul.addr %s409, 2
      %s411 = scalar_lea.vmem %s6, %s410
      %s412 = smul.u32 8, %s25
      %p413 = scmp.lt.s32.totalorder %s23, 1
      %s414 = scalar_select %p413, %s23, 1
      %p415 = scmp.lt.s32.totalorder %s412, 15
      %s416 = scalar_select %p415, %s412, 15
      %s417 = smul.addr %s416, 2
      %s418 = smul.addr %s414, 32
      %s419 = sadd.s32 %s417, %s418
      %s420 = smul.addr %s419, 4
      %s421 = scalar_lea.vmem %s0, %s420
      %s422 = smul.u32 8, %s25
      %s423 = smul.u32 %s25, 8
      %s424 = ssub.s32 %s423, 1
      %p425 = scmp.gt.s32.totalorder %s424, 0
      %s426 = scalar_select %p425, %s424, 0
      %p427 = scmp.lt.s32.totalorder %s23, 1
      %s428 = scalar_select %p427, %s23, 1
      %p429 = scmp.lt.s32.totalorder %s426, 15
      %s430 = scalar_select %p429, %s426, 15
      %s431 = smul.addr %s430, 2
      %s432 = smul.addr %s428, 32
      %s433 = sadd.s32 %s431, %s432
      %s434 = smul.addr %s433, 4
      %s435 = scalar_lea.vmem %s1, %s434
      %s436 = smul.u32 %s25, 8
      %s437 = ssub.s32 %s436, 1
      %p438 = scmp.gt.s32.totalorder %s437, 0
      %s439 = scalar_select %p438, %s437, 0
      %s440 = smul.u32 %s25, 8
      %s441 = sadd.s32 %s440, 8
      %p442 = scmp.lt.s32.totalorder %s441, 15
      %s443 = scalar_select %p442, %s441, 15
      %p444 = scmp.lt.s32.totalorder %s23, 1
      %s445 = scalar_select %p444, %s23, 1
      %p446 = scmp.lt.s32.totalorder %s443, 15
      %s447 = scalar_select %p446, %s443, 15
      %s448 = smul.addr %s447, 2
      %s449 = smul.addr %s445, 32
      %s450 = sadd.s32 %s448, %s449
      %s451 = smul.addr %s450, 4
      %s452 = scalar_lea.vmem %s2, %s451
      %s453 = smul.u32 %s25, 8
      %s454 = sadd.s32 %s453, 8
      %p455 = scmp.lt.s32.totalorder %s454, 15
      %s456 = scalar_select %p455, %s454, 15
      %p457 = scmp.lt.s32.totalorder %s24, 0
      %s458 = scalar_select %p457, %s24, 0
      %s459 = smul.addr %s458, 4
      %s460 = scalar_lea.vmem %s3, %s459
      %p461 = scmp.lt.s32.totalorder %s24, 0
      %s462 = scalar_select %p461, %s24, 0
      %s463 = scalar_lea.vmem %s4, %s462
      %s464 = smul.u32 8, %s25
      %p465 = scmp.lt.s32.totalorder %s23, 1
      %s466 = scalar_select %p465, %s23, 1
      %p467 = scmp.lt.s32.totalorder %s464, 15
      %s468 = scalar_select %p467, %s464, 15
      %p469 = scmp.lt.s32.totalorder %s24, 0
      %s470 = scalar_select %p469, %s24, 0
      %s471 = smul.addr %s468, 2
      %s472 = sadd.s32 %s470, %s471
      %s473 = smul.addr %s466, 32
      %s474 = sadd.s32 %s472, %s473
      %s475 = smul.addr %s474, 4
      %s476 = scalar_lea.vmem %s5, %s475
      %s477 = smul.u32 8, %s25
      %p478 = scmp.lt.s32.totalorder %s23, 1
      %s479 = scalar_select %p478, %s23, 1
      %p480 = scmp.lt.s32.totalorder %s24, 0
      %s481 = scalar_select %p480, %s24, 0
      %s482 = sadd.s32 %s481, %s479
      %s483 = smul.addr %s482, 2
      %s484 = scalar_lea.vmem %s6, %s483
      %v486 = vld [vmem:[%s421] sm:$0xf]
      %v487 = vld [vmem:[%s421 + $0x4] sm:$0xf]
      %v488 = vld [vmem:[%s421 + $0x8] sm:$0xf]
      %v489 = vld [vmem:[%s421 + $0xc] sm:$0xf]
      %v490 = vld [vmem:[%s421 + $0x10] sm:$0xf]
      %v491 = vld [vmem:[%s421 + $0x14] sm:$0xf]
      %v492 = vld [vmem:[%s421 + $0x18] sm:$0xf]
      %v493 = vld [vmem:[%s421 + $0x1c] sm:$0xf]
      %v494 = vld [vmem:[%s421 + $0x20] sm:$0xf]
      %v495 = vld [vmem:[%s421 + $0x24] sm:$0xf]
      %v496 = vld [vmem:[%s421 + $0x28] sm:$0xf]
      %v497 = vld [vmem:[%s421 + $0x2c] sm:$0xf]
      %v498 = vld [vmem:[%s421 + $0x30] sm:$0xf]
      %v499 = vld [vmem:[%s421 + $0x34] sm:$0xf]
      %v500 = vld [vmem:[%s421 + $0x38] sm:$0xf]
      %v501 = vld [vmem:[%s421 + $0x3c] sm:$0xf]
      %v502 = vld [vmem:[%s435] sm:$0xf]
      %v503 = vld [vmem:[%s435 + $0x4] sm:$0xf]
      %v504 = vld [vmem:[%s452] sm:$0xf]
      %v505 = vld [vmem:[%s452 + $0x4] sm:$0xf]
      %p506 = scmp.gt.s32.totalorder %s25, 0
      %s507 = scalar_select %p506, 1, 0
      %v508 = vstv %s507
      %vm509 = vcmp.eq.s32.totalorder %v508, 1
      %v510 = vsel %vm509, %v502, 0
      %v511 = vsel %vm509, %v503, 0
      %s512 = sadd.s32 %s25, 1
      %p513 = scmp.lt.s32.totalorder %s512, 2
      %s514 = scalar_select %p513, 1, 0
      %v515 = vstv %s514
      %vm516 = vcmp.eq.s32.totalorder %v515, 1
      %v517 = vsel %vm516, %v504, 0
      %v518 = vsel %vm516, %v505, 0
      %v539 = vunpack.c.l.b16 %v510
      %v540 = vunpack.c.l.b16 %v511
      %v541 = vunpack.c.l.b16 %v486
      %v542 = vunpack.c.l.b16 %v487
      %v543 = vunpack.c.l.b16 %v488
      %v544 = vunpack.c.l.b16 %v489
      %v545 = vunpack.c.l.b16 %v490
      %v546 = vunpack.c.l.b16 %v491
      %v547 = vunpack.c.l.b16 %v492
      %v548 = vunpack.c.l.b16 %v493
      %v549 = vunpack.c.l.b16 %v494
      %v550 = vunpack.c.l.b16 %v495
      %v551 = vunpack.c.l.b16 %v496
      %v552 = vunpack.c.l.b16 %v497
      %v553 = vunpack.c.l.b16 %v498
      %v554 = vunpack.c.l.b16 %v499
      %v555 = vunpack.c.l.b16 %v500
      %v556 = vunpack.c.l.b16 %v501
      %v557 = vunpack.c.l.b16 %v517
      %v558 = vunpack.c.l.b16 %v518
      %v559 = vpack.c.b16 %v540, %v539
      %v560 = vpack.c.b16 %v542, %v541
      %v561 = vpack.c.b16 %v544, %v543
      %v562 = vpack.c.b16 %v546, %v545
      %v563 = vpack.c.b16 %v548, %v547
      %v564 = vpack.c.b16 %v550, %v549
      %v565 = vpack.c.b16 %v552, %v551
      %v566 = vpack.c.b16 %v554, %v553
      %v567 = vpack.c.b16 %v556, %v555
      %v568 = vpack.c.b16 %v558, %v557
      %v570 = vshrl.u32 %v559, 16
      %v572 = vrot.slane %v570, 7
      %v573 = vshll.u32 %v559, 16
      %v575 = vor.u32 %v572, %v573
      %v577 = vshrl.u32 %v560, 16
      %v579 = vrot.slane %v577, 7
      %v580 = vshll.u32 %v560, 16
      %v582 = vor.u32 %v579, %v580
      %v584 = vshrl.u32 %v561, 16
      %v586 = vrot.slane %v584, 7
      %v587 = vshll.u32 %v561, 16
      %v589 = vor.u32 %v586, %v587
      %v591 = vshrl.u32 %v562, 16
      %v593 = vrot.slane %v591, 7
      %v594 = vshll.u32 %v562, 16
      %v596 = vor.u32 %v593, %v594
      %v598 = vshrl.u32 %v563, 16
      %v600 = vrot.slane %v598, 7
      %v601 = vshll.u32 %v563, 16
      %v603 = vor.u32 %v600, %v601
      %v605 = vshrl.u32 %v564, 16
      %v607 = vrot.slane %v605, 7
      %v608 = vshll.u32 %v564, 16
      %v610 = vor.u32 %v607, %v608
      %v612 = vshrl.u32 %v565, 16
      %v614 = vrot.slane %v612, 7
      %v615 = vshll.u32 %v565, 16
      %v617 = vor.u32 %v614, %v615
      %v619 = vshrl.u32 %v566, 16
      %v621 = vrot.slane %v619, 7
      %v622 = vshll.u32 %v566, 16
      %v624 = vor.u32 %v621, %v622
      %v626 = vshrl.u32 %v567, 16
      %v628 = vrot.slane %v626, 7
      %v629 = vshll.u32 %v567, 16
      %v631 = vor.u32 %v628, %v629
      %v633 = vshrl.u32 %v568, 16
      %v635 = vrot.slane %v633, 7
      %v636 = vshll.u32 %v568, 16
      %v638 = vor.u32 %v635, %v636
      %vm659 = vcmask 1040384
      %vm660 = vsmask.f32 256
      %vm661 = vmand %vm659, %vm660
      %v662 = vsel %vm661, 0, %v575
      %v663 = vsel %vm661, 0, %v582
      %v664 = vsel %vm661, 0, %v589
      %v665 = vsel %vm661, 0, %v596
      %v666 = vsel %vm661, 0, %v603
      %v667 = vsel %vm661, 0, %v610
      %v668 = vsel %vm661, 0, %v617
      %v669 = vsel %vm661, 0, %v624
      %v670 = vsel %vm661, 0, %v631
      %v671 = vsel %vm661, 0, %v638
      %v672 = vsel %vm661, %v572, 0
      %v673 = vsel %vm661, %v579, 0
      %v674 = vsel %vm661, %v586, 0
      %v675 = vsel %vm661, %v593, 0
      %v676 = vsel %vm661, %v600, 0
      %v677 = vsel %vm661, %v607, 0
      %v678 = vsel %vm661, %v614, 0
      %v679 = vsel %vm661, %v621, 0
      %v680 = vsel %vm661, %v628, 0
      %v681 = vsel %vm661, %v635, 0
      %vm682 = vsmask.f32 7424
      %v684 = vshrl.u32 %v662, 16
      %v686 = vshll.u32 %v662, 16
      %v688 = vrot.slane %v686, 1
      %v689 = vor.u32 %v684, %v688
      %v691 = vshll.u32 %v672, 16
      %v693 = vrot.slane %v691, 1
      %v694 = vsel %vm682, %v689, %v693
      %v696 = vshrl.u32 %v663, 16
      %v698 = vshll.u32 %v663, 16
      %v700 = vrot.slane %v698, 1
      %v701 = vor.u32 %v696, %v700
      %v703 = vshll.u32 %v673, 16
      %v705 = vrot.slane %v703, 1
      %v706 = vsel %vm682, %v701, %v705
      %v708 = vshrl.u32 %v664, 16
      %v710 = vshll.u32 %v664, 16
      %v712 = vrot.slane %v710, 1
      %v713 = vor.u32 %v708, %v712
      %v715 = vshll.u32 %v674, 16
      %v717 = vrot.slane %v715, 1
      %v718 = vsel %vm682, %v713, %v717
      %v720 = vshrl.u32 %v665, 16
      %v722 = vshll.u32 %v665, 16
      %v724 = vrot.slane %v722, 1
      %v725 = vor.u32 %v720, %v724
      %v727 = vshll.u32 %v675, 16
      %v729 = vrot.slane %v727, 1
      %v730 = vsel %vm682, %v725, %v729
      %v732 = vshrl.u32 %v666, 16
      %v734 = vshll.u32 %v666, 16
      %v736 = vrot.slane %v734, 1
      %v737 = vor.u32 %v732, %v736
      %v739 = vshll.u32 %v676, 16
      %v741 = vrot.slane %v739, 1
      %v742 = vsel %vm682, %v737, %v741
      %v744 = vshrl.u32 %v667, 16
      %v746 = vshll.u32 %v667, 16
      %v748 = vrot.slane %v746, 1
      %v749 = vor.u32 %v744, %v748
      %v751 = vshll.u32 %v677, 16
      %v753 = vrot.slane %v751, 1
      %v754 = vsel %vm682, %v749, %v753
      %v756 = vshrl.u32 %v668, 16
      %v758 = vshll.u32 %v668, 16
      %v760 = vrot.slane %v758, 1
      %v761 = vor.u32 %v756, %v760
      %v763 = vshll.u32 %v678, 16
      %v765 = vrot.slane %v763, 1
      %v766 = vsel %vm682, %v761, %v765
      %v768 = vshrl.u32 %v669, 16
      %v770 = vshll.u32 %v669, 16
      %v772 = vrot.slane %v770, 1
      %v773 = vor.u32 %v768, %v772
      %v775 = vshll.u32 %v679, 16
      %v777 = vrot.slane %v775, 1
      %v778 = vsel %vm682, %v773, %v777
      %vm803 = vcmask 1046528
      %v804 = vrot.slane %v662, 1
      %v805 = vrot.slane %v672, 1
      %v806 = vsel %vm803, %v804, %v805
      %v807 = vrot.slane %v663, 1
      %v808 = vrot.slane %v673, 1
      %v809 = vsel %vm803, %v807, %v808
      %v810 = vrot.slane %v664, 1
      %v811 = vrot.slane %v674, 1
      %v812 = vsel %vm803, %v810, %v811
      %v813 = vrot.slane %v665, 1
      %v814 = vrot.slane %v675, 1
      %v815 = vsel %vm803, %v813, %v814
      %v816 = vrot.slane %v666, 1
      %v817 = vrot.slane %v676, 1
      %v818 = vsel %vm803, %v816, %v817
      %v819 = vrot.slane %v667, 1
      %v820 = vrot.slane %v677, 1
      %v821 = vsel %vm803, %v819, %v820
      %v822 = vrot.slane %v668, 1
      %v823 = vrot.slane %v678, 1
      %v824 = vsel %vm803, %v822, %v823
      %v825 = vrot.slane %v669, 1
      %v826 = vrot.slane %v679, 1
      %v827 = vsel %vm803, %v825, %v826
      %v837 = vshrl.u32 %v670, 16
      %v839 = vshll.u32 %v670, 16
      %v841 = vrot.slane %v839, 1
      %v842 = vor.u32 %v837, %v841
      %v844 = vshll.u32 %v680, 16
      %v846 = vrot.slane %v844, 1
      %v847 = vsel %vm682, %v842, %v846
      %v851 = vrot.slane %v670, 1
      %v852 = vrot.slane %v680, 1
      %v853 = vsel %vm803, %v851, %v852
      %v856 = vshrl.u32 %v671, 16
      %v858 = vshll.u32 %v671, 16
      %v860 = vrot.slane %v858, 1
      %v861 = vor.u32 %v856, %v860
      %v863 = vshll.u32 %v681, 16
      %v865 = vrot.slane %v863, 1
      %v866 = vsel %vm682, %v861, %v865
      %v870 = vrot.slane %v671, 1
      %v871 = vrot.slane %v681, 1
      %v872 = vsel %vm803, %v870, %v871
      %v874 = vld [vmem:[%s460] sm:$0xf]
      %v875 = vld [vmem:[%s460 + $0x4] sm:$0xf]
      %v876 = vld [vmem:[%s460 + $0x8] sm:$0xf]
      %v877 = vld [vmem:[%s460 + $0xc] sm:$0xf]
      %v878 = vld [vmem:[%s460 + $0x10] sm:$0xf]
      %v879 = vld [vmem:[%s460 + $0x14] sm:$0xf]
      %v880 = vld [vmem:[%s460 + $0x18] sm:$0xf]
      %v881 = vld [vmem:[%s460 + $0x1c] sm:$0xf]
      %v882 = vld [vmem:[%s460 + $0x20] sm:$0xf]
      %v883 = vld [vmem:[%s460 + $0x24] sm:$0xf]
      %v884 = vld [vmem:[%s460 + $0x28] sm:$0xf]
      %v885 = vld [vmem:[%s460 + $0x2c] sm:$0xf]
      %v886 = vld [vmem:[%s460 + $0x30] sm:$0xf]
      %v887 = vld [vmem:[%s460 + $0x34] sm:$0xf]
      %v888 = vld [vmem:[%s460 + $0x38] sm:$0xf]
      %v889 = vld [vmem:[%s460 + $0x3c] sm:$0xf]
      %v890 = vld [vmem:[%s460 + $0x40] sm:$0xf]
      %v891 = vld [vmem:[%s460 + $0x44] sm:$0xf]
      %v892 = vld [vmem:[%s460 + $0x48] sm:$0xf]
      %v893 = vld [vmem:[%s460 + $0x4c] sm:$0xf]
      %v894 = vld [vmem:[%s460 + $0x50] sm:$0xf]
      %v895 = vld [vmem:[%s460 + $0x54] sm:$0xf]
      %v896 = vld [vmem:[%s460 + $0x58] sm:$0xf]
      %v897 = vld [vmem:[%s460 + $0x5c] sm:$0xf]
      %v898 = vld [vmem:[%s460 + $0x60] sm:$0xf]
      %v899 = vld [vmem:[%s460 + $0x64] sm:$0xf]
      %v900 = vld [vmem:[%s460 + $0x68] sm:$0xf]
      %v901 = vld [vmem:[%s460 + $0x6c] sm:$0xf]
      %v902 = vld [vmem:[%s460 + $0x70] sm:$0xf]
      %v903 = vld [vmem:[%s460 + $0x74] sm:$0xf]
      %v904 = vld [vmem:[%s460 + $0x78] sm:$0xf]
      %v905 = vld [vmem:[%s460 + $0x7c] sm:$0xf]
      %v906 = vld [vmem:[%s460 + $0x80] sm:$0xf]
      %v907 = vld [vmem:[%s460 + $0x84] sm:$0xf]
      %v908 = vld [vmem:[%s460 + $0x88] sm:$0xf]
      %v909 = vld [vmem:[%s460 + $0x8c] sm:$0xf]
      %v910 = vld [vmem:[%s460 + $0x90] sm:$0xf]
      %v911 = vld [vmem:[%s460 + $0x94] sm:$0xf]
      %v912 = vld [vmem:[%s460 + $0x98] sm:$0xf]
      %v913 = vld [vmem:[%s460 + $0x9c] sm:$0xf]
      %v914 = vld [vmem:[%s460 + $0xa0] sm:$0xf]
      %v915 = vld [vmem:[%s460 + $0xa4] sm:$0xf]
      %v916 = vld [vmem:[%s460 + $0xa8] sm:$0xf]
      %v917 = vld [vmem:[%s460 + $0xac] sm:$0xf]
      %v918 = vld [vmem:[%s460 + $0xb0] sm:$0xf]
      %v919 = vld [vmem:[%s460 + $0xb4] sm:$0xf]
      %v920 = vld [vmem:[%s460 + $0xb8] sm:$0xf]
      %v921 = vld [vmem:[%s460 + $0xbc] sm:$0xf]
      %v922 = vld [vmem:[%s460 + $0xc0] sm:$0xf]
      %v923 = vld [vmem:[%s460 + $0xc4] sm:$0xf]
      %v924 = vld [vmem:[%s460 + $0xc8] sm:$0xf]
      %v925 = vld [vmem:[%s460 + $0xcc] sm:$0xf]
      %v926 = vld [vmem:[%s460 + $0xd0] sm:$0xf]
      %v927 = vld [vmem:[%s460 + $0xd4] sm:$0xf]
      %v928 = vld [vmem:[%s460 + $0xd8] sm:$0xf]
      %v929 = vld [vmem:[%s460 + $0xdc] sm:$0xf]
      %v930 = vld [vmem:[%s460 + $0xe0] sm:$0xf]
      %v931 = vld [vmem:[%s460 + $0xe4] sm:$0xf]
      %v932 = vld [vmem:[%s460 + $0xe8] sm:$0xf]
      %v933 = vld [vmem:[%s460 + $0xec] sm:$0xf]
      %v934 = vld [vmem:[%s460 + $0xf0] sm:$0xf]
      %v935 = vld [vmem:[%s460 + $0xf4] sm:$0xf]
      %v936 = vld [vmem:[%s460 + $0xf8] sm:$0xf]
      %v937 = vld [vmem:[%s460 + $0xfc] sm:$0xf]
      %v938 = vld [vmem:[%s460 + $0x100] sm:$0xf]
      %v939 = vld [vmem:[%s460 + $0x104] sm:$0xf]
      %v940 = vld [vmem:[%s460 + $0x108] sm:$0xf]
      %v941 = vld [vmem:[%s460 + $0x10c] sm:$0xf]
      %v942 = vld [vmem:[%s460 + $0x110] sm:$0xf]
      %v943 = vld [vmem:[%s460 + $0x114] sm:$0xf]
      %v944 = vld [vmem:[%s460 + $0x118] sm:$0xf]
      %v945 = vld [vmem:[%s460 + $0x11c] sm:$0xf]
      %v946 = vld [vmem:[%s460 + $0x120] sm:$0xf]
      %v947 = vld [vmem:[%s460 + $0x124] sm:$0xf]
      %v948 = vld [vmem:[%s460 + $0x128] sm:$0xf]
      %v949 = vld [vmem:[%s460 + $0x12c] sm:$0xf]
      %v950 = vld [vmem:[%s460 + $0x130] sm:$0xf]
      %v951 = vld [vmem:[%s460 + $0x134] sm:$0xf]
      %v952 = vld [vmem:[%s460 + $0x138] sm:$0xf]
      %v953 = vld [vmem:[%s460 + $0x13c] sm:$0xf]
      %v954 = vld [vmem:[%s460 + $0x140] sm:$0xf]
      %v955 = vld [vmem:[%s460 + $0x144] sm:$0xf]
      %v956 = vld [vmem:[%s460 + $0x148] sm:$0xf]
      %v957 = vld [vmem:[%s460 + $0x14c] sm:$0xf]
      %v958 = vld [vmem:[%s460 + $0x150] sm:$0xf]
      %v959 = vld [vmem:[%s460 + $0x154] sm:$0xf]
      %v960 = vld [vmem:[%s460 + $0x158] sm:$0xf]
      %v961 = vld [vmem:[%s460 + $0x15c] sm:$0xf]
      %v962 = vld [vmem:[%s460 + $0x160] sm:$0xf]
      %v963 = vld [vmem:[%s460 + $0x164] sm:$0xf]
      %v964 = vld [vmem:[%s460 + $0x168] sm:$0xf]
      %v965 = vld [vmem:[%s460 + $0x16c] sm:$0xf]
      %v966 = vld [vmem:[%s460 + $0x170] sm:$0xf]
      %v967 = vld [vmem:[%s460 + $0x174] sm:$0xf]
      %v968 = vld [vmem:[%s460 + $0x178] sm:$0xf]
      %v969 = vld [vmem:[%s460 + $0x17c] sm:$0xf]
      %v970 = vld [vmem:[%s460 + $0x180] sm:$0xf]
      %v971 = vld [vmem:[%s460 + $0x184] sm:$0xf]
      %v972 = vld [vmem:[%s460 + $0x188] sm:$0xf]
      %v973 = vld [vmem:[%s460 + $0x18c] sm:$0xf]
      %v974 = vld [vmem:[%s460 + $0x190] sm:$0xf]
      %v975 = vld [vmem:[%s460 + $0x194] sm:$0xf]
      %v976 = vld [vmem:[%s460 + $0x198] sm:$0xf]
      %v977 = vld [vmem:[%s460 + $0x19c] sm:$0xf]
      %v978 = vld [vmem:[%s460 + $0x1a0] sm:$0xf]
      %v979 = vld [vmem:[%s460 + $0x1a4] sm:$0xf]
      %v980 = vld [vmem:[%s460 + $0x1a8] sm:$0xf]
      %v981 = vld [vmem:[%s460 + $0x1ac] sm:$0xf]
      %v982 = vld [vmem:[%s460 + $0x1b0] sm:$0xf]
      %v983 = vld [vmem:[%s460 + $0x1b4] sm:$0xf]
      %v984 = vld [vmem:[%s460 + $0x1b8] sm:$0xf]
      %v985 = vld [vmem:[%s460 + $0x1bc] sm:$0xf]
      %v986 = vld [vmem:[%s460 + $0x1c0] sm:$0xf]
      %v987 = vld [vmem:[%s460 + $0x1c4] sm:$0xf]
      %v988 = vld [vmem:[%s460 + $0x1c8] sm:$0xf]
      %v989 = vld [vmem:[%s460 + $0x1cc] sm:$0xf]
      %v990 = vld [vmem:[%s460 + $0x1d0] sm:$0xf]
      %v991 = vld [vmem:[%s460 + $0x1d4] sm:$0xf]
      %v992 = vld [vmem:[%s460 + $0x1d8] sm:$0xf]
      %v993 = vld [vmem:[%s460 + $0x1dc] sm:$0xf]
      %v994 = vld [vmem:[%s460 + $0x1e0] sm:$0xf]
      %v995 = vld [vmem:[%s460 + $0x1e4] sm:$0xf]
      %v996 = vld [vmem:[%s460 + $0x1e8] sm:$0xf]
      %v997 = vld [vmem:[%s460 + $0x1ec] sm:$0xf]
      %v998 = vld [vmem:[%s460 + $0x1f0] sm:$0xf]
      %v999 = vld [vmem:[%s460 + $0x1f4] sm:$0xf]
      %v1000 = vld [vmem:[%s460 + $0x1f8] sm:$0xf]
      %v1001 = vld [vmem:[%s460 + $0x1fc] sm:$0xf]
      %v1002 = vld [vmem:[%s460 + $0x200] sm:$0xf]
      %v1003 = vld [vmem:[%s460 + $0x204] sm:$0xf]
      %v1004 = vld [vmem:[%s460 + $0x208] sm:$0xf]
      %v1005 = vld [vmem:[%s460 + $0x20c] sm:$0xf]
      %v1006 = vld [vmem:[%s460 + $0x210] sm:$0xf]
      %v1007 = vld [vmem:[%s460 + $0x214] sm:$0xf]
      %v1008 = vld [vmem:[%s460 + $0x218] sm:$0xf]
      %v1009 = vld [vmem:[%s460 + $0x21c] sm:$0xf]
      %v1010 = vld [vmem:[%s460 + $0x220] sm:$0xf]
      %v1011 = vld [vmem:[%s460 + $0x224] sm:$0xf]
      %v1012 = vld [vmem:[%s460 + $0x228] sm:$0xf]
      %v1013 = vld [vmem:[%s460 + $0x22c] sm:$0xf]
      %v1014 = vld [vmem:[%s460 + $0x230] sm:$0xf]
      %v1015 = vld [vmem:[%s460 + $0x234] sm:$0xf]
      %v1016 = vld [vmem:[%s460 + $0x238] sm:$0xf]
      %v1017 = vld [vmem:[%s460 + $0x23c] sm:$0xf]
      %v1018 = vld [vmem:[%s463] sm:$0x1]
      %v1020 = vperm.slane %v1018, 0
      %v1166 = vunpack.c.l.b16 %v874
      %v1167 = vunpack.c.l.b16 %v875
      %v1168 = vunpack.c.l.b16 %v876
      %v1169 = vunpack.c.l.b16 %v877
      %v1170 = vunpack.c.l.b16 %v878
      %v1171 = vunpack.c.l.b16 %v879
      %v1172 = vunpack.c.l.b16 %v880
      %v1173 = vunpack.c.l.b16 %v881
      %v1174 = vunpack.c.l.b16 %v882
      %v1175 = vunpack.c.l.b16 %v883
      %v1176 = vunpack.c.l.b16 %v884
      %v1177 = vunpack.c.l.b16 %v885
      %v1178 = vunpack.c.l.b16 %v886
      %v1179 = vunpack.c.l.b16 %v887
      %v1180 = vunpack.c.l.b16 %v888
      %v1181 = vunpack.c.l.b16 %v889
      %v1182 = vunpack.c.l.b16 %v890
      %v1183 = vunpack.c.l.b16 %v891
      %v1184 = vunpack.c.l.b16 %v892
      %v1185 = vunpack.c.l.b16 %v893
      %v1186 = vunpack.c.l.b16 %v894
      %v1187 = vunpack.c.l.b16 %v895
      %v1188 = vunpack.c.l.b16 %v896
      %v1189 = vunpack.c.l.b16 %v897
      %v1190 = vunpack.c.l.b16 %v898
      %v1191 = vunpack.c.l.b16 %v899
      %v1192 = vunpack.c.l.b16 %v900
      %v1193 = vunpack.c.l.b16 %v901
      %v1194 = vunpack.c.l.b16 %v902
      %v1195 = vunpack.c.l.b16 %v903
      %v1196 = vunpack.c.l.b16 %v904
      %v1197 = vunpack.c.l.b16 %v905
      %v1198 = vunpack.c.l.b16 %v906
      %v1199 = vunpack.c.l.b16 %v907
      %v1200 = vunpack.c.l.b16 %v908
      %v1201 = vunpack.c.l.b16 %v909
      %v1202 = vunpack.c.l.b16 %v910
      %v1203 = vunpack.c.l.b16 %v911
      %v1204 = vunpack.c.l.b16 %v912
      %v1205 = vunpack.c.l.b16 %v913
      %v1206 = vunpack.c.l.b16 %v914
      %v1207 = vunpack.c.l.b16 %v915
      %v1208 = vunpack.c.l.b16 %v916
      %v1209 = vunpack.c.l.b16 %v917
      %v1210 = vunpack.c.l.b16 %v918
      %v1211 = vunpack.c.l.b16 %v919
      %v1212 = vunpack.c.l.b16 %v920
      %v1213 = vunpack.c.l.b16 %v921
      %v1214 = vunpack.c.l.b16 %v922
      %v1215 = vunpack.c.l.b16 %v923
      %v1216 = vunpack.c.l.b16 %v924
      %v1217 = vunpack.c.l.b16 %v925
      %v1218 = vunpack.c.l.b16 %v926
      %v1219 = vunpack.c.l.b16 %v927
      %v1220 = vunpack.c.l.b16 %v928
      %v1221 = vunpack.c.l.b16 %v929
      %v1222 = vunpack.c.l.b16 %v930
      %v1223 = vunpack.c.l.b16 %v931
      %v1224 = vunpack.c.l.b16 %v932
      %v1225 = vunpack.c.l.b16 %v933
      %v1226 = vunpack.c.l.b16 %v934
      %v1227 = vunpack.c.l.b16 %v935
      %v1228 = vunpack.c.l.b16 %v936
      %v1229 = vunpack.c.l.b16 %v937
      %v1230 = vunpack.c.l.b16 %v938
      %v1231 = vunpack.c.l.b16 %v939
      %v1232 = vunpack.c.l.b16 %v940
      %v1233 = vunpack.c.l.b16 %v941
      %v1234 = vunpack.c.l.b16 %v942
      %v1235 = vunpack.c.l.b16 %v943
      %v1236 = vunpack.c.l.b16 %v944
      %v1237 = vunpack.c.l.b16 %v945
      %v1238 = vunpack.c.l.b16 %v946
      %v1239 = vunpack.c.l.b16 %v947
      %v1240 = vunpack.c.l.b16 %v948
      %v1241 = vunpack.c.l.b16 %v949
      %v1242 = vunpack.c.l.b16 %v950
      %v1243 = vunpack.c.l.b16 %v951
      %v1244 = vunpack.c.l.b16 %v952
      %v1245 = vunpack.c.l.b16 %v953
      %v1246 = vunpack.c.l.b16 %v954
      %v1247 = vunpack.c.l.b16 %v955
      %v1248 = vunpack.c.l.b16 %v956
      %v1249 = vunpack.c.l.b16 %v957
      %v1250 = vunpack.c.l.b16 %v958
      %v1251 = vunpack.c.l.b16 %v959
      %v1252 = vunpack.c.l.b16 %v960
      %v1253 = vunpack.c.l.b16 %v961
      %v1254 = vunpack.c.l.b16 %v962
      %v1255 = vunpack.c.l.b16 %v963
      %v1256 = vunpack.c.l.b16 %v964
      %v1257 = vunpack.c.l.b16 %v965
      %v1258 = vunpack.c.l.b16 %v966
      %v1259 = vunpack.c.l.b16 %v967
      %v1260 = vunpack.c.l.b16 %v968
      %v1261 = vunpack.c.l.b16 %v969
      %v1262 = vunpack.c.l.b16 %v970
      %v1263 = vunpack.c.l.b16 %v971
      %v1264 = vunpack.c.l.b16 %v972
      %v1265 = vunpack.c.l.b16 %v973
      %v1266 = vunpack.c.l.b16 %v974
      %v1267 = vunpack.c.l.b16 %v975
      %v1268 = vunpack.c.l.b16 %v976
      %v1269 = vunpack.c.l.b16 %v977
      %v1270 = vunpack.c.l.b16 %v978
      %v1271 = vunpack.c.l.b16 %v979
      %v1272 = vunpack.c.l.b16 %v980
      %v1273 = vunpack.c.l.b16 %v981
      %v1274 = vunpack.c.l.b16 %v982
      %v1275 = vunpack.c.l.b16 %v983
      %v1276 = vunpack.c.l.b16 %v984
      %v1277 = vunpack.c.l.b16 %v985
      %v1278 = vunpack.c.l.b16 %v986
      %v1279 = vunpack.c.l.b16 %v987
      %v1280 = vunpack.c.l.b16 %v988
      %v1281 = vunpack.c.l.b16 %v989
      %v1282 = vunpack.c.l.b16 %v990
      %v1283 = vunpack.c.l.b16 %v991
      %v1284 = vunpack.c.l.b16 %v992
      %v1285 = vunpack.c.l.b16 %v993
      %v1286 = vunpack.c.l.b16 %v994
      %v1287 = vunpack.c.l.b16 %v995
      %v1288 = vunpack.c.l.b16 %v996
      %v1289 = vunpack.c.l.b16 %v997
      %v1290 = vunpack.c.l.b16 %v998
      %v1291 = vunpack.c.l.b16 %v999
      %v1292 = vunpack.c.l.b16 %v1000
      %v1293 = vunpack.c.l.b16 %v1001
      %v1294 = vunpack.c.l.b16 %v1002
      %v1295 = vunpack.c.l.b16 %v1003
      %v1296 = vunpack.c.l.b16 %v1004
      %v1297 = vunpack.c.l.b16 %v1005
      %v1298 = vunpack.c.l.b16 %v1006
      %v1299 = vunpack.c.l.b16 %v1007
      %v1300 = vunpack.c.l.b16 %v1008
      %v1301 = vunpack.c.l.b16 %v1009
      %v1302 = vunpack.c.l.b16 %v1010
      %v1303 = vunpack.c.l.b16 %v1011
      %v1304 = vunpack.c.l.b16 %v1012
      %v1305 = vunpack.c.l.b16 %v1013
      %v1306 = vunpack.c.l.b16 %v1014
      %v1307 = vunpack.c.l.b16 %v1015
      %v1308 = vunpack.c.l.b16 %v1016
      %v1309 = vunpack.c.l.b16 %v1017
      %v1310 = vpack.c.b16 %v1167, %v1166
      %v1311 = vpack.c.b16 %v1169, %v1168
      %v1312 = vpack.c.b16 %v1171, %v1170
      %v1313 = vpack.c.b16 %v1173, %v1172
      %v1314 = vpack.c.b16 %v1175, %v1174
      %v1315 = vpack.c.b16 %v1177, %v1176
      %v1316 = vpack.c.b16 %v1179, %v1178
      %v1317 = vpack.c.b16 %v1181, %v1180
      %v1318 = vpack.c.b16 %v1183, %v1182
      %v1319 = vpack.c.b16 %v1185, %v1184
      %v1320 = vpack.c.b16 %v1187, %v1186
      %v1321 = vpack.c.b16 %v1189, %v1188
      %v1322 = vpack.c.b16 %v1191, %v1190
      %v1323 = vpack.c.b16 %v1193, %v1192
      %v1324 = vpack.c.b16 %v1195, %v1194
      %v1325 = vpack.c.b16 %v1197, %v1196
      %v1326 = vpack.c.b16 %v1199, %v1198
      %v1327 = vpack.c.b16 %v1201, %v1200
      %v1328 = vpack.c.b16 %v1203, %v1202
      %v1329 = vpack.c.b16 %v1205, %v1204
      %v1330 = vpack.c.b16 %v1207, %v1206
      %v1331 = vpack.c.b16 %v1209, %v1208
      %v1332 = vpack.c.b16 %v1211, %v1210
      %v1333 = vpack.c.b16 %v1213, %v1212
      %v1334 = vpack.c.b16 %v1215, %v1214
      %v1335 = vpack.c.b16 %v1217, %v1216
      %v1336 = vpack.c.b16 %v1219, %v1218
      %v1337 = vpack.c.b16 %v1221, %v1220
      %v1338 = vpack.c.b16 %v1223, %v1222
      %v1339 = vpack.c.b16 %v1225, %v1224
      %v1340 = vpack.c.b16 %v1227, %v1226
      %v1341 = vpack.c.b16 %v1229, %v1228
      %v1342 = vpack.c.b16 %v1231, %v1230
      %v1343 = vpack.c.b16 %v1233, %v1232
      %v1344 = vpack.c.b16 %v1235, %v1234
      %v1345 = vpack.c.b16 %v1237, %v1236
      %v1346 = vpack.c.b16 %v1239, %v1238
      %v1347 = vpack.c.b16 %v1241, %v1240
      %v1348 = vpack.c.b16 %v1243, %v1242
      %v1349 = vpack.c.b16 %v1245, %v1244
      %v1350 = vpack.c.b16 %v1247, %v1246
      %v1351 = vpack.c.b16 %v1249, %v1248
      %v1352 = vpack.c.b16 %v1251, %v1250
      %v1353 = vpack.c.b16 %v1253, %v1252
      %v1354 = vpack.c.b16 %v1255, %v1254
      %v1355 = vpack.c.b16 %v1257, %v1256
      %v1356 = vpack.c.b16 %v1259, %v1258
      %v1357 = vpack.c.b16 %v1261, %v1260
      %v1358 = vpack.c.b16 %v1263, %v1262
      %v1359 = vpack.c.b16 %v1265, %v1264
      %v1360 = vpack.c.b16 %v1267, %v1266
      %v1361 = vpack.c.b16 %v1269, %v1268
      %v1362 = vpack.c.b16 %v1271, %v1270
      %v1363 = vpack.c.b16 %v1273, %v1272
      %v1364 = vpack.c.b16 %v1275, %v1274
      %v1365 = vpack.c.b16 %v1277, %v1276
      %v1366 = vpack.c.b16 %v1279, %v1278
      %v1367 = vpack.c.b16 %v1281, %v1280
      %v1368 = vpack.c.b16 %v1283, %v1282
      %v1369 = vpack.c.b16 %v1285, %v1284
      %v1370 = vpack.c.b16 %v1287, %v1286
      %v1371 = vpack.c.b16 %v1289, %v1288
      %v1372 = vpack.c.b16 %v1291, %v1290
      %v1373 = vpack.c.b16 %v1293, %v1292
      %v1374 = vpack.c.b16 %v1295, %v1294
      %v1375 = vpack.c.b16 %v1297, %v1296
      %v1376 = vpack.c.b16 %v1299, %v1298
      %v1377 = vpack.c.b16 %v1301, %v1300
      %v1378 = vpack.c.b16 %v1303, %v1302
      %v1379 = vpack.c.b16 %v1305, %v1304
      %v1380 = vpack.c.b16 %v1307, %v1306
      %v1381 = vpack.c.b16 %v1309, %v1308
      %1454 = vmatpush.bf16.msra.mxu0 %v1317
      %1455 = vmatpush.bf16.msra.mxu0 %v1316
      %1456 = vmatpush.bf16.msra.mxu0 %v1315
      %1457 = vmatpush.bf16.msra.mxu0 %v1314
      %1458 = vmatpush.bf16.msra.mxu0 %v1313
      %1459 = vmatpush.bf16.msra.mxu0 %v1312
      %1460 = vmatpush.bf16.msra.mxu0 %v1311
      %1461 = vmatpush.bf16.msra.mxu0 %v1310
      %1462 = vmatmul.bf16.gmra.mxu0 %v662
      %v1463 = vpop.f32.mrf.mxu0
      %v1464 = vadd.f32 %v1020, %v1463
      %v1465 = vpop.f32.mrf.mxu0
      %v1466 = vadd.f32 %v1020, %v1465
      %1467 = vmatmul.bf16.gmra.mxu0 %v663
      %v1468 = vpop.f32.mrf.mxu0
      %v1469 = vadd.f32 %v1020, %v1468
      %v1470 = vpop.f32.mrf.mxu0
      %v1471 = vadd.f32 %v1020, %v1470
      %1472 = vmatmul.bf16.gmra.mxu0 %v664
      %v1473 = vpop.f32.mrf.mxu0
      %v1474 = vadd.f32 %v1020, %v1473
      %v1475 = vpop.f32.mrf.mxu0
      %v1476 = vadd.f32 %v1020, %v1475
      %1477 = vmatmul.bf16.gmra.mxu0 %v665
      %v1478 = vpop.f32.mrf.mxu0
      %v1479 = vadd.f32 %v1020, %v1478
      %v1480 = vpop.f32.mrf.mxu0
      %v1481 = vadd.f32 %v1020, %v1480
      %1482 = vmatmul.bf16.gmra.mxu0 %v666
      %v1483 = vpop.f32.mrf.mxu0
      %v1484 = vadd.f32 %v1020, %v1483
      %v1485 = vpop.f32.mrf.mxu0
      %v1486 = vadd.f32 %v1020, %v1485
      %1487 = vmatmul.bf16.gmra.mxu0 %v667
      %v1488 = vpop.f32.mrf.mxu0
      %v1489 = vadd.f32 %v1020, %v1488
      %v1490 = vpop.f32.mrf.mxu0
      %v1491 = vadd.f32 %v1020, %v1490
      %1492 = vmatmul.bf16.gmra.mxu0 %v668
      %v1493 = vpop.f32.mrf.mxu0
      %v1494 = vadd.f32 %v1020, %v1493
      %v1495 = vpop.f32.mrf.mxu0
      %v1496 = vadd.f32 %v1020, %v1495
      %1497 = vmatmul.bf16.gmra.mxu0 %v669
      %v1498 = vpop.f32.mrf.mxu0
      %v1499 = vadd.f32 %v1020, %v1498
      %v1500 = vpop.f32.mrf.mxu0
      %v1501 = vadd.f32 %v1020, %v1500
      %1502 = vdwg.mxu0
      %1503 = vmatpush.bf16.msra.mxu0 %v1325
      %1504 = vmatpush.bf16.msra.mxu0 %v1324
      %1505 = vmatpush.bf16.msra.mxu0 %v1323
      %1506 = vmatpush.bf16.msra.mxu0 %v1322
      %1507 = vmatpush.bf16.msra.mxu0 %v1321
      %1508 = vmatpush.bf16.msra.mxu0 %v1320
      %1509 = vmatpush.bf16.msra.mxu0 %v1319
      %1510 = vmatpush.bf16.msra.mxu0 %v1318
      %1511 = vmatmul.bf16.gmra.mxu0 %v694
      %v1512 = vpop.f32.mrf.mxu0
      %v1513 = vadd.f32 %v1464, %v1512
      %v1514 = vpop.f32.mrf.mxu0
      %v1515 = vadd.f32 %v1466, %v1514
      %1516 = vmatmul.bf16.gmra.mxu0 %v706
      %v1517 = vpop.f32.mrf.mxu0
      %v1518 = vadd.f32 %v1469, %v1517
      %v1519 = vpop.f32.mrf.mxu0
      %v1520 = vadd.f32 %v1471, %v1519
      %1521 = vmatmul.bf16.gmra.mxu0 %v718
      %v1522 = vpop.f32.mrf.mxu0
      %v1523 = vadd.f32 %v1474, %v1522
      %v1524 = vpop.f32.mrf.mxu0
      %v1525 = vadd.f32 %v1476, %v1524
      %1526 = vmatmul.bf16.gmra.mxu0 %v730
      %v1527 = vpop.f32.mrf.mxu0
      %v1528 = vadd.f32 %v1479, %v1527
      %v1529 = vpop.f32.mrf.mxu0
      %v1530 = vadd.f32 %v1481, %v1529
      %1531 = vmatmul.bf16.gmra.mxu0 %v742
      %v1532 = vpop.f32.mrf.mxu0
      %v1533 = vadd.f32 %v1484, %v1532
      %v1534 = vpop.f32.mrf.mxu0
      %v1535 = vadd.f32 %v1486, %v1534
      %1536 = vmatmul.bf16.gmra.mxu0 %v754
      %v1537 = vpop.f32.mrf.mxu0
      %v1538 = vadd.f32 %v1489, %v1537
      %v1539 = vpop.f32.mrf.mxu0
      %v1540 = vadd.f32 %v1491, %v1539
      %1541 = vmatmul.bf16.gmra.mxu0 %v766
      %v1542 = vpop.f32.mrf.mxu0
      %v1543 = vadd.f32 %v1494, %v1542
      %v1544 = vpop.f32.mrf.mxu0
      %v1545 = vadd.f32 %v1496, %v1544
      %1546 = vmatmul.bf16.gmra.mxu0 %v778
      %v1547 = vpop.f32.mrf.mxu0
      %v1548 = vadd.f32 %v1499, %v1547
      %v1549 = vpop.f32.mrf.mxu0
      %v1550 = vadd.f32 %v1501, %v1549
      %1551 = vdwg.mxu0
      %1552 = vmatpush.bf16.msra.mxu0 %v1333
      %1553 = vmatpush.bf16.msra.mxu0 %v1332
      %1554 = vmatpush.bf16.msra.mxu0 %v1331
      %1555 = vmatpush.bf16.msra.mxu0 %v1330
      %1556 = vmatpush.bf16.msra.mxu0 %v1329
      %1557 = vmatpush.bf16.msra.mxu0 %v1328
      %1558 = vmatpush.bf16.msra.mxu0 %v1327
      %1559 = vmatpush.bf16.msra.mxu0 %v1326
      %1560 = vmatmul.bf16.gmra.mxu0 %v806
      %v1561 = vpop.f32.mrf.mxu0
      %v1562 = vadd.f32 %v1513, %v1561
      %v1563 = vpop.f32.mrf.mxu0
      %v1564 = vadd.f32 %v1515, %v1563
      %1565 = vmatmul.bf16.gmra.mxu0 %v809
      %v1566 = vpop.f32.mrf.mxu0
      %v1567 = vadd.f32 %v1518, %v1566
      %v1568 = vpop.f32.mrf.mxu0
      %v1569 = vadd.f32 %v1520, %v1568
      %1570 = vmatmul.bf16.gmra.mxu0 %v812
      %v1571 = vpop.f32.mrf.mxu0
      %v1572 = vadd.f32 %v1523, %v1571
      %v1573 = vpop.f32.mrf.mxu0
      %v1574 = vadd.f32 %v1525, %v1573
      %1575 = vmatmul.bf16.gmra.mxu0 %v815
      %v1576 = vpop.f32.mrf.mxu0
      %v1577 = vadd.f32 %v1528, %v1576
      %v1578 = vpop.f32.mrf.mxu0
      %v1579 = vadd.f32 %v1530, %v1578
      %1580 = vmatmul.bf16.gmra.mxu0 %v818
      %v1581 = vpop.f32.mrf.mxu0
      %v1582 = vadd.f32 %v1533, %v1581
      %v1583 = vpop.f32.mrf.mxu0
      %v1584 = vadd.f32 %v1535, %v1583
      %1585 = vmatmul.bf16.gmra.mxu0 %v821
      %v1586 = vpop.f32.mrf.mxu0
      %v1587 = vadd.f32 %v1538, %v1586
      %v1588 = vpop.f32.mrf.mxu0
      %v1589 = vadd.f32 %v1540, %v1588
      %1590 = vmatmul.bf16.gmra.mxu0 %v824
      %v1591 = vpop.f32.mrf.mxu0
      %v1592 = vadd.f32 %v1543, %v1591
      %v1593 = vpop.f32.mrf.mxu0
      %v1594 = vadd.f32 %v1545, %v1593
      %1595 = vmatmul.bf16.gmra.mxu0 %v827
      %v1596 = vpop.f32.mrf.mxu0
      %v1597 = vadd.f32 %v1548, %v1596
      %v1598 = vpop.f32.mrf.mxu0
      %v1599 = vadd.f32 %v1550, %v1598
      %1600 = vdwg.mxu0
      %1601 = vmatpush.bf16.msra.mxu0 %v1341
      %1602 = vmatpush.bf16.msra.mxu0 %v1340
      %1603 = vmatpush.bf16.msra.mxu0 %v1339
      %1604 = vmatpush.bf16.msra.mxu0 %v1338
      %1605 = vmatpush.bf16.msra.mxu0 %v1337
      %1606 = vmatpush.bf16.msra.mxu0 %v1336
      %1607 = vmatpush.bf16.msra.mxu0 %v1335
      %1608 = vmatpush.bf16.msra.mxu0 %v1334
      %1609 = vmatmul.bf16.gmra.mxu0 %v663
      %v1610 = vpop.f32.mrf.mxu0
      %v1611 = vadd.f32 %v1562, %v1610
      %v1612 = vpop.f32.mrf.mxu0
      %v1613 = vadd.f32 %v1564, %v1612
      %1614 = vmatmul.bf16.gmra.mxu0 %v664
      %v1615 = vpop.f32.mrf.mxu0
      %v1616 = vadd.f32 %v1567, %v1615
      %v1617 = vpop.f32.mrf.mxu0
      %v1618 = vadd.f32 %v1569, %v1617
      %1619 = vmatmul.bf16.gmra.mxu0 %v665
      %v1620 = vpop.f32.mrf.mxu0
      %v1621 = vadd.f32 %v1572, %v1620
      %v1622 = vpop.f32.mrf.mxu0
      %v1623 = vadd.f32 %v1574, %v1622
      %1624 = vmatmul.bf16.gmra.mxu0 %v666
      %v1625 = vpop.f32.mrf.mxu0
      %v1626 = vadd.f32 %v1577, %v1625
      %v1627 = vpop.f32.mrf.mxu0
      %v1628 = vadd.f32 %v1579, %v1627
      %1629 = vmatmul.bf16.gmra.mxu0 %v667
      %v1630 = vpop.f32.mrf.mxu0
      %v1631 = vadd.f32 %v1582, %v1630
      %v1632 = vpop.f32.mrf.mxu0
      %v1633 = vadd.f32 %v1584, %v1632
      %1634 = vmatmul.bf16.gmra.mxu0 %v668
      %v1635 = vpop.f32.mrf.mxu0
      %v1636 = vadd.f32 %v1587, %v1635
      %v1637 = vpop.f32.mrf.mxu0
      %v1638 = vadd.f32 %v1589, %v1637
      %1639 = vmatmul.bf16.gmra.mxu0 %v669
      %v1640 = vpop.f32.mrf.mxu0
      %v1641 = vadd.f32 %v1592, %v1640
      %v1642 = vpop.f32.mrf.mxu0
      %v1643 = vadd.f32 %v1594, %v1642
      %1644 = vmatmul.bf16.gmra.mxu0 %v670
      %v1645 = vpop.f32.mrf.mxu0
      %v1646 = vadd.f32 %v1597, %v1645
      %v1647 = vpop.f32.mrf.mxu0
      %v1648 = vadd.f32 %v1599, %v1647
      %1649 = vdwg.mxu0
      %1650 = vmatpush.bf16.msra.mxu0 %v1349
      %1651 = vmatpush.bf16.msra.mxu0 %v1348
      %1652 = vmatpush.bf16.msra.mxu0 %v1347
      %1653 = vmatpush.bf16.msra.mxu0 %v1346
      %1654 = vmatpush.bf16.msra.mxu0 %v1345
      %1655 = vmatpush.bf16.msra.mxu0 %v1344
      %1656 = vmatpush.bf16.msra.mxu0 %v1343
      %1657 = vmatpush.bf16.msra.mxu0 %v1342
      %1658 = vmatmul.bf16.gmra.mxu0 %v706
      %v1659 = vpop.f32.mrf.mxu0
      %v1660 = vadd.f32 %v1611, %v1659
      %v1661 = vpop.f32.mrf.mxu0
      %v1662 = vadd.f32 %v1613, %v1661
      %1663 = vmatmul.bf16.gmra.mxu0 %v718
      %v1664 = vpop.f32.mrf.mxu0
      %v1665 = vadd.f32 %v1616, %v1664
      %v1666 = vpop.f32.mrf.mxu0
      %v1667 = vadd.f32 %v1618, %v1666
      %1668 = vmatmul.bf16.gmra.mxu0 %v730
      %v1669 = vpop.f32.mrf.mxu0
      %v1670 = vadd.f32 %v1621, %v1669
      %v1671 = vpop.f32.mrf.mxu0
      %v1672 = vadd.f32 %v1623, %v1671
      %1673 = vmatmul.bf16.gmra.mxu0 %v742
      %v1674 = vpop.f32.mrf.mxu0
      %v1675 = vadd.f32 %v1626, %v1674
      %v1676 = vpop.f32.mrf.mxu0
      %v1677 = vadd.f32 %v1628, %v1676
      %1678 = vmatmul.bf16.gmra.mxu0 %v754
      %v1679 = vpop.f32.mrf.mxu0
      %v1680 = vadd.f32 %v1631, %v1679
      %v1681 = vpop.f32.mrf.mxu0
      %v1682 = vadd.f32 %v1633, %v1681
      %1683 = vmatmul.bf16.gmra.mxu0 %v766
      %v1684 = vpop.f32.mrf.mxu0
      %v1685 = vadd.f32 %v1636, %v1684
      %v1686 = vpop.f32.mrf.mxu0
      %v1687 = vadd.f32 %v1638, %v1686
      %1688 = vmatmul.bf16.gmra.mxu0 %v778
      %v1689 = vpop.f32.mrf.mxu0
      %v1690 = vadd.f32 %v1641, %v1689
      %v1691 = vpop.f32.mrf.mxu0
      %v1692 = vadd.f32 %v1643, %v1691
      %1693 = vmatmul.bf16.gmra.mxu0 %v847
      %v1694 = vpop.f32.mrf.mxu0
      %v1695 = vadd.f32 %v1646, %v1694
      %v1696 = vpop.f32.mrf.mxu0
      %v1697 = vadd.f32 %v1648, %v1696
      %1698 = vdwg.mxu0
      %1699 = vmatpush.bf16.msra.mxu0 %v1357
      %1700 = vmatpush.bf16.msra.mxu0 %v1356
      %1701 = vmatpush.bf16.msra.mxu0 %v1355
      %1702 = vmatpush.bf16.msra.mxu0 %v1354
      %1703 = vmatpush.bf16.msra.mxu0 %v1353
      %1704 = vmatpush.bf16.msra.mxu0 %v1352
      %1705 = vmatpush.bf16.msra.mxu0 %v1351
      %1706 = vmatpush.bf16.msra.mxu0 %v1350
      %1707 = vmatmul.bf16.gmra.mxu0 %v809
      %v1708 = vpop.f32.mrf.mxu0
      %v1709 = vadd.f32 %v1660, %v1708
      %v1710 = vpop.f32.mrf.mxu0
      %v1711 = vadd.f32 %v1662, %v1710
      %1712 = vmatmul.bf16.gmra.mxu0 %v812
      %v1713 = vpop.f32.mrf.mxu0
      %v1714 = vadd.f32 %v1665, %v1713
      %v1715 = vpop.f32.mrf.mxu0
      %v1716 = vadd.f32 %v1667, %v1715
      %1717 = vmatmul.bf16.gmra.mxu0 %v815
      %v1718 = vpop.f32.mrf.mxu0
      %v1719 = vadd.f32 %v1670, %v1718
      %v1720 = vpop.f32.mrf.mxu0
      %v1721 = vadd.f32 %v1672, %v1720
      %1722 = vmatmul.bf16.gmra.mxu0 %v818
      %v1723 = vpop.f32.mrf.mxu0
      %v1724 = vadd.f32 %v1675, %v1723
      %v1725 = vpop.f32.mrf.mxu0
      %v1726 = vadd.f32 %v1677, %v1725
      %1727 = vmatmul.bf16.gmra.mxu0 %v821
      %v1728 = vpop.f32.mrf.mxu0
      %v1729 = vadd.f32 %v1680, %v1728
      %v1730 = vpop.f32.mrf.mxu0
      %v1731 = vadd.f32 %v1682, %v1730
      %1732 = vmatmul.bf16.gmra.mxu0 %v824
      %v1733 = vpop.f32.mrf.mxu0
      %v1734 = vadd.f32 %v1685, %v1733
      %v1735 = vpop.f32.mrf.mxu0
      %v1736 = vadd.f32 %v1687, %v1735
      %1737 = vmatmul.bf16.gmra.mxu0 %v827
      %v1738 = vpop.f32.mrf.mxu0
      %v1739 = vadd.f32 %v1690, %v1738
      %v1740 = vpop.f32.mrf.mxu0
      %v1741 = vadd.f32 %v1692, %v1740
      %1742 = vmatmul.bf16.gmra.mxu0 %v853
      %v1743 = vpop.f32.mrf.mxu0
      %v1744 = vadd.f32 %v1695, %v1743
      %v1745 = vpop.f32.mrf.mxu0
      %v1746 = vadd.f32 %v1697, %v1745
      %1747 = vdwg.mxu0
      %1748 = vmatpush.bf16.msra.mxu0 %v1365
      %1749 = vmatpush.bf16.msra.mxu0 %v1364
      %1750 = vmatpush.bf16.msra.mxu0 %v1363
      %1751 = vmatpush.bf16.msra.mxu0 %v1362
      %1752 = vmatpush.bf16.msra.mxu0 %v1361
      %1753 = vmatpush.bf16.msra.mxu0 %v1360
      %1754 = vmatpush.bf16.msra.mxu0 %v1359
      %1755 = vmatpush.bf16.msra.mxu0 %v1358
      %1756 = vmatmul.bf16.gmra.mxu0 %v664
      %v1757 = vpop.f32.mrf.mxu0
      %v1758 = vadd.f32 %v1709, %v1757
      %v1759 = vpop.f32.mrf.mxu0
      %v1760 = vadd.f32 %v1711, %v1759
      %1761 = vmatmul.bf16.gmra.mxu0 %v665
      %v1762 = vpop.f32.mrf.mxu0
      %v1763 = vadd.f32 %v1714, %v1762
      %v1764 = vpop.f32.mrf.mxu0
      %v1765 = vadd.f32 %v1716, %v1764
      %1766 = vmatmul.bf16.gmra.mxu0 %v666
      %v1767 = vpop.f32.mrf.mxu0
      %v1768 = vadd.f32 %v1719, %v1767
      %v1769 = vpop.f32.mrf.mxu0
      %v1770 = vadd.f32 %v1721, %v1769
      %1771 = vmatmul.bf16.gmra.mxu0 %v667
      %v1772 = vpop.f32.mrf.mxu0
      %v1773 = vadd.f32 %v1724, %v1772
      %v1774 = vpop.f32.mrf.mxu0
      %v1775 = vadd.f32 %v1726, %v1774
      %1776 = vmatmul.bf16.gmra.mxu0 %v668
      %v1777 = vpop.f32.mrf.mxu0
      %v1778 = vadd.f32 %v1729, %v1777
      %v1779 = vpop.f32.mrf.mxu0
      %v1780 = vadd.f32 %v1731, %v1779
      %1781 = vmatmul.bf16.gmra.mxu0 %v669
      %v1782 = vpop.f32.mrf.mxu0
      %v1783 = vadd.f32 %v1734, %v1782
      %v1784 = vpop.f32.mrf.mxu0
      %v1785 = vadd.f32 %v1736, %v1784
      %1786 = vmatmul.bf16.gmra.mxu0 %v670
      %v1787 = vpop.f32.mrf.mxu0
      %v1788 = vadd.f32 %v1739, %v1787
      %v1789 = vpop.f32.mrf.mxu0
      %v1790 = vadd.f32 %v1741, %v1789
      %1791 = vmatmul.bf16.gmra.mxu0 %v671
      %v1792 = vpop.f32.mrf.mxu0
      %v1793 = vadd.f32 %v1744, %v1792
      %v1794 = vpop.f32.mrf.mxu0
      %v1795 = vadd.f32 %v1746, %v1794
      %1796 = vdwg.mxu0
      %1797 = vmatpush.bf16.msra.mxu0 %v1373
      %1798 = vmatpush.bf16.msra.mxu0 %v1372
      %1799 = vmatpush.bf16.msra.mxu0 %v1371
      %1800 = vmatpush.bf16.msra.mxu0 %v1370
      %1801 = vmatpush.bf16.msra.mxu0 %v1369
      %1802 = vmatpush.bf16.msra.mxu0 %v1368
      %1803 = vmatpush.bf16.msra.mxu0 %v1367
      %1804 = vmatpush.bf16.msra.mxu0 %v1366
      %1805 = vmatmul.bf16.gmra.mxu0 %v718
      %v1806 = vpop.f32.mrf.mxu0
      %v1807 = vadd.f32 %v1758, %v1806
      %v1808 = vpop.f32.mrf.mxu0
      %v1809 = vadd.f32 %v1760, %v1808
      %1810 = vmatmul.bf16.gmra.mxu0 %v730
      %v1811 = vpop.f32.mrf.mxu0
      %v1812 = vadd.f32 %v1763, %v1811
      %v1813 = vpop.f32.mrf.mxu0
      %v1814 = vadd.f32 %v1765, %v1813
      %1815 = vmatmul.bf16.gmra.mxu0 %v742
      %v1816 = vpop.f32.mrf.mxu0
      %v1817 = vadd.f32 %v1768, %v1816
      %v1818 = vpop.f32.mrf.mxu0
      %v1819 = vadd.f32 %v1770, %v1818
      %1820 = vmatmul.bf16.gmra.mxu0 %v754
      %v1821 = vpop.f32.mrf.mxu0
      %v1822 = vadd.f32 %v1773, %v1821
      %v1823 = vpop.f32.mrf.mxu0
      %v1824 = vadd.f32 %v1775, %v1823
      %1825 = vmatmul.bf16.gmra.mxu0 %v766
      %v1826 = vpop.f32.mrf.mxu0
      %v1827 = vadd.f32 %v1778, %v1826
      %v1828 = vpop.f32.mrf.mxu0
      %v1829 = vadd.f32 %v1780, %v1828
      %1830 = vmatmul.bf16.gmra.mxu0 %v778
      %v1831 = vpop.f32.mrf.mxu0
      %v1832 = vadd.f32 %v1783, %v1831
      %v1833 = vpop.f32.mrf.mxu0
      %v1834 = vadd.f32 %v1785, %v1833
      %1835 = vmatmul.bf16.gmra.mxu0 %v847
      %v1836 = vpop.f32.mrf.mxu0
      %v1837 = vadd.f32 %v1788, %v1836
      %v1838 = vpop.f32.mrf.mxu0
      %v1839 = vadd.f32 %v1790, %v1838
      %1840 = vmatmul.bf16.gmra.mxu0 %v866
      %v1841 = vpop.f32.mrf.mxu0
      %v1842 = vadd.f32 %v1793, %v1841
      %v1843 = vpop.f32.mrf.mxu0
      %v1844 = vadd.f32 %v1795, %v1843
      %1845 = vdwg.mxu0
      %1846 = vmatpush.bf16.msra.mxu0 %v1381
      %1847 = vmatpush.bf16.msra.mxu0 %v1380
      %1848 = vmatpush.bf16.msra.mxu0 %v1379
      %1849 = vmatpush.bf16.msra.mxu0 %v1378
      %1850 = vmatpush.bf16.msra.mxu0 %v1377
      %1851 = vmatpush.bf16.msra.mxu0 %v1376
      %1852 = vmatpush.bf16.msra.mxu0 %v1375
      %1853 = vmatpush.bf16.msra.mxu0 %v1374
      %1854 = vmatmul.bf16.gmra.mxu0 %v812
      %v1855 = vpop.f32.mrf.mxu0
      %v1856 = vadd.f32 %v1807, %v1855
      %v1857 = vpop.f32.mrf.mxu0
      %v1858 = vadd.f32 %v1809, %v1857
      %1859 = vmatmul.bf16.gmra.mxu0 %v815
      %v1860 = vpop.f32.mrf.mxu0
      %v1861 = vadd.f32 %v1812, %v1860
      %v1862 = vpop.f32.mrf.mxu0
      %v1863 = vadd.f32 %v1814, %v1862
      %1864 = vmatmul.bf16.gmra.mxu0 %v818
      %v1865 = vpop.f32.mrf.mxu0
      %v1866 = vadd.f32 %v1817, %v1865
      %v1867 = vpop.f32.mrf.mxu0
      %v1868 = vadd.f32 %v1819, %v1867
      %1869 = vmatmul.bf16.gmra.mxu0 %v821
      %v1870 = vpop.f32.mrf.mxu0
      %v1871 = vadd.f32 %v1822, %v1870
      %v1872 = vpop.f32.mrf.mxu0
      %v1873 = vadd.f32 %v1824, %v1872
      %1874 = vmatmul.bf16.gmra.mxu0 %v824
      %v1875 = vpop.f32.mrf.mxu0
      %v1876 = vadd.f32 %v1827, %v1875
      %v1877 = vpop.f32.mrf.mxu0
      %v1878 = vadd.f32 %v1829, %v1877
      %1879 = vmatmul.bf16.gmra.mxu0 %v827
      %v1880 = vpop.f32.mrf.mxu0
      %v1881 = vadd.f32 %v1832, %v1880
      %v1882 = vpop.f32.mrf.mxu0
      %v1883 = vadd.f32 %v1834, %v1882
      %1884 = vmatmul.bf16.gmra.mxu0 %v853
      %v1885 = vpop.f32.mrf.mxu0
      %v1886 = vadd.f32 %v1837, %v1885
      %v1887 = vpop.f32.mrf.mxu0
      %v1888 = vadd.f32 %v1839, %v1887
      %1889 = vmatmul.bf16.gmra.mxu0 %v872
      %v1890 = vpop.f32.mrf.mxu0
      %v1891 = vadd.f32 %v1842, %v1890
      %v1892 = vpop.f32.mrf.mxu0
      %v1893 = vadd.f32 %v1844, %v1892
      %1894 = vdwg.mxu0
      %v1895 = vpack.c.bf16 %v1856, %v1856
      %v1896 = vpack.c.bf16 %v1858, %v1858
      %v1897 = vpack.c.bf16 %v1861, %v1861
      %v1898 = vpack.c.bf16 %v1863, %v1863
      %v1899 = vpack.c.bf16 %v1866, %v1866
      %v1900 = vpack.c.bf16 %v1868, %v1868
      %v1901 = vpack.c.bf16 %v1871, %v1871
      %v1902 = vpack.c.bf16 %v1873, %v1873
      %v1903 = vpack.c.bf16 %v1876, %v1876
      %v1904 = vpack.c.bf16 %v1878, %v1878
      %v1905 = vpack.c.bf16 %v1881, %v1881
      %v1906 = vpack.c.bf16 %v1883, %v1883
      %v1907 = vpack.c.bf16 %v1886, %v1886
      %v1908 = vpack.c.bf16 %v1888, %v1888
      %v1909 = vpack.c.bf16 %v1891, %v1891
      %v1910 = vpack.c.bf16 %v1893, %v1893
      %1911 = vst [vmem:[%s476] sm:$0xf] %v1895
      %1912 = vst [vmem:[%s476 + $0x4] sm:$0xf] %v1896
      %1913 = vst [vmem:[%s476 + $0x8] sm:$0xf] %v1897
      %1914 = vst [vmem:[%s476 + $0xc] sm:$0xf] %v1898
      %1915 = vst [vmem:[%s476 + $0x10] sm:$0xf] %v1899
      %1916 = vst [vmem:[%s476 + $0x14] sm:$0xf] %v1900
      %1917 = vst [vmem:[%s476 + $0x18] sm:$0xf] %v1901
      %1918 = vst [vmem:[%s476 + $0x1c] sm:$0xf] %v1902
      %1919 = vst [vmem:[%s476 + $0x20] sm:$0xf] %v1903
      %1920 = vst [vmem:[%s476 + $0x24] sm:$0xf] %v1904
      %1921 = vst [vmem:[%s476 + $0x28] sm:$0xf] %v1905
      %1922 = vst [vmem:[%s476 + $0x2c] sm:$0xf] %v1906
      %1923 = vst [vmem:[%s476 + $0x30] sm:$0xf] %v1907
      %1924 = vst [vmem:[%s476 + $0x34] sm:$0xf] %v1908
      %1925 = vst [vmem:[%s476 + $0x38] sm:$0xf] %v1909
      %1926 = vst [vmem:[%s476 + $0x3c] sm:$0xf] %v1910
      %v1927 = vadd.f32 %v1856, %v1858
      %v1928 = vadd.f32 %v1927, %v1861
      %v1929 = vadd.f32 %v1928, %v1863
      %v1930 = vadd.f32 %v1929, %v1866
      %v1931 = vadd.f32 %v1930, %v1868
      %v1932 = vadd.f32 %v1931, %v1871
      %v1933 = vadd.f32 %v1932, %v1873
      %v1934 = vadd.f32 %v1933, %v1876
      %v1935 = vadd.f32 %v1934, %v1878
      %v1936 = vadd.f32 %v1935, %v1881
      %v1937 = vadd.f32 %v1936, %v1883
      %v1938 = vadd.f32 %v1937, %v1886
      %v1939 = vadd.f32 %v1938, %v1888
      %v1940 = vadd.f32 %v1939, %v1891
      %v1941 = vadd.f32 %v1940, %v1893
      %v1942 = vrot.slane %v1941, 4
      %v1943 = vadd.f32 %v1941, %v1942
      %v1944 = vrot.slane %v1943, 2
      %v1945 = vadd.f32 %v1943, %v1944
      %v1946 = vrot.slane %v1945, 1
      %v1947 = vadd.f32 %v1945, %v1946
      %v1948 = vmul.f32 %v1856, %v1856
      %v1949 = vmul.f32 %v1858, %v1858
      %v1950 = vmul.f32 %v1861, %v1861
      %v1951 = vmul.f32 %v1863, %v1863
      %v1952 = vmul.f32 %v1866, %v1866
      %v1953 = vmul.f32 %v1868, %v1868
      %v1954 = vmul.f32 %v1871, %v1871
      %v1955 = vmul.f32 %v1873, %v1873
      %v1956 = vmul.f32 %v1876, %v1876
      %v1957 = vmul.f32 %v1878, %v1878
      %v1958 = vmul.f32 %v1881, %v1881
      %v1959 = vmul.f32 %v1883, %v1883
      %v1960 = vmul.f32 %v1886, %v1886
      %v1961 = vmul.f32 %v1888, %v1888
      %v1962 = vmul.f32 %v1891, %v1891
      %v1963 = vmul.f32 %v1893, %v1893
      %v1964 = vadd.f32 %v1948, %v1949
      %v1965 = vadd.f32 %v1964, %v1950
      %v1966 = vadd.f32 %v1965, %v1951
      %v1967 = vadd.f32 %v1966, %v1952
      %v1968 = vadd.f32 %v1967, %v1953
      %v1969 = vadd.f32 %v1968, %v1954
      %v1970 = vadd.f32 %v1969, %v1955
      %v1971 = vadd.f32 %v1970, %v1956
      %v1972 = vadd.f32 %v1971, %v1957
      %v1973 = vadd.f32 %v1972, %v1958
      %v1974 = vadd.f32 %v1973, %v1959
      %v1975 = vadd.f32 %v1974, %v1960
      %v1976 = vadd.f32 %v1975, %v1961
      %v1977 = vadd.f32 %v1976, %v1962
      %v1978 = vadd.f32 %v1977, %v1963
      %v1979 = vrot.slane %v1978, 4
      %v1980 = vadd.f32 %v1978, %v1979
      %v1981 = vrot.slane %v1980, 2
      %v1982 = vadd.f32 %v1980, %v1981
      %v1983 = vrot.slane %v1982, 1
      %v1984 = vadd.f32 %v1982, %v1983
      %p1985 = scmp.eq.s32.totalorder %s25, 0
      // Predicated region
      $region41: #{double_conv.3} parent=39 // pred_check
        %p1986 = pneg %p1985
      $region42: #{double_conv.3} parent=39 // pred_check_branch
        %1988 = sbr.rel (%p1986) target = $region44
      $region43: #{double_conv.3} parent=39 // pred_region
        %1989 = vst [vmem:[%s484] sm:$0x3] 0.0
      $region44: #{double_conv.3} parent=39 // pred_fallthru
        _
      %v1990 = vld [vmem:[%s484] sm:$0x3]
      %vm1991 = vcmask 1040384
      %v1992 = vsel %vm1991, %v1947, %v1984
      %v1993 = vadd.f32 %v1990, %v1992
      %1994 = vst [vmem:[%s484] sm:$0x3] %v1993
      %s1995 = smul.u32 8, %s25
      %p1996 = scmp.lt.s32.totalorder %s23, 1
      %s1997 = scalar_select %p1996, %s23, 1
      %p1998 = scmp.lt.s32.totalorder %s1995, 15
      %s1999 = scalar_select %p1998, %s1995, 15
      %p2000 = scmp.lt.s32.totalorder %s24, 0
      %s2001 = scalar_select %p2000, %s24, 0
      %s2002 = smul.addr %s1999, 2
      %s2003 = sadd.s32 %s2001, %s2002
      %s2004 = smul.addr %s1997, 32
      %s2005 = sadd.s32 %s2003, %s2004
      %s2006 = smul.addr %s2005, 4
      %s2007 = scalar_lea.vmem %s5, %s2006
      %p2008 = scmp.lt.s32.totalorder %s23, 1
      %s2009 = scalar_select %p2008, %s23, 1
      %p2010 = scmp.lt.s32.totalorder %s24, 0
      %s2011 = scalar_select %p2010, %s24, 0
      %s2012 = sadd.s32 %s2011, %s2009
      %s2013 = smul.addr %s2012, 2
      %s2014 = scalar_lea.vmem %s6, %s2013
      // Predicated region
      $region45: #{double_conv.3} parent=39 // pred_check
        %p2015 = pneg %p211
      $region46: #{double_conv.3} parent=39 // pred_check_branch
        %2017 = sbr.rel (%p2015) target = $region48
      $region47: #{double_conv.3} parent=39 // pred_region
        %s2018 = smul.u32 8, %s25
      $region48: #{double_conv.3} parent=39 // pred_fallthru
        _
      // Predicated region
      $region49: #{double_conv.3} parent=39 // pred_check
        %p2019 = pneg %p239
      $region50: #{double_conv.3} parent=39 // pred_check_branch
        %2021 = sbr.rel (%p2019) target = $region52
      $region51: #{double_conv.3} parent=39 // pred_region
        _
      $region52: #{double_conv.3} parent=39 // pred_fallthru
        _
    $region40: #{double_conv.3} parent=5 // pred_fallthru
      _
    %p2022 = scmp.le.s32.totalorder 2, %s13
    // Predicated region
    $region53: #{double_conv.3} parent=5 // pred_check
      %p2023 = pneg %p2022
    $region54: #{double_conv.3} parent=5 // pred_check_branch
      %2025 = sbr.rel (%p2023) target = $region56
    $region55: #{double_conv.3} parent=5 // pred_region
      %s2026 = ssub.s32 %s13, 2
      // Predicated region
      $region57: #{double_conv.3} parent=55 // pred_check
        %p2027 = pneg %p217
      $region58: #{double_conv.3} parent=55 // pred_check_branch
        %2029 = sbr.rel (%p2027) target = $region60
      $region59: #{double_conv.3} parent=55 // pred_region
        %s2030 = smul.u32 8, %s28
        %p2031 = scmp.lt.s32.totalorder %s26, 1
        %s2032 = scalar_select %p2031, %s26, 1
        %p2033 = scmp.lt.s32.totalorder %s2030, 15
        %s2034 = scalar_select %p2033, %s2030, 15
        %p2035 = scmp.lt.s32.totalorder %s27, 0
        %s2036 = scalar_select %p2035, %s27, 0
        %s2037 = smul.addr %s2034, 2
        %s2038 = sadd.s32 %s2036, %s2037
        %s2039 = smul.addr %s2032, 32
        %s2040 = sadd.s32 %s2038, %s2039
        %s2041 = smul.addr %s2040, 4
        %s2042 = scalar_lea.vmem %s5, %s2041
      $region60: #{double_conv.3} parent=55 // pred_fallthru
        _
      // Predicated region
      $region61: #{double_conv.3} parent=55 // pred_check
        %p2043 = pneg %p245
      $region62: #{double_conv.3} parent=55 // pred_check_branch
        %2045 = sbr.rel (%p2043) target = $region64
      $region63: #{double_conv.3} parent=55 // pred_region
        %p2046 = scmp.lt.s32.totalorder %s26, 1
        %s2047 = scalar_select %p2046, %s26, 1
        %p2048 = scmp.lt.s32.totalorder %s27, 0
        %s2049 = scalar_select %p2048, %s27, 0
        %s2050 = sadd.s32 %s2049, %s2047
        %s2051 = smul.addr %s2050, 2
        %s2052 = scalar_lea.vmem %s6, %s2051
      $region64: #{double_conv.3} parent=55 // pred_fallthru
        _
    $region56: #{double_conv.3} parent=5 // pred_fallthru
      _
  $region6: #{double_conv.3} parent=0 // loop_footer
    %s17 = sadd.s32 1, %s13
  $region7: #{double_conv.3} parent=0 // loop_footer_branch
    %12 = sbr.rel target = $region3
  $region8: #{double_conv.3} parent=0 // loop_exit
    _

// kernel: double_conv.4
$region0: #{double_conv.4}
  #allocation0 [shape = 'u32[]', space=smem, size = 0x4, offset = 0x4, fixed_abs, tag = 'smem constant byte address 0x4 - core index']
  #allocation1 [shape = 'u32[72,128]{1,0:T(1,128)}', space=vmem, size = 0x9000, scoped, tag = 'internal scratch']
  %s0 = inlined_call_operand.vmem [shape: bf16[2,16,16,128], index: 0, kind: input, shape index: {}, may-alias: {0,1,2}]
  %s1 = inlined_call_operand.vmem [shape: bf16[2,16,16,128], index: 1, kind: input, shape index: {}, may-alias: {0,1,2}]
  %s2 = inlined_call_operand.vmem [shape: bf16[2,16,16,128], index: 2, kind: input, shape index: {}, may-alias: {0,1,2}]
  %s3 = inlined_call_operand.vmem [shape: bf16[1152,128], index: 3, kind: input, shape index: {}]
  %s4 = inlined_call_operand.vmem [shape: f32[1,1,1,128], index: 4, kind: input, shape index: {}]
  %s5 = inlined_call_operand.vmem [shape: f32[1,1,1,128], index: 5, kind: input, shape index: {}]
  %s6 = inlined_call_operand.vmem [shape: f32[1,1,1,128], index: 6, kind: input, shape index: {}]
  %s7 = inlined_call_operand.vmem [shape: bf16[2,16,16,128], index: 7, kind: output, shape index: {0}]
  %s8 = inlined_call_operand.vmem [shape: f32[2,2,128], index: 8, kind: output, shape index: {1}]
  %9 = xla_tuple %s7, %s8
  %s10 = sld [smem:[#allocation0]]
  $region73: #{double_conv.4} parent=0
    _
  %s12 = ssub.s32 1, %s10
  %s13 = scalar_select 0, %s12, %s10
  loop: start=0, step=1, limit=6
  $region2: #{double_conv.4} parent=0 // loop_pre_header
    _
  $region3: #{double_conv.4} parent=0 // loop_header
    %s15 = sphi 0, %s19
    %p16 = scmp.ge.s32.totalorder %s15, 6
    %s22 = sphi 0, %s41
    %s23 = sphi 0, %s37
    %s24 = sphi 0, %s33
    %s25 = sphi 0, %s22
    %s26 = sphi 0, %s23
    %s27 = sphi 0, %s24
    %s28 = sphi 0, %s25
    %s29 = sphi 0, %s26
    %s30 = sphi 0, %s27
    %s46 = sphi 0, %s48
    %s49 = sphi 0, %s46
    %s50 = sphi 0, %s49
    %s66 = sphi 0, %s50
    %s82 = sphi 0, %s84
    %s85 = sphi 0, %s82
    %s86 = sphi 0, %s85
    %s102 = sphi 0, %s86
    %s118 = sphi 0, %s120
    %s121 = sphi 0, %s118
    %s122 = sphi 0, %s121
    %s138 = sphi 0, %s122
    %s144 = sphi 0, %s146
    %s147 = sphi 0, %s144
    %s148 = sphi 0, %s147
    %s164 = sphi 0, %s148
    %s170 = sphi 0, %s172
    %s173 = sphi 0, %s170
    %s174 = sphi 0, %s173
    %s190 = sphi 0, %s174
    %s194 = sphi 0, %s194
    %s196 = sphi 0, %s194
    %s197 = sphi 0, %s196
    %s211 = sphi 0, %s197
    %s215 = sphi 0, %s215
    %s217 = sphi 0, %s215
    %s218 = sphi 0, %s217
    %s232 = sphi 0, %s218
    %s242 = sphi 0, %s244
    %s245 = sphi 0, %s242
    %s246 = sphi 0, %s245
    %s262 = sphi 0, %s246
    %s270 = sphi 0, %s272
    %s273 = sphi 0, %s270
    %s274 = sphi 0, %s273
    %s290 = sphi 0, %s274
  $region4: #{double_conv.4} parent=0 // loop_header_branch
    %18 = sbr.rel (%p16) target = $region8
  $region5: #{double_conv.4} parent=0 // loop_body
    %s20 = ssub.s32 %s15, 1
    %s21 = ssub.s32 %s15, 2
    %s31 = sadd.s32 1, %s24
    %p32 = scmp.ge.s32.totalorder %s31, 2
    %s33 = scalar_select %p32, 0, %s31
    %s34 = sadd.s32 1, %s23
    %s35 = scalar_select %p32, %s34, %s23
    %p36 = scmp.ge.s32.totalorder %s35, 1
    %s37 = scalar_select %p36, 0, %s35
    %s38 = sadd.s32 1, %s22
    %s39 = scalar_select %p36, %s38, %s22
    %p40 = scmp.ge.s32.totalorder %s39, 2
    %s41 = scalar_select %p40, 0, %s39
    %s42 = ssub.s32 %s22, %s41
    %s43 = ssub.s32 %s24, %s33
    %s44 = sor.u32 %s42, %s43
    %p45 = scmp.eq.s32.totalorder %s44, 0
    %s47 = sadd.s32 %s46, 1
    %s48 = scalar_select %p45, %s46, %s47
    %p51 = pneg %p45
    %p52 = scmp.eq.s32.totalorder %s15, 3
    %p53 = por %p51, %p52
    %p54 = scmp.ne.s32.totalorder %s46, %s49
    %p55 = scmp.eq.s32.totalorder %s15, 0
    %p56 = por %p54, %p55
    %p57 = scmp.ne.s32.totalorder %s46, %s49
    %p58 = scmp.eq.s32.totalorder %s20, 3
    %p59 = por %p57, %p58
    %p60 = scmp.ne.s32.totalorder %s49, %s50
    %p61 = scmp.eq.s32.totalorder %s20, 0
    %p62 = por %p60, %p61
    %p63 = scmp.ne.s32.totalorder %s49, %s50
    %p64 = scmp.eq.s32.totalorder %s21, 3
    %p65 = por %p63, %p64
    %p67 = scmp.ne.s32.totalorder %s50, %s66
    %p68 = scmp.eq.s32.totalorder %s21, 0
    %p69 = por %p67, %p68
    %s70 = smul.u32 %s24, 8
    %s71 = ssub.s32 %s70, 1
    %p72 = scmp.gt.s32.totalorder %s71, 0
    %s73 = scalar_select %p72, %s71, 0
    %s74 = smul.u32 %s33, 8
    %s75 = ssub.s32 %s74, 1
    %p76 = scmp.gt.s32.totalorder %s75, 0
    %s77 = scalar_select %p76, %s75, 0
    %s78 = ssub.s32 %s22, %s41
    %s79 = ssub.s32 %s73, %s77
    %s80 = sor.u32 %s78, %s79
    %p81 = scmp.eq.s32.totalorder %s80, 0
    %s83 = sadd.s32 %s82, 1
    %s84 = scalar_select %p81, %s82, %s83
    %p87 = pneg %p81
    %p88 = scmp.eq.s32.totalorder %s15, 3
    %p89 = por %p87, %p88
    %p90 = scmp.ne.s32.totalorder %s82, %s85
    %p91 = scmp.eq.s32.totalorder %s15, 0
    %p92 = por %p90, %p91
    %p93 = scmp.ne.s32.totalorder %s82, %s85
    %p94 = scmp.eq.s32.totalorder %s20, 3
    %p95 = por %p93, %p94
    %p96 = scmp.ne.s32.totalorder %s85, %s86
    %p97 = scmp.eq.s32.totalorder %s20, 0
    %p98 = por %p96, %p97
    %p99 = scmp.ne.s32.totalorder %s85, %s86
    %p100 = scmp.eq.s32.totalorder %s21, 3
    %p101 = por %p99, %p100
    %p103 = scmp.ne.s32.totalorder %s86, %s102
    %p104 = scmp.eq.s32.totalorder %s21, 0
    %p105 = por %p103, %p104
    %s106 = smul.u32 %s24, 8
    %s107 = sadd.s32 %s106, 8
    %p108 = scmp.lt.s32.totalorder %s107, 15
    %s109 = scalar_select %p108, %s107, 15
    %s110 = smul.u32 %s33, 8
    %s111 = sadd.s32 %s110, 8
    %p112 = scmp.lt.s32.totalorder %s111, 15
    %s113 = scalar_select %p112, %s111, 15
    %s114 = ssub.s32 %s22, %s41
    %s115 = ssub.s32 %s109, %s113
    %s116 = sor.u32 %s114, %s115
    %p117 = scmp.eq.s32.totalorder %s116, 0
    %s119 = sadd.s32 %s118, 1
    %s120 = scalar_select %p117, %s118, %s119
    %p123 = pneg %p117
    %p124 = scmp.eq.s32.totalorder %s15, 3
    %p125 = por %p123, %p124
    %p126 = scmp.ne.s32.totalorder %s118, %s121
    %p127 = scmp.eq.s32.totalorder %s15, 0
    %p128 = por %p126, %p127
    %p129 = scmp.ne.s32.totalorder %s118, %s121
    %p130 = scmp.eq.s32.totalorder %s20, 3
    %p131 = por %p129, %p130
    %p132 = scmp.ne.s32.totalorder %s121, %s122
    %p133 = scmp.eq.s32.totalorder %s20, 0
    %p134 = por %p132, %p133
    %p135 = scmp.ne.s32.totalorder %s121, %s122
    %p136 = scmp.eq.s32.totalorder %s21, 3
    %p137 = por %p135, %p136
    %p139 = scmp.ne.s32.totalorder %s122, %s138
    %p140 = scmp.eq.s32.totalorder %s21, 0
    %p141 = por %p139, %p140
    %s142 = ssub.s32 %s23, %s37
    %p143 = scmp.eq.s32.totalorder %s142, 0
    %s145 = sadd.s32 %s144, 1
    %s146 = scalar_select %p143, %s144, %s145
    %p149 = pneg %p143
    %p150 = scmp.eq.s32.totalorder %s15, 3
    %p151 = por %p149, %p150
    %p152 = scmp.ne.s32.totalorder %s144, %s147
    %p153 = scmp.eq.s32.totalorder %s15, 0
    %p154 = por %p152, %p153
    %p155 = scmp.ne.s32.totalorder %s144, %s147
    %p156 = scmp.eq.s32.totalorder %s20, 3
    %p157 = por %p155, %p156
    %p158 = scmp.ne.s32.totalorder %s147, %s148
    %p159 = scmp.eq.s32.totalorder %s20, 0
    %p160 = por %p158, %p159
    %p161 = scmp.ne.s32.totalorder %s147, %s148
    %p162 = scmp.eq.s32.totalorder %s21, 3
    %p163 = por %p161, %p162
    %p165 = scmp.ne.s32.totalorder %s148, %s164
    %p166 = scmp.eq.s32.totalorder %s21, 0
    %p167 = por %p165, %p166
    %s168 = ssub.s32 %s23, %s37
    %p169 = scmp.eq.s32.totalorder %s168, 0
    %s171 = sadd.s32 %s170, 1
    %s172 = scalar_select %p169, %s170, %s171
    %p175 = pneg %p169
    %p176 = scmp.eq.s32.totalorder %s15, 3
    %p177 = por %p175, %p176
    %p178 = scmp.ne.s32.totalorder %s170, %s173
    %p179 = scmp.eq.s32.totalorder %s15, 0
    %p180 = por %p178, %p179
    %p181 = scmp.ne.s32.totalorder %s170, %s173
    %p182 = scmp.eq.s32.totalorder %s20, 3
    %p183 = por %p181, %p182
    %p184 = scmp.ne.s32.totalorder %s173, %s174
    %p185 = scmp.eq.s32.totalorder %s20, 0
    %p186 = por %p184, %p185
    %p187 = scmp.ne.s32.totalorder %s173, %s174
    %p188 = scmp.eq.s32.totalorder %s21, 3
    %p189 = por %p187, %p188
    %p191 = scmp.ne.s32.totalorder %s174, %s190
    %p192 = scmp.eq.s32.totalorder %s21, 0
    %p193 = por %p191, %p192
    %s195 = sadd.s32 %s194, 1
    %p198 = scmp.eq.s32.totalorder %s15, 3
    %p199 = scmp.ne.s32.totalorder %s194, %s196
    %p200 = scmp.eq.s32.totalorder %s15, 0
    %p201 = por %p199, %p200
    %p202 = scmp.ne.s32.totalorder %s194, %s196
    %p203 = scmp.eq.s32.totalorder %s20, 3
    %p204 = por %p202, %p203
    %p205 = scmp.ne.s32.totalorder %s196, %s197
    %p206 = scmp.eq.s32.totalorder %s20, 0
    %p207 = por %p205, %p206
    %p208 = scmp.ne.s32.totalorder %s196, %s197
    %p209 = scmp.eq.s32.totalorder %s21, 3
    %p210 = por %p208, %p209
    %p212 = scmp.ne.s32.totalorder %s197, %s211
    %p213 = scmp.eq.s32.totalorder %s21, 0
    %p214 = por %p212, %p213
    %s216 = sadd.s32 %s215, 1
    %p219 = scmp.eq.s32.totalorder %s15, 3
    %p220 = scmp.ne.s32.totalorder %s215, %s217
    %p221 = scmp.eq.s32.totalorder %s15, 0
    %p222 = por %p220, %p221
    %p223 = scmp.ne.s32.totalorder %s215, %s217
    %p224 = scmp.eq.s32.totalorder %s20, 3
    %p225 = por %p223, %p224
    %p226 = scmp.ne.s32.totalorder %s217, %s218
    %p227 = scmp.eq.s32.totalorder %s20, 0
    %p228 = por %p226, %p227
    %p229 = scmp.ne.s32.totalorder %s217, %s218
    %p230 = scmp.eq.s32.totalorder %s21, 3
    %p231 = por %p229, %p230
    %p233 = scmp.ne.s32.totalorder %s218, %s232
    %p234 = scmp.eq.s32.totalorder %s21, 0
    %p235 = por %p233, %p234
    %s236 = ssub.s32 %s22, %s41
    %s237 = ssub.s32 %s24, %s33
    %s238 = sor.u32 %s236, %s237
    %s239 = ssub.s32 %s23, %s37
    %s240 = sor.u32 %s238, %s239
    %p241 = scmp.eq.s32.totalorder %s240, 0
    %s243 = sadd.s32 %s242, 1
    %s244 = scalar_select %p241, %s242, %s243
    %p247 = pneg %p241
    %p248 = scmp.eq.s32.totalorder %s15, 3
    %p249 = por %p247, %p248
    %p250 = scmp.ne.s32.totalorder %s242, %s245
    %p251 = scmp.eq.s32.totalorder %s15, 0
    %p252 = por %p250, %p251
    %p253 = scmp.ne.s32.totalorder %s242, %s245
    %p254 = scmp.eq.s32.totalorder %s20, 3
    %p255 = por %p253, %p254
    %p256 = scmp.ne.s32.totalorder %s245, %s246
    %p257 = scmp.eq.s32.totalorder %s20, 0
    %p258 = por %p256, %p257
    %p259 = scmp.ne.s32.totalorder %s245, %s246
    %p260 = scmp.eq.s32.totalorder %s21, 3
    %p261 = por %p259, %p260
    %p263 = scmp.ne.s32.totalorder %s246, %s262
    %p264 = scmp.eq.s32.totalorder %s21, 0
    %p265 = por %p263, %p264
    %s266 = ssub.s32 %s22, %s41
    %s267 = ssub.s32 %s23, %s37
    %s268 = sor.u32 %s266, %s267
    %p269 = scmp.eq.s32.totalorder %s268, 0
    %s271 = sadd.s32 %s270, 1
    %s272 = scalar_select %p269, %s270, %s271
    %p275 = pneg %p269
    %p276 = scmp.eq.s32.totalorder %s15, 3
    %p277 = por %p275, %p276
    %p278 = scmp.ne.s32.totalorder %s270, %s273
    %p279 = scmp.eq.s32.totalorder %s15, 0
    %p280 = por %p278, %p279
    %p281 = scmp.ne.s32.totalorder %s270, %s273
    %p282 = scmp.eq.s32.totalorder %s20, 3
    %p283 = por %p281, %p282
    %p284 = scmp.ne.s32.totalorder %s273, %s274
    %p285 = scmp.eq.s32.totalorder %s20, 0
    %p286 = por %p284, %p285
    %p287 = scmp.ne.s32.totalorder %s273, %s274
    %p288 = scmp.eq.s32.totalorder %s21, 3
    %p289 = por %p287, %p288
    %p291 = scmp.ne.s32.totalorder %s274, %s290
    %p292 = scmp.eq.s32.totalorder %s21, 0
    %p293 = por %p291, %p292
    %p294 = scmp.le.s32.totalorder 1, %s15
    %p295 = scmp.lt.s32.totalorder %s15, 5
    %p296 = pnand %p294, %p295
    %p297 = pneg %p296
    // Predicated region
    $region9: #{double_conv.4} parent=5 // pred_check
      _
    $region10: #{double_conv.4} parent=5 // pred_check_branch
      %299 = sbr.rel (%p296) target = $region12
    $region11: #{double_conv.4} parent=5 // pred_region
      %s300 = ssub.s32 %s15, 1
      // Predicated region
      $region13: #{double_conv.4} parent=11 // pred_check
        %p301 = pneg %p160
      $region14: #{double_conv.4} parent=11 // pred_check_branch
        %303 = sbr.rel (%p301) target = $region16
      $region15: #{double_conv.4} parent=11 // pred_region
        %p304 = scmp.lt.s32.totalorder %s26, 0
        %s305 = scalar_select %p304, %s26, 0
        %s306 = smul.addr %s305, 4
        %s307 = scalar_lea.vmem %s3, %s306
      $region16: #{double_conv.4} parent=11 // pred_fallthru
        _
      // Predicated region
      $region17: #{double_conv.4} parent=11 // pred_check
        %p308 = pneg %p186
      $region18: #{double_conv.4} parent=11 // pred_check_branch
        %310 = sbr.rel (%p308) target = $region20
      $region19: #{double_conv.4} parent=11 // pred_region
        %p311 = scmp.lt.s32.totalorder %s26, 0
        %s312 = scalar_select %p311, %s26, 0
        %s313 = scalar_lea.vmem %s4, %s312
      $region20: #{double_conv.4} parent=11 // pred_fallthru
        _
      // Predicated region
      $region21: #{double_conv.4} parent=11 // pred_check
        %p314 = pneg %p207
      $region22: #{double_conv.4} parent=11 // pred_check_branch
        %316 = sbr.rel (%p314) target = $region24
      $region23: #{double_conv.4} parent=11 // pred_region
        _
      $region24: #{double_conv.4} parent=11 // pred_fallthru
        _
      // Predicated region
      $region25: #{double_conv.4} parent=11 // pred_check
        %p317 = pneg %p228
      $region26: #{double_conv.4} parent=11 // pred_check_branch
        %319 = sbr.rel (%p317) target = $region28
      $region27: #{double_conv.4} parent=11 // pred_region
        _
      $region28: #{double_conv.4} parent=11 // pred_fallthru
        _
    $region12: #{double_conv.4} parent=5 // pred_fallthru
      _
    %p320 = scmp.lt.s32.totalorder %s15, 4
    // Predicated region
    $region29: #{double_conv.4} parent=5 // pred_check
      %p321 = pneg %p320
    $region30: #{double_conv.4} parent=5 // pred_check_branch
      %323 = sbr.rel (%p321) target = $region32
    $region31: #{double_conv.4} parent=5 // pred_region
      // Predicated region
      $region33: #{double_conv.4} parent=31 // pred_check
        %p324 = pneg %p56
      $region34: #{double_conv.4} parent=31 // pred_check_branch
        %326 = sbr.rel (%p324) target = $region36
      $region35: #{double_conv.4} parent=31 // pred_region
        %s327 = smul.u32 8, %s24
        %p328 = scmp.lt.s32.totalorder %s22, 1
        %s329 = scalar_select %p328, %s22, 1
        %p330 = scmp.lt.s32.totalorder %s327, 15
        %s331 = scalar_select %p330, %s327, 15
        %s332 = smul.addr %s331, 2
        %s333 = smul.addr %s329, 32
        %s334 = sadd.s32 %s332, %s333
        %s335 = smul.addr %s334, 4
        %s336 = scalar_lea.vmem %s0, %s335
        %s337 = smul.u32 8, %s24
      $region36: #{double_conv.4} parent=31 // pred_fallthru
        _
      // Predicated region
      $region37: #{double_conv.4} parent=31 // pred_check
        %p338 = pneg %p92
      $region38: #{double_conv.4} parent=31 // pred_check_branch
        %340 = sbr.rel (%p338) target = $region40
      $region39: #{double_conv.4} parent=31 // pred_region
        %s341 = smul.u32 %s24, 8
        %s342 = ssub.s32 %s341, 1
        %p343 = scmp.gt.s32.totalorder %s342, 0
        %s344 = scalar_select %p343, %s342, 0
        %p345 = scmp.lt.s32.totalorder %s22, 1
        %s346 = scalar_select %p345, %s22, 1
        %p347 = scmp.lt.s32.totalorder %s344, 15
        %s348 = scalar_select %p347, %s344, 15
        %s349 = smul.addr %s348, 2
        %s350 = smul.addr %s346, 32
        %s351 = sadd.s32 %s349, %s350
        %s352 = smul.addr %s351, 4
        %s353 = scalar_lea.vmem %s1, %s352
        %s354 = smul.u32 %s24, 8
        %s355 = ssub.s32 %s354, 1
        %p356 = scmp.gt.s32.totalorder %s355, 0
        %s357 = scalar_select %p356, %s355, 0
      $region40: #{double_conv.4} parent=31 // pred_fallthru
        _
      // Predicated region
      $region41: #{double_conv.4} parent=31 // pred_check
        %p358 = pneg %p128
      $region42: #{double_conv.4} parent=31 // pred_check_branch
        %360 = sbr.rel (%p358) target = $region44
      $region43: #{double_conv.4} parent=31 // pred_region
        %s361 = smul.u32 %s24, 8
        %s362 = sadd.s32 %s361, 8
        %p363 = scmp.lt.s32.totalorder %s362, 15
        %s364 = scalar_select %p363, %s362, 15
        %p365 = scmp.lt.s32.totalorder %s22, 1
        %s366 = scalar_select %p365, %s22, 1
        %p367 = scmp.lt.s32.totalorder %s364, 15
        %s368 = scalar_select %p367, %s364, 15
        %s369 = smul.addr %s368, 2
        %s370 = smul.addr %s366, 32
        %s371 = sadd.s32 %s369, %s370
        %s372 = smul.addr %s371, 4
        %s373 = scalar_lea.vmem %s2, %s372
        %s374 = smul.u32 %s24, 8
        %s375 = sadd.s32 %s374, 8
        %p376 = scmp.lt.s32.totalorder %s375, 15
        %s377 = scalar_select %p376, %s375, 15
      $region44: #{double_conv.4} parent=31 // pred_fallthru
        _
    $region32: #{double_conv.4} parent=5 // pred_fallthru
      _
    %p378 = scmp.le.s32.totalorder 1, %s15
    %p379 = scmp.lt.s32.totalorder %s15, 5
    %p380 = pnand %p378, %p379
    %p381 = pneg %p380
    // Predicated region
    $region45: #{double_conv.4} parent=5 // pred_check
      _
    $region46: #{double_conv.4} parent=5 // pred_check_branch
      %383 = sbr.rel (%p380) target = $region48
    $region47: #{double_conv.4} parent=5 // pred_region
      %s384 = ssub.s32 %s15, 1
      %s385 = smul.u32 8, %s27
      %p386 = scmp.lt.s32.totalorder %s25, 1
      %s387 = scalar_select %p386, %s25, 1
      %p388 = scmp.lt.s32.totalorder %s385, 15
      %s389 = scalar_select %p388, %s385, 15
      %s390 = smul.addr %s389, 2
      %s391 = smul.addr %s387, 32
      %s392 = sadd.s32 %s390, %s391
      %s393 = smul.addr %s392, 4
      %s394 = scalar_lea.vmem %s0, %s393
      %p395 = pneg %p62
      %p396 = pneg %p59
      %s397 = smul.u32 %s27, 8
      %s398 = ssub.s32 %s397, 1
      %p399 = scmp.gt.s32.totalorder %s398, 0
      %s400 = scalar_select %p399, %s398, 0
      %p401 = scmp.lt.s32.totalorder %s25, 1
      %s402 = scalar_select %p401, %s25, 1
      %p403 = scmp.lt.s32.totalorder %s400, 15
      %s404 = scalar_select %p403, %s400, 15
      %s405 = smul.addr %s404, 2
      %s406 = smul.addr %s402, 32
      %s407 = sadd.s32 %s405, %s406
      %s408 = smul.addr %s407, 4
      %s409 = scalar_lea.vmem %s1, %s408
      %p410 = pneg %p98
      %p411 = pneg %p95
      %s412 = smul.u32 %s27, 8
      %s413 = sadd.s32 %s412, 8
      %p414 = scmp.lt.s32.totalorder %s413, 15
      %s415 = scalar_select %p414, %s413, 15
      %p416 = scmp.lt.s32.totalorder %s25, 1
      %s417 = scalar_select %p416, %s25, 1
      %p418 = scmp.lt.s32.totalorder %s415, 15
      %s419 = scalar_select %p418, %s415, 15
      %s420 = smul.addr %s419, 2
      %s421 = smul.addr %s417, 32
      %s422 = sadd.s32 %s420, %s421
      %s423 = smul.addr %s422, 4
      %s424 = scalar_lea.vmem %s2, %s423
      %p425 = pneg %p134
      %p426 = pneg %p131
      %p427 = scmp.lt.s32.totalorder %s26, 0
      %s428 = scalar_select %p427, %s26, 0
      %s429 = smul.addr %s428, 4
      %s430 = scalar_lea.vmem %s3, %s429
      %p431 = pneg %p160
      %p432 = pneg %p157
      %p433 = scmp.lt.s32.totalorder %s26, 0
      %s434 = scalar_select %p433, %s26, 0
      %s435 = scalar_lea.vmem %s4, %s434
      %p436 = pneg %p186
      %p437 = pneg %p183
      %p438 = pneg %p207
      %p439 = pneg %p204
      %p440 = pneg %p228
      %p441 = pneg %p225
      %p442 = pneg %p258
      %p443 = pneg %p255
      %s444 = smul.u32 8, %s27
      %p445 = scmp.lt.s32.totalorder %s25, 1
      %s446 = scalar_select %p445, %s25, 1
      %p447 = scmp.lt.s32.totalorder %s444, 15
      %s448 = scalar_select %p447, %s444, 15
      %p449 = scmp.lt.s32.totalorder %s26, 0
      %s450 = scalar_select %p449, %s26, 0
      %s451 = smul.addr %s448, 2
      %s452 = sadd.s32 %s450, %s451
      %s453 = smul.addr %s446, 32
      %s454 = sadd.s32 %s452, %s453
      %s455 = smul.addr %s454, 4
      %s456 = scalar_lea.vmem %s7, %s455
      %p457 = pneg %p286
      %p458 = pneg %p283
      %p459 = scmp.lt.s32.totalorder %s25, 1
      %s460 = scalar_select %p459, %s25, 1
      %p461 = scmp.lt.s32.totalorder %s26, 0
      %s462 = scalar_select %p461, %s26, 0
      %s463 = sadd.s32 %s462, %s460
      %s464 = smul.addr %s463, 2
      %s465 = scalar_lea.vmem %s8, %s464
      %s466 = smul.u32 8, %s27
      %p467 = scmp.lt.s32.totalorder %s25, 1
      %s468 = scalar_select %p467, %s25, 1
      %p469 = scmp.lt.s32.totalorder %s466, 15
      %s470 = scalar_select %p469, %s466, 15
      %s471 = smul.addr %s470, 2
      %s472 = smul.addr %s468, 32
      %s473 = sadd.s32 %s471, %s472
      %s474 = smul.addr %s473, 4
      %s475 = scalar_lea.vmem %s0, %s474
      %s476 = smul.u32 8, %s27
      %s477 = smul.u32 %s27, 8
      %s478 = ssub.s32 %s477, 1
      %p479 = scmp.gt.s32.totalorder %s478, 0
      %s480 = scalar_select %p479, %s478, 0
      %p481 = scmp.lt.s32.totalorder %s25, 1
      %s482 = scalar_select %p481, %s25, 1
      %p483 = scmp.lt.s32.totalorder %s480, 15
      %s484 = scalar_select %p483, %s480, 15
      %s485 = smul.addr %s484, 2
      %s486 = smul.addr %s482, 32
      %s487 = sadd.s32 %s485, %s486
      %s488 = smul.addr %s487, 4
      %s489 = scalar_lea.vmem %s1, %s488
      %s490 = smul.u32 %s27, 8
      %s491 = ssub.s32 %s490, 1
      %p492 = scmp.gt.s32.totalorder %s491, 0
      %s493 = scalar_select %p492, %s491, 0
      %s494 = smul.u32 %s27, 8
      %s495 = sadd.s32 %s494, 8
      %p496 = scmp.lt.s32.totalorder %s495, 15
      %s497 = scalar_select %p496, %s495, 15
      %p498 = scmp.lt.s32.totalorder %s25, 1
      %s499 = scalar_select %p498, %s25, 1
      %p500 = scmp.lt.s32.totalorder %s497, 15
      %s501 = scalar_select %p500, %s497, 15
      %s502 = smul.addr %s501, 2
      %s503 = smul.addr %s499, 32
      %s504 = sadd.s32 %s502, %s503
      %s505 = smul.addr %s504, 4
      %s506 = scalar_lea.vmem %s2, %s505
      %s507 = smul.u32 %s27, 8
      %s508 = sadd.s32 %s507, 8
      %p509 = scmp.lt.s32.totalorder %s508, 15
      %s510 = scalar_select %p509, %s508, 15
      %p511 = scmp.lt.s32.totalorder %s26, 0
      %s512 = scalar_select %p511, %s26, 0
      %s513 = smul.addr %s512, 4
      %s514 = scalar_lea.vmem %s3, %s513
      %p515 = scmp.lt.s32.totalorder %s26, 0
      %s516 = scalar_select %p515, %s26, 0
      %s517 = scalar_lea.vmem %s4, %s516
      %s518 = smul.u32 8, %s27
      %p519 = scmp.lt.s32.totalorder %s25, 1
      %s520 = scalar_select %p519, %s25, 1
      %p521 = scmp.lt.s32.totalorder %s518, 15
      %s522 = scalar_select %p521, %s518, 15
      %p523 = scmp.lt.s32.totalorder %s26, 0
      %s524 = scalar_select %p523, %s26, 0
      %s525 = smul.addr %s522, 2
      %s526 = sadd.s32 %s524, %s525
      %s527 = smul.addr %s520, 32
      %s528 = sadd.s32 %s526, %s527
      %s529 = smul.addr %s528, 4
      %s530 = scalar_lea.vmem %s7, %s529
      %s531 = smul.u32 8, %s27
      %p532 = scmp.lt.s32.totalorder %s25, 1
      %s533 = scalar_select %p532, %s25, 1
      %p534 = scmp.lt.s32.totalorder %s26, 0
      %s535 = scalar_select %p534, %s26, 0
      %s536 = sadd.s32 %s535, %s533
      %s537 = smul.addr %s536, 2
      %s538 = scalar_lea.vmem %s8, %s537
      %v540 = vld [vmem:[%s475] sm:$0xf]
      %v541 = vld [vmem:[%s475 + $0x4] sm:$0xf]
      %v542 = vld [vmem:[%s475 + $0x8] sm:$0xf]
      %v543 = vld [vmem:[%s475 + $0xc] sm:$0xf]
      %v544 = vld [vmem:[%s475 + $0x10] sm:$0xf]
      %v545 = vld [vmem:[%s475 + $0x14] sm:$0xf]
      %v546 = vld [vmem:[%s475 + $0x18] sm:$0xf]
      %v547 = vld [vmem:[%s475 + $0x1c] sm:$0xf]
      %v548 = vld [vmem:[%s475 + $0x20] sm:$0xf]
      %v549 = vld [vmem:[%s475 + $0x24] sm:$0xf]
      %v550 = vld [vmem:[%s475 + $0x28] sm:$0xf]
      %v551 = vld [vmem:[%s475 + $0x2c] sm:$0xf]
      %v552 = vld [vmem:[%s475 + $0x30] sm:$0xf]
      %v553 = vld [vmem:[%s475 + $0x34] sm:$0xf]
      %v554 = vld [vmem:[%s475 + $0x38] sm:$0xf]
      %v555 = vld [vmem:[%s475 + $0x3c] sm:$0xf]
      %v556 = vunpack.c.l.bf16 %v540
      %v557 = vunpack.c.l.bf16 %v541
      %v558 = vunpack.c.l.bf16 %v542
      %v559 = vunpack.c.l.bf16 %v543
      %v560 = vunpack.c.l.bf16 %v544
      %v561 = vunpack.c.l.bf16 %v545
      %v562 = vunpack.c.l.bf16 %v546
      %v563 = vunpack.c.l.bf16 %v547
      %v564 = vunpack.c.l.bf16 %v548
      %v565 = vunpack.c.l.bf16 %v549
      %v566 = vunpack.c.l.bf16 %v550
      %v567 = vunpack.c.l.bf16 %v551
      %v568 = vunpack.c.l.bf16 %v552
      %v569 = vunpack.c.l.bf16 %v553
      %v570 = vunpack.c.l.bf16 %v554
      %v571 = vunpack.c.l.bf16 %v555
      %v572 = vld [vmem:[%s5] sm:$0x1]
      %v574 = vperm.slane %v572, 0
      %v576 = vmul.f32 %v556, %v574
      %v577 = vmul.f32 %v557, %v574
      %v578 = vmul.f32 %v558, %v574
      %v579 = vmul.f32 %v559, %v574
      %v580 = vmul.f32 %v560, %v574
      %v581 = vmul.f32 %v561, %v574
      %v582 = vmul.f32 %v562, %v574
      %v583 = vmul.f32 %v563, %v574
      %v584 = vmul.f32 %v564, %v574
      %v585 = vmul.f32 %v565, %v574
      %v586 = vmul.f32 %v566, %v574
      %v587 = vmul.f32 %v567, %v574
      %v588 = vmul.f32 %v568, %v574
      %v589 = vmul.f32 %v569, %v574
      %v590 = vmul.f32 %v570, %v574
      %v591 = vmul.f32 %v571, %v574
      %v592 = vld [vmem:[%s6] sm:$0x1]
      %v594 = vperm.slane %v592, 0
      %v596 = vadd.f32 %v576, %v594
      %v597 = vadd.f32 %v577, %v594
      %v598 = vadd.f32 %v578, %v594
      %v599 = vadd.f32 %v579, %v594
      %v600 = vadd.f32 %v580, %v594
      %v601 = vadd.f32 %v581, %v594
      %v602 = vadd.f32 %v582, %v594
      %v603 = vadd.f32 %v583, %v594
      %v604 = vadd.f32 %v584, %v594
      %v605 = vadd.f32 %v585, %v594
      %v606 = vadd.f32 %v586, %v594
      %v607 = vadd.f32 %v587, %v594
      %v608 = vadd.f32 %v588, %v594
      %v609 = vadd.f32 %v589, %v594
      %v610 = vadd.f32 %v590, %v594
      %v611 = vadd.f32 %v591, %v594
      %v612 = vmax.f32 %v596, 0.0
      %v613 = vmax.f32 %v597, 0.0
      %v614 = vmax.f32 %v598, 0.0
      %v615 = vmax.f32 %v599, 0.0
      %v616 = vmax.f32 %v600, 0.0
      %v617 = vmax.f32 %v601, 0.0
      %v618 = vmax.f32 %v602, 0.0
      %v619 = vmax.f32 %v603, 0.0
      %v620 = vmax.f32 %v604, 0.0
      %v621 = vmax.f32 %v605, 0.0
      %v622 = vmax.f32 %v606, 0.0
      %v623 = vmax.f32 %v607, 0.0
      %v624 = vmax.f32 %v608, 0.0
      %v625 = vmax.f32 %v609, 0.0
      %v626 = vmax.f32 %v610, 0.0
      %v627 = vmax.f32 %v611, 0.0
      %v628 = vpack.c.bf16 %v612, %v612
      %v629 = vpack.c.bf16 %v613, %v613
      %v630 = vpack.c.bf16 %v614, %v614
      %v631 = vpack.c.bf16 %v615, %v615
      %v632 = vpack.c.bf16 %v616, %v616
      %v633 = vpack.c.bf16 %v617, %v617
      %v634 = vpack.c.bf16 %v618, %v618
      %v635 = vpack.c.bf16 %v619, %v619
      %v636 = vpack.c.bf16 %v620, %v620
      %v637 = vpack.c.bf16 %v621, %v621
      %v638 = vpack.c.bf16 %v622, %v622
      %v639 = vpack.c.bf16 %v623, %v623
      %v640 = vpack.c.bf16 %v624, %v624
      %v641 = vpack.c.bf16 %v625, %v625
      %v642 = vpack.c.bf16 %v626, %v626
      %v643 = vpack.c.bf16 %v627, %v627
      %v644 = vld [vmem:[%s489] sm:$0xf]
      %v645 = vld [vmem:[%s489 + $0x4] sm:$0xf]
      %v646 = vunpack.c.l.bf16 %v644
      %v647 = vunpack.c.l.bf16 %v645
      %v648 = vmul.f32 %v646, %v574
      %v649 = vmul.f32 %v647, %v574
      %v650 = vadd.f32 %v648, %v594
      %v651 = vadd.f32 %v649, %v594
      %v652 = vmax.f32 %v650, 0.0
      %v653 = vmax.f32 %v651, 0.0
      %v654 = vpack.c.bf16 %v652, %v652
      %v655 = vpack.c.bf16 %v653, %v653
      %v656 = vld [vmem:[%s506] sm:$0xf]
      %v657 = vld [vmem:[%s506 + $0x4] sm:$0xf]
      %v658 = vunpack.c.l.bf16 %v656
      %v659 = vunpack.c.l.bf16 %v657
      %v660 = vmul.f32 %v658, %v574
      %v661 = vmul.f32 %v659, %v574
      %v662 = vadd.f32 %v660, %v594
      %v663 = vadd.f32 %v661, %v594
      %v664 = vmax.f32 %v662, 0.0
      %v665 = vmax.f32 %v663, 0.0
      %v666 = vpack.c.bf16 %v664, %v664
      %v667 = vpack.c.bf16 %v665, %v665
      %p668 = scmp.gt.s32.totalorder %s27, 0
      %s669 = scalar_select %p668, 1, 0
      %v670 = vstv %s669
      %vm671 = vcmp.eq.s32.totalorder %v670, 1
      %v672 = vsel %vm671, %v654, 0
      %v673 = vsel %vm671, %v655, 0
      %s674 = sadd.s32 %s27, 1
      %p675 = scmp.lt.s32.totalorder %s674, 2
      %s676 = scalar_select %p675, 1, 0
      %v677 = vstv %s676
      %vm678 = vcmp.eq.s32.totalorder %v677, 1
      %v679 = vsel %vm678, %v666, 0
      %v680 = vsel %vm678, %v667, 0
      %v701 = vunpack.c.l.b16 %v672
      %v702 = vunpack.c.l.b16 %v673
      %v703 = vunpack.c.l.b16 %v628
      %v704 = vunpack.c.l.b16 %v629
      %v705 = vunpack.c.l.b16 %v630
      %v706 = vunpack.c.l.b16 %v631
      %v707 = vunpack.c.l.b16 %v632
      %v708 = vunpack.c.l.b16 %v633
      %v709 = vunpack.c.l.b16 %v634
      %v710 = vunpack.c.l.b16 %v635
      %v711 = vunpack.c.l.b16 %v636
      %v712 = vunpack.c.l.b16 %v637
      %v713 = vunpack.c.l.b16 %v638
      %v714 = vunpack.c.l.b16 %v639
      %v715 = vunpack.c.l.b16 %v640
      %v716 = vunpack.c.l.b16 %v641
      %v717 = vunpack.c.l.b16 %v642
      %v718 = vunpack.c.l.b16 %v643
      %v719 = vunpack.c.l.b16 %v679
      %v720 = vunpack.c.l.b16 %v680
      %v721 = vpack.c.b16 %v702, %v701
      %v722 = vpack.c.b16 %v704, %v703
      %v723 = vpack.c.b16 %v706, %v705
      %v724 = vpack.c.b16 %v708, %v707
      %v725 = vpack.c.b16 %v710, %v709
      %v726 = vpack.c.b16 %v712, %v711
      %v727 = vpack.c.b16 %v714, %v713
      %v728 = vpack.c.b16 %v716, %v715
      %v729 = vpack.c.b16 %v718, %v717
      %v730 = vpack.c.b16 %v720, %v719
      %v732 = vshrl.u32 %v721, 16
      %v734 = vrot.slane %v732, 7
      %v735 = vshll.u32 %v721, 16
      %v737 = vor.u32 %v734, %v735
      %v739 = vshrl.u32 %v722, 16
      %v741 = vrot.slane %v739, 7
      %v742 = vshll.u32 %v722, 16
      %v744 = vor.u32 %v741, %v742
      %v746 = vshrl.u32 %v723, 16
      %v748 = vrot.slane %v746, 7
      %v749 = vshll.u32 %v723, 16
      %v751 = vor.u32 %v748, %v749
      %v753 = vshrl.u32 %v724, 16
      %v755 = vrot.slane %v753, 7
      %v756 = vshll.u32 %v724, 16
      %v758 = vor.u32 %v755, %v756
      %v760 = vshrl.u32 %v725, 16
      %v762 = vrot.slane %v760, 7
      %v763 = vshll.u32 %v725, 16
      %v765 = vor.u32 %v762, %v763
      %v767 = vshrl.u32 %v726, 16
      %v769 = vrot.slane %v767, 7
      %v770 = vshll.u32 %v726, 16
      %v772 = vor.u32 %v769, %v770
      %v774 = vshrl.u32 %v727, 16
      %v776 = vrot.slane %v774, 7
      %v777 = vshll.u32 %v727, 16
      %v779 = vor.u32 %v776, %v777
      %v781 = vshrl.u32 %v728, 16
      %v783 = vrot.slane %v781, 7
      %v784 = vshll.u32 %v728, 16
      %v786 = vor.u32 %v783, %v784
      %v788 = vshrl.u32 %v729, 16
      %v790 = vrot.slane %v788, 7
      %v791 = vshll.u32 %v729, 16
      %v793 = vor.u32 %v790, %v791
      %v795 = vshrl.u32 %v730, 16
      %v797 = vrot.slane %v795, 7
      %v798 = vshll.u32 %v730, 16
      %v800 = vor.u32 %v797, %v798
      %vm821 = vcmask 1040384
      %vm822 = vsmask.f32 256
      %vm823 = vmand %vm821, %vm822
      %v824 = vsel %vm823, 0, %v737
      %v825 = vsel %vm823, 0, %v744
      %v826 = vsel %vm823, 0, %v751
      %v827 = vsel %vm823, 0, %v758
      %v828 = vsel %vm823, 0, %v765
      %v829 = vsel %vm823, 0, %v772
      %v830 = vsel %vm823, 0, %v779
      %v831 = vsel %vm823, 0, %v786
      %v832 = vsel %vm823, 0, %v793
      %v833 = vsel %vm823, 0, %v800
      %v834 = vsel %vm823, %v734, 0
      %v835 = vsel %vm823, %v741, 0
      %v836 = vsel %vm823, %v748, 0
      %v837 = vsel %vm823, %v755, 0
      %v838 = vsel %vm823, %v762, 0
      %v839 = vsel %vm823, %v769, 0
      %v840 = vsel %vm823, %v776, 0
      %v841 = vsel %vm823, %v783, 0
      %v842 = vsel %vm823, %v790, 0
      %v843 = vsel %vm823, %v797, 0
      %vm844 = vsmask.f32 7424
      %v846 = vshrl.u32 %v824, 16
      %v848 = vshll.u32 %v824, 16
      %v850 = vrot.slane %v848, 1
      %v851 = vor.u32 %v846, %v850
      %v853 = vshll.u32 %v834, 16
      %v855 = vrot.slane %v853, 1
      %v856 = vsel %vm844, %v851, %v855
      %v858 = vshrl.u32 %v825, 16
      %v860 = vshll.u32 %v825, 16
      %v862 = vrot.slane %v860, 1
      %v863 = vor.u32 %v858, %v862
      %v865 = vshll.u32 %v835, 16
      %v867 = vrot.slane %v865, 1
      %v868 = vsel %vm844, %v863, %v867
      %v870 = vshrl.u32 %v826, 16
      %v872 = vshll.u32 %v826, 16
      %v874 = vrot.slane %v872, 1
      %v875 = vor.u32 %v870, %v874
      %v877 = vshll.u32 %v836, 16
      %v879 = vrot.slane %v877, 1
      %v880 = vsel %vm844, %v875, %v879
      %v882 = vshrl.u32 %v827, 16
      %v884 = vshll.u32 %v827, 16
      %v886 = vrot.slane %v884, 1
      %v887 = vor.u32 %v882, %v886
      %v889 = vshll.u32 %v837, 16
      %v891 = vrot.slane %v889, 1
      %v892 = vsel %vm844, %v887, %v891
      %v894 = vshrl.u32 %v828, 16
      %v896 = vshll.u32 %v828, 16
      %v898 = vrot.slane %v896, 1
      %v899 = vor.u32 %v894, %v898
      %v901 = vshll.u32 %v838, 16
      %v903 = vrot.slane %v901, 1
      %v904 = vsel %vm844, %v899, %v903
      %v906 = vshrl.u32 %v829, 16
      %v908 = vshll.u32 %v829, 16
      %v910 = vrot.slane %v908, 1
      %v911 = vor.u32 %v906, %v910
      %v913 = vshll.u32 %v839, 16
      %v915 = vrot.slane %v913, 1
      %v916 = vsel %vm844, %v911, %v915
      %v918 = vshrl.u32 %v830, 16
      %v920 = vshll.u32 %v830, 16
      %v922 = vrot.slane %v920, 1
      %v923 = vor.u32 %v918, %v922
      %v925 = vshll.u32 %v840, 16
      %v927 = vrot.slane %v925, 1
      %v928 = vsel %vm844, %v923, %v927
      %v930 = vshrl.u32 %v831, 16
      %v932 = vshll.u32 %v831, 16
      %v934 = vrot.slane %v932, 1
      %v935 = vor.u32 %v930, %v934
      %v937 = vshll.u32 %v841, 16
      %v939 = vrot.slane %v937, 1
      %v940 = vsel %vm844, %v935, %v939
      %vm965 = vcmask 1046528
      %v966 = vrot.slane %v824, 1
      %v967 = vrot.slane %v834, 1
      %v968 = vsel %vm965, %v966, %v967
      %v969 = vrot.slane %v825, 1
      %v970 = vrot.slane %v835, 1
      %v971 = vsel %vm965, %v969, %v970
      %v972 = vrot.slane %v826, 1
      %v973 = vrot.slane %v836, 1
      %v974 = vsel %vm965, %v972, %v973
      %v975 = vrot.slane %v827, 1
      %v976 = vrot.slane %v837, 1
      %v977 = vsel %vm965, %v975, %v976
      %v978 = vrot.slane %v828, 1
      %v979 = vrot.slane %v838, 1
      %v980 = vsel %vm965, %v978, %v979
      %v981 = vrot.slane %v829, 1
      %v982 = vrot.slane %v839, 1
      %v983 = vsel %vm965, %v981, %v982
      %v984 = vrot.slane %v830, 1
      %v985 = vrot.slane %v840, 1
      %v986 = vsel %vm965, %v984, %v985
      %v987 = vrot.slane %v831, 1
      %v988 = vrot.slane %v841, 1
      %v989 = vsel %vm965, %v987, %v988
      %v999 = vshrl.u32 %v832, 16
      %v1001 = vshll.u32 %v832, 16
      %v1003 = vrot.slane %v1001, 1
      %v1004 = vor.u32 %v999, %v1003
      %v1006 = vshll.u32 %v842, 16
      %v1008 = vrot.slane %v1006, 1
      %v1009 = vsel %vm844, %v1004, %v1008
      %v1013 = vrot.slane %v832, 1
      %v1014 = vrot.slane %v842, 1
      %v1015 = vsel %vm965, %v1013, %v1014
      %v1018 = vshrl.u32 %v833, 16
      %v1020 = vshll.u32 %v833, 16
      %v1022 = vrot.slane %v1020, 1
      %v1023 = vor.u32 %v1018, %v1022
      %v1025 = vshll.u32 %v843, 16
      %v1027 = vrot.slane %v1025, 1
      %v1028 = vsel %vm844, %v1023, %v1027
      %v1032 = vrot.slane %v833, 1
      %v1033 = vrot.slane %v843, 1
      %v1034 = vsel %vm965, %v1032, %v1033
      %v1036 = vld [vmem:[%s514] sm:$0xf]
      %v1037 = vld [vmem:[%s514 + $0x4] sm:$0xf]
      %v1038 = vld [vmem:[%s514 + $0x8] sm:$0xf]
      %v1039 = vld [vmem:[%s514 + $0xc] sm:$0xf]
      %v1040 = vld [vmem:[%s514 + $0x10] sm:$0xf]
      %v1041 = vld [vmem:[%s514 + $0x14] sm:$0xf]
      %v1042 = vld [vmem:[%s514 + $0x18] sm:$0xf]
      %v1043 = vld [vmem:[%s514 + $0x1c] sm:$0xf]
      %v1044 = vld [vmem:[%s514 + $0x20] sm:$0xf]
      %v1045 = vld [vmem:[%s514 + $0x24] sm:$0xf]
      %v1046 = vld [vmem:[%s514 + $0x28] sm:$0xf]
      %v1047 = vld [vmem:[%s514 + $0x2c] sm:$0xf]
      %v1048 = vld [vmem:[%s514 + $0x30] sm:$0xf]
      %v1049 = vld [vmem:[%s514 + $0x34] sm:$0xf]
      %v1050 = vld [vmem:[%s514 + $0x38] sm:$0xf]
      %v1051 = vld [vmem:[%s514 + $0x3c] sm:$0xf]
      %v1052 = vld [vmem:[%s514 + $0x40] sm:$0xf]
      %v1053 = vld [vmem:[%s514 + $0x44] sm:$0xf]
      %v1054 = vld [vmem:[%s514 + $0x48] sm:$0xf]
      %v1055 = vld [vmem:[%s514 + $0x4c] sm:$0xf]
      %v1056 = vld [vmem:[%s514 + $0x50] sm:$0xf]
      %v1057 = vld [vmem:[%s514 + $0x54] sm:$0xf]
      %v1058 = vld [vmem:[%s514 + $0x58] sm:$0xf]
      %v1059 = vld [vmem:[%s514 + $0x5c] sm:$0xf]
      %v1060 = vld [vmem:[%s514 + $0x60] sm:$0xf]
      %v1061 = vld [vmem:[%s514 + $0x64] sm:$0xf]
      %v1062 = vld [vmem:[%s514 + $0x68] sm:$0xf]
      %v1063 = vld [vmem:[%s514 + $0x6c] sm:$0xf]
      %v1064 = vld [vmem:[%s514 + $0x70] sm:$0xf]
      %v1065 = vld [vmem:[%s514 + $0x74] sm:$0xf]
      %v1066 = vld [vmem:[%s514 + $0x78] sm:$0xf]
      %v1067 = vld [vmem:[%s514 + $0x7c] sm:$0xf]
      %v1068 = vld [vmem:[%s514 + $0x80] sm:$0xf]
      %v1069 = vld [vmem:[%s514 + $0x84] sm:$0xf]
      %v1070 = vld [vmem:[%s514 + $0x88] sm:$0xf]
      %v1071 = vld [vmem:[%s514 + $0x8c] sm:$0xf]
      %v1072 = vld [vmem:[%s514 + $0x90] sm:$0xf]
      %v1073 = vld [vmem:[%s514 + $0x94] sm:$0xf]
      %v1074 = vld [vmem:[%s514 + $0x98] sm:$0xf]
      %v1075 = vld [vmem:[%s514 + $0x9c] sm:$0xf]
      %v1076 = vld [vmem:[%s514 + $0xa0] sm:$0xf]
      %v1077 = vld [vmem:[%s514 + $0xa4] sm:$0xf]
      %v1078 = vld [vmem:[%s514 + $0xa8] sm:$0xf]
      %v1079 = vld [vmem:[%s514 + $0xac] sm:$0xf]
      %v1080 = vld [vmem:[%s514 + $0xb0] sm:$0xf]
      %v1081 = vld [vmem:[%s514 + $0xb4] sm:$0xf]
      %v1082 = vld [vmem:[%s514 + $0xb8] sm:$0xf]
      %v1083 = vld [vmem:[%s514 + $0xbc] sm:$0xf]
      %v1084 = vld [vmem:[%s514 + $0xc0] sm:$0xf]
      %v1085 = vld [vmem:[%s514 + $0xc4] sm:$0xf]
      %v1086 = vld [vmem:[%s514 + $0xc8] sm:$0xf]
      %v1087 = vld [vmem:[%s514 + $0xcc] sm:$0xf]
      %v1088 = vld [vmem:[%s514 + $0xd0] sm:$0xf]
      %v1089 = vld [vmem:[%s514 + $0xd4] sm:$0xf]
      %v1090 = vld [vmem:[%s514 + $0xd8] sm:$0xf]
      %v1091 = vld [vmem:[%s514 + $0xdc] sm:$0xf]
      %v1092 = vld [vmem:[%s514 + $0xe0] sm:$0xf]
      %v1093 = vld [vmem:[%s514 + $0xe4] sm:$0xf]
      %v1094 = vld [vmem:[%s514 + $0xe8] sm:$0xf]
      %v1095 = vld [vmem:[%s514 + $0xec] sm:$0xf]
      %v1096 = vld [vmem:[%s514 + $0xf0] sm:$0xf]
      %v1097 = vld [vmem:[%s514 + $0xf4] sm:$0xf]
      %v1098 = vld [vmem:[%s514 + $0xf8] sm:$0xf]
      %v1099 = vld [vmem:[%s514 + $0xfc] sm:$0xf]
      %v1100 = vld [vmem:[%s514 + $0x100] sm:$0xf]
      %v1101 = vld [vmem:[%s514 + $0x104] sm:$0xf]
      %v1102 = vld [vmem:[%s514 + $0x108] sm:$0xf]
      %v1103 = vld [vmem:[%s514 + $0x10c] sm:$0xf]
      %v1104 = vld [vmem:[%s514 + $0x110] sm:$0xf]
      %v1105 = vld [vmem:[%s514 + $0x114] sm:$0xf]
      %v1106 = vld [vmem:[%s514 + $0x118] sm:$0xf]
      %v1107 = vld [vmem:[%s514 + $0x11c] sm:$0xf]
      %v1108 = vld [vmem:[%s514 + $0x120] sm:$0xf]
      %v1109 = vld [vmem:[%s514 + $0x124] sm:$0xf]
      %v1110 = vld [vmem:[%s514 + $0x128] sm:$0xf]
      %v1111 = vld [vmem:[%s514 + $0x12c] sm:$0xf]
      %v1112 = vld [vmem:[%s514 + $0x130] sm:$0xf]
      %v1113 = vld [vmem:[%s514 + $0x134] sm:$0xf]
      %v1114 = vld [vmem:[%s514 + $0x138] sm:$0xf]
      %v1115 = vld [vmem:[%s514 + $0x13c] sm:$0xf]
      %v1116 = vld [vmem:[%s514 + $0x140] sm:$0xf]
      %v1117 = vld [vmem:[%s514 + $0x144] sm:$0xf]
      %v1118 = vld [vmem:[%s514 + $0x148] sm:$0xf]
      %v1119 = vld [vmem:[%s514 + $0x14c] sm:$0xf]
      %v1120 = vld [vmem:[%s514 + $0x150] sm:$0xf]
      %v1121 = vld [vmem:[%s514 + $0x154] sm:$0xf]
      %v1122 = vld [vmem:[%s514 + $0x158] sm:$0xf]
      %v1123 = vld [vmem:[%s514 + $0x15c] sm:$0xf]
      %v1124 = vld [vmem:[%s514 + $0x160] sm:$0xf]
      %v1125 = vld [vmem:[%s514 + $0x164] sm:$0xf]
      %v1126 = vld [vmem:[%s514 + $0x168] sm:$0xf]
      %v1127 = vld [vmem:[%s514 + $0x16c] sm:$0xf]
      %v1128 = vld [vmem:[%s514 + $0x170] sm:$0xf]
      %v1129 = vld [vmem:[%s514 + $0x174] sm:$0xf]
      %v1130 = vld [vmem:[%s514 + $0x178] sm:$0xf]
      %v1131 = vld [vmem:[%s514 + $0x17c] sm:$0xf]
      %v1132 = vld [vmem:[%s514 + $0x180] sm:$0xf]
      %v1133 = vld [vmem:[%s514 + $0x184] sm:$0xf]
      %v1134 = vld [vmem:[%s514 + $0x188] sm:$0xf]
      %v1135 = vld [vmem:[%s514 + $0x18c] sm:$0xf]
      %v1136 = vld [vmem:[%s514 + $0x190] sm:$0xf]
      %v1137 = vld [vmem:[%s514 + $0x194] sm:$0xf]
      %v1138 = vld [vmem:[%s514 + $0x198] sm:$0xf]
      %v1139 = vld [vmem:[%s514 + $0x19c] sm:$0xf]
      %v1140 = vld [vmem:[%s514 + $0x1a0] sm:$0xf]
      %v1141 = vld [vmem:[%s514 + $0x1a4] sm:$0xf]
      %v1142 = vld [vmem:[%s514 + $0x1a8] sm:$0xf]
      %v1143 = vld [vmem:[%s514 + $0x1ac] sm:$0xf]
      %v1144 = vld [vmem:[%s514 + $0x1b0] sm:$0xf]
      %v1145 = vld [vmem:[%s514 + $0x1b4] sm:$0xf]
      %v1146 = vld [vmem:[%s514 + $0x1b8] sm:$0xf]
      %v1147 = vld [vmem:[%s514 + $0x1bc] sm:$0xf]
      %v1148 = vld [vmem:[%s514 + $0x1c0] sm:$0xf]
      %v1149 = vld [vmem:[%s514 + $0x1c4] sm:$0xf]
      %v1150 = vld [vmem:[%s514 + $0x1c8] sm:$0xf]
      %v1151 = vld [vmem:[%s514 + $0x1cc] sm:$0xf]
      %v1152 = vld [vmem:[%s514 + $0x1d0] sm:$0xf]
      %v1153 = vld [vmem:[%s514 + $0x1d4] sm:$0xf]
      %v1154 = vld [vmem:[%s514 + $0x1d8] sm:$0xf]
      %v1155 = vld [vmem:[%s514 + $0x1dc] sm:$0xf]
      %v1156 = vld [vmem:[%s514 + $0x1e0] sm:$0xf]
      %v1157 = vld [vmem:[%s514 + $0x1e4] sm:$0xf]
      %v1158 = vld [vmem:[%s514 + $0x1e8] sm:$0xf]
      %v1159 = vld [vmem:[%s514 + $0x1ec] sm:$0xf]
      %v1160 = vld [vmem:[%s514 + $0x1f0] sm:$0xf]
      %v1161 = vld [vmem:[%s514 + $0x1f4] sm:$0xf]
      %v1162 = vld [vmem:[%s514 + $0x1f8] sm:$0xf]
      %v1163 = vld [vmem:[%s514 + $0x1fc] sm:$0xf]
      %v1164 = vld [vmem:[%s514 + $0x200] sm:$0xf]
      %v1165 = vld [vmem:[%s514 + $0x204] sm:$0xf]
      %v1166 = vld [vmem:[%s514 + $0x208] sm:$0xf]
      %v1167 = vld [vmem:[%s514 + $0x20c] sm:$0xf]
      %v1168 = vld [vmem:[%s514 + $0x210] sm:$0xf]
      %v1169 = vld [vmem:[%s514 + $0x214] sm:$0xf]
      %v1170 = vld [vmem:[%s514 + $0x218] sm:$0xf]
      %v1171 = vld [vmem:[%s514 + $0x21c] sm:$0xf]
      %v1172 = vld [vmem:[%s514 + $0x220] sm:$0xf]
      %v1173 = vld [vmem:[%s514 + $0x224] sm:$0xf]
      %v1174 = vld [vmem:[%s514 + $0x228] sm:$0xf]
      %v1175 = vld [vmem:[%s514 + $0x22c] sm:$0xf]
      %v1176 = vld [vmem:[%s514 + $0x230] sm:$0xf]
      %v1177 = vld [vmem:[%s514 + $0x234] sm:$0xf]
      %v1178 = vld [vmem:[%s514 + $0x238] sm:$0xf]
      %v1179 = vld [vmem:[%s514 + $0x23c] sm:$0xf]
      %v1180 = vld [vmem:[%s517] sm:$0x1]
      %v1182 = vperm.slane %v1180, 0
      %v1328 = vunpack.c.l.b16 %v1036
      %v1329 = vunpack.c.l.b16 %v1037
      %v1330 = vunpack.c.l.b16 %v1038
      %v1331 = vunpack.c.l.b16 %v1039
      %v1332 = vunpack.c.l.b16 %v1040
      %v1333 = vunpack.c.l.b16 %v1041
      %v1334 = vunpack.c.l.b16 %v1042
      %v1335 = vunpack.c.l.b16 %v1043
      %v1336 = vunpack.c.l.b16 %v1044
      %v1337 = vunpack.c.l.b16 %v1045
      %v1338 = vunpack.c.l.b16 %v1046
      %v1339 = vunpack.c.l.b16 %v1047
      %v1340 = vunpack.c.l.b16 %v1048
      %v1341 = vunpack.c.l.b16 %v1049
      %v1342 = vunpack.c.l.b16 %v1050
      %v1343 = vunpack.c.l.b16 %v1051
      %v1344 = vunpack.c.l.b16 %v1052
      %v1345 = vunpack.c.l.b16 %v1053
      %v1346 = vunpack.c.l.b16 %v1054
      %v1347 = vunpack.c.l.b16 %v1055
      %v1348 = vunpack.c.l.b16 %v1056
      %v1349 = vunpack.c.l.b16 %v1057
      %v1350 = vunpack.c.l.b16 %v1058
      %v1351 = vunpack.c.l.b16 %v1059
      %v1352 = vunpack.c.l.b16 %v1060
      %v1353 = vunpack.c.l.b16 %v1061
      %v1354 = vunpack.c.l.b16 %v1062
      %v1355 = vunpack.c.l.b16 %v1063
      %v1356 = vunpack.c.l.b16 %v1064
      %v1357 = vunpack.c.l.b16 %v1065
      %v1358 = vunpack.c.l.b16 %v1066
      %v1359 = vunpack.c.l.b16 %v1067
      %v1360 = vunpack.c.l.b16 %v1068
      %v1361 = vunpack.c.l.b16 %v1069
      %v1362 = vunpack.c.l.b16 %v1070
      %v1363 = vunpack.c.l.b16 %v1071
      %v1364 = vunpack.c.l.b16 %v1072
      %v1365 = vunpack.c.l.b16 %v1073
      %v1366 = vunpack.c.l.b16 %v1074
      %v1367 = vunpack.c.l.b16 %v1075
      %v1368 = vunpack.c.l.b16 %v1076
      %v1369 = vunpack.c.l.b16 %v1077
      %v1370 = vunpack.c.l.b16 %v1078
      %v1371 = vunpack.c.l.b16 %v1079
      %v1372 = vunpack.c.l.b16 %v1080
      %v1373 = vunpack.c.l.b16 %v1081
      %v1374 = vunpack.c.l.b16 %v1082
      %v1375 = vunpack.c.l.b16 %v1083
      %v1376 = vunpack.c.l.b16 %v1084
      %v1377 = vunpack.c.l.b16 %v1085
      %v1378 = vunpack.c.l.b16 %v1086
      %v1379 = vunpack.c.l.b16 %v1087
      %v1380 = vunpack.c.l.b16 %v1088
      %v1381 = vunpack.c.l.b16 %v1089
      %v1382 = vunpack.c.l.b16 %v1090
      %v1383 = vunpack.c.l.b16 %v1091
      %v1384 = vunpack.c.l.b16 %v1092
      %v1385 = vunpack.c.l.b16 %v1093
      %v1386 = vunpack.c.l.b16 %v1094
      %v1387 = vunpack.c.l.b16 %v1095
      %v1388 = vunpack.c.l.b16 %v1096
      %v1389 = vunpack.c.l.b16 %v1097
      %v1390 = vunpack.c.l.b16 %v1098
      %v1391 = vunpack.c.l.b16 %v1099
      %v1392 = vunpack.c.l.b16 %v1100
      %v1393 = vunpack.c.l.b16 %v1101
      %v1394 = vunpack.c.l.b16 %v1102
      %v1395 = vunpack.c.l.b16 %v1103
      %v1396 = vunpack.c.l.b16 %v1104
      %v1397 = vunpack.c.l.b16 %v1105
      %v1398 = vunpack.c.l.b16 %v1106
      %v1399 = vunpack.c.l.b16 %v1107
      %v1400 = vunpack.c.l.b16 %v1108
      %v1401 = vunpack.c.l.b16 %v1109
      %v1402 = vunpack.c.l.b16 %v1110
      %v1403 = vunpack.c.l.b16 %v1111
      %v1404 = vunpack.c.l.b16 %v1112
      %v1405 = vunpack.c.l.b16 %v1113
      %v1406 = vunpack.c.l.b16 %v1114
      %v1407 = vunpack.c.l.b16 %v1115
      %v1408 = vunpack.c.l.b16 %v1116
      %v1409 = vunpack.c.l.b16 %v1117
      %v1410 = vunpack.c.l.b16 %v1118
      %v1411 = vunpack.c.l.b16 %v1119
      %v1412 = vunpack.c.l.b16 %v1120
      %v1413 = vunpack.c.l.b16 %v1121
      %v1414 = vunpack.c.l.b16 %v1122
      %v1415 = vunpack.c.l.b16 %v1123
      %v1416 = vunpack.c.l.b16 %v1124
      %v1417 = vunpack.c.l.b16 %v1125
      %v1418 = vunpack.c.l.b16 %v1126
      %v1419 = vunpack.c.l.b16 %v1127
      %v1420 = vunpack.c.l.b16 %v1128
      %v1421 = vunpack.c.l.b16 %v1129
      %v1422 = vunpack.c.l.b16 %v1130
      %v1423 = vunpack.c.l.b16 %v1131
      %v1424 = vunpack.c.l.b16 %v1132
      %v1425 = vunpack.c.l.b16 %v1133
      %v1426 = vunpack.c.l.b16 %v1134
      %v1427 = vunpack.c.l.b16 %v1135
      %v1428 = vunpack.c.l.b16 %v1136
      %v1429 = vunpack.c.l.b16 %v1137
      %v1430 = vunpack.c.l.b16 %v1138
      %v1431 = vunpack.c.l.b16 %v1139
      %v1432 = vunpack.c.l.b16 %v1140
      %v1433 = vunpack.c.l.b16 %v1141
      %v1434 = vunpack.c.l.b16 %v1142
      %v1435 = vunpack.c.l.b16 %v1143
      %v1436 = vunpack.c.l.b16 %v1144
      %v1437 = vunpack.c.l.b16 %v1145
      %v1438 = vunpack.c.l.b16 %v1146
      %v1439 = vunpack.c.l.b16 %v1147
      %v1440 = vunpack.c.l.b16 %v1148
      %v1441 = vunpack.c.l.b16 %v1149
      %v1442 = vunpack.c.l.b16 %v1150
      %v1443 = vunpack.c.l.b16 %v1151
      %v1444 = vunpack.c.l.b16 %v1152
      %v1445 = vunpack.c.l.b16 %v1153
      %v1446 = vunpack.c.l.b16 %v1154
      %v1447 = vunpack.c.l.b16 %v1155
      %v1448 = vunpack.c.l.b16 %v1156
      %v1449 = vunpack.c.l.b16 %v1157
      %v1450 = vunpack.c.l.b16 %v1158
      %v1451 = vunpack.c.l.b16 %v1159
      %v1452 = vunpack.c.l.b16 %v1160
      %v1453 = vunpack.c.l.b16 %v1161
      %v1454 = vunpack.c.l.b16 %v1162
      %v1455 = vunpack.c.l.b16 %v1163
      %v1456 = vunpack.c.l.b16 %v1164
      %v1457 = vunpack.c.l.b16 %v1165
      %v1458 = vunpack.c.l.b16 %v1166
      %v1459 = vunpack.c.l.b16 %v1167
      %v1460 = vunpack.c.l.b16 %v1168
      %v1461 = vunpack.c.l.b16 %v1169
      %v1462 = vunpack.c.l.b16 %v1170
      %v1463 = vunpack.c.l.b16 %v1171
      %v1464 = vunpack.c.l.b16 %v1172
      %v1465 = vunpack.c.l.b16 %v1173
      %v1466 = vunpack.c.l.b16 %v1174
      %v1467 = vunpack.c.l.b16 %v1175
      %v1468 = vunpack.c.l.b16 %v1176
      %v1469 = vunpack.c.l.b16 %v1177
      %v1470 = vunpack.c.l.b16 %v1178
      %v1471 = vunpack.c.l.b16 %v1179
      %v1472 = vpack.c.b16 %v1329, %v1328
      %v1473 = vpack.c.b16 %v1331, %v1330
      %v1474 = vpack.c.b16 %v1333, %v1332
      %v1475 = vpack.c.b16 %v1335, %v1334
      %v1476 = vpack.c.b16 %v1337, %v1336
      %v1477 = vpack.c.b16 %v1339, %v1338
      %v1478 = vpack.c.b16 %v1341, %v1340
      %v1479 = vpack.c.b16 %v1343, %v1342
      %v1480 = vpack.c.b16 %v1345, %v1344
      %v1481 = vpack.c.b16 %v1347, %v1346
      %v1482 = vpack.c.b16 %v1349, %v1348
      %v1483 = vpack.c.b16 %v1351, %v1350
      %v1484 = vpack.c.b16 %v1353, %v1352
      %v1485 = vpack.c.b16 %v1355, %v1354
      %v1486 = vpack.c.b16 %v1357, %v1356
      %v1487 = vpack.c.b16 %v1359, %v1358
      %v1488 = vpack.c.b16 %v1361, %v1360
      %v1489 = vpack.c.b16 %v1363, %v1362
      %v1490 = vpack.c.b16 %v1365, %v1364
      %v1491 = vpack.c.b16 %v1367, %v1366
      %v1492 = vpack.c.b16 %v1369, %v1368
      %v1493 = vpack.c.b16 %v1371, %v1370
      %v1494 = vpack.c.b16 %v1373, %v1372
      %v1495 = vpack.c.b16 %v1375, %v1374
      %v1496 = vpack.c.b16 %v1377, %v1376
      %v1497 = vpack.c.b16 %v1379, %v1378
      %v1498 = vpack.c.b16 %v1381, %v1380
      %v1499 = vpack.c.b16 %v1383, %v1382
      %v1500 = vpack.c.b16 %v1385, %v1384
      %v1501 = vpack.c.b16 %v1387, %v1386
      %v1502 = vpack.c.b16 %v1389, %v1388
      %v1503 = vpack.c.b16 %v1391, %v1390
      %v1504 = vpack.c.b16 %v1393, %v1392
      %v1505 = vpack.c.b16 %v1395, %v1394
      %v1506 = vpack.c.b16 %v1397, %v1396
      %v1507 = vpack.c.b16 %v1399, %v1398
      %v1508 = vpack.c.b16 %v1401, %v1400
      %v1509 = vpack.c.b16 %v1403, %v1402
      %v1510 = vpack.c.b16 %v1405, %v1404
      %v1511 = vpack.c.b16 %v1407, %v1406
      %v1512 = vpack.c.b16 %v1409, %v1408
      %v1513 = vpack.c.b16 %v1411, %v1410
      %v1514 = vpack.c.b16 %v1413, %v1412
      %v1515 = vpack.c.b16 %v1415, %v1414
      %v1516 = vpack.c.b16 %v1417, %v1416
      %v1517 = vpack.c.b16 %v1419, %v1418
      %v1518 = vpack.c.b16 %v1421, %v1420
      %v1519 = vpack.c.b16 %v1423, %v1422
      %v1520 = vpack.c.b16 %v1425, %v1424
      %v1521 = vpack.c.b16 %v1427, %v1426
      %v1522 = vpack.c.b16 %v1429, %v1428
      %v1523 = vpack.c.b16 %v1431, %v1430
      %v1524 = vpack.c.b16 %v1433, %v1432
      %v1525 = vpack.c.b16 %v1435, %v1434
      %v1526 = vpack.c.b16 %v1437, %v1436
      %v1527 = vpack.c.b16 %v1439, %v1438
      %v1528 = vpack.c.b16 %v1441, %v1440
      %v1529 = vpack.c.b16 %v1443, %v1442
      %v1530 = vpack.c.b16 %v1445, %v1444
      %v1531 = vpack.c.b16 %v1447, %v1446
      %v1532 = vpack.c.b16 %v1449, %v1448
      %v1533 = vpack.c.b16 %v1451, %v1450
      %v1534 = vpack.c.b16 %v1453, %v1452
      %v1535 = vpack.c.b16 %v1455, %v1454
      %v1536 = vpack.c.b16 %v1457, %v1456
      %v1537 = vpack.c.b16 %v1459, %v1458
      %v1538 = vpack.c.b16 %v1461, %v1460
      %v1539 = vpack.c.b16 %v1463, %v1462
      %v1540 = vpack.c.b16 %v1465, %v1464
      %v1541 = vpack.c.b16 %v1467, %v1466
      %v1542 = vpack.c.b16 %v1469, %v1468
      %v1543 = vpack.c.b16 %v1471, %v1470
      %1616 = vmatpush.bf16.msra.mxu0 %v1479
      %1617 = vmatpush.bf16.msra.mxu0 %v1478
      %1618 = vmatpush.bf16.msra.mxu0 %v1477
      %1619 = vmatpush.bf16.msra.mxu0 %v1476
      %1620 = vmatpush.bf16.msra.mxu0 %v1475
      %1621 = vmatpush.bf16.msra.mxu0 %v1474
      %1622 = vmatpush.bf16.msra.mxu0 %v1473
      %1623 = vmatpush.bf16.msra.mxu0 %v1472
      %1624 = vmatmul.bf16.gmra.mxu0 %v824
      %v1625 = vpop.f32.mrf.mxu0
      %v1626 = vadd.f32 %v1182, %v1625
      %v1627 = vpop.f32.mrf.mxu0
      %v1628 = vadd.f32 %v1182, %v1627
      %1629 = vmatmul.bf16.gmra.mxu0 %v825
      %v1630 = vpop.f32.mrf.mxu0
      %v1631 = vadd.f32 %v1182, %v1630
      %v1632 = vpop.f32.mrf.mxu0
      %v1633 = vadd.f32 %v1182, %v1632
      %1634 = vmatmul.bf16.gmra.mxu0 %v826
      %v1635 = vpop.f32.mrf.mxu0
      %v1636 = vadd.f32 %v1182, %v1635
      %v1637 = vpop.f32.mrf.mxu0
      %v1638 = vadd.f32 %v1182, %v1637
      %1639 = vmatmul.bf16.gmra.mxu0 %v827
      %v1640 = vpop.f32.mrf.mxu0
      %v1641 = vadd.f32 %v1182, %v1640
      %v1642 = vpop.f32.mrf.mxu0
      %v1643 = vadd.f32 %v1182, %v1642
      %1644 = vmatmul.bf16.gmra.mxu0 %v828
      %v1645 = vpop.f32.mrf.mxu0
      %v1646 = vadd.f32 %v1182, %v1645
      %v1647 = vpop.f32.mrf.mxu0
      %v1648 = vadd.f32 %v1182, %v1647
      %1649 = vmatmul.bf16.gmra.mxu0 %v829
      %v1650 = vpop.f32.mrf.mxu0
      %v1651 = vadd.f32 %v1182, %v1650
      %v1652 = vpop.f32.mrf.mxu0
      %v1653 = vadd.f32 %v1182, %v1652
      %1654 = vmatmul.bf16.gmra.mxu0 %v830
      %v1655 = vpop.f32.mrf.mxu0
      %v1656 = vadd.f32 %v1182, %v1655
      %v1657 = vpop.f32.mrf.mxu0
      %v1658 = vadd.f32 %v1182, %v1657
      %1659 = vmatmul.bf16.gmra.mxu0 %v831
      %v1660 = vpop.f32.mrf.mxu0
      %v1661 = vadd.f32 %v1182, %v1660
      %v1662 = vpop.f32.mrf.mxu0
      %v1663 = vadd.f32 %v1182, %v1662
      %1664 = vdwg.mxu0
      %1665 = vmatpush.bf16.msra.mxu0 %v1487
      %1666 = vmatpush.bf16.msra.mxu0 %v1486
      %1667 = vmatpush.bf16.msra.mxu0 %v1485
      %1668 = vmatpush.bf16.msra.mxu0 %v1484
      %1669 = vmatpush.bf16.msra.mxu0 %v1483
      %1670 = vmatpush.bf16.msra.mxu0 %v1482
      %1671 = vmatpush.bf16.msra.mxu0 %v1481
      %1672 = vmatpush.bf16.msra.mxu0 %v1480
      %1673 = vmatmul.bf16.gmra.mxu0 %v856
      %v1674 = vpop.f32.mrf.mxu0
      %v1675 = vadd.f32 %v1626, %v1674
      %v1676 = vpop.f32.mrf.mxu0
      %v1677 = vadd.f32 %v1628, %v1676
      %1678 = vmatmul.bf16.gmra.mxu0 %v868
      %v1679 = vpop.f32.mrf.mxu0
      %v1680 = vadd.f32 %v1631, %v1679
      %v1681 = vpop.f32.mrf.mxu0
      %v1682 = vadd.f32 %v1633, %v1681
      %1683 = vmatmul.bf16.gmra.mxu0 %v880
      %v1684 = vpop.f32.mrf.mxu0
      %v1685 = vadd.f32 %v1636, %v1684
      %v1686 = vpop.f32.mrf.mxu0
      %v1687 = vadd.f32 %v1638, %v1686
      %1688 = vmatmul.bf16.gmra.mxu0 %v892
      %v1689 = vpop.f32.mrf.mxu0
      %v1690 = vadd.f32 %v1641, %v1689
      %v1691 = vpop.f32.mrf.mxu0
      %v1692 = vadd.f32 %v1643, %v1691
      %1693 = vmatmul.bf16.gmra.mxu0 %v904
      %v1694 = vpop.f32.mrf.mxu0
      %v1695 = vadd.f32 %v1646, %v1694
      %v1696 = vpop.f32.mrf.mxu0
      %v1697 = vadd.f32 %v1648, %v1696
      %1698 = vmatmul.bf16.gmra.mxu0 %v916
      %v1699 = vpop.f32.mrf.mxu0
      %v1700 = vadd.f32 %v1651, %v1699
      %v1701 = vpop.f32.mrf.mxu0
      %v1702 = vadd.f32 %v1653, %v1701
      %1703 = vmatmul.bf16.gmra.mxu0 %v928
      %v1704 = vpop.f32.mrf.mxu0
      %v1705 = vadd.f32 %v1656, %v1704
      %v1706 = vpop.f32.mrf.mxu0
      %v1707 = vadd.f32 %v1658, %v1706
      %1708 = vmatmul.bf16.gmra.mxu0 %v940
      %v1709 = vpop.f32.mrf.mxu0
      %v1710 = vadd.f32 %v1661, %v1709
      %v1711 = vpop.f32.mrf.mxu0
      %v1712 = vadd.f32 %v1663, %v1711
      %1713 = vdwg.mxu0
      %1714 = vmatpush.bf16.msra.mxu0 %v1495
      %1715 = vmatpush.bf16.msra.mxu0 %v1494
      %1716 = vmatpush.bf16.msra.mxu0 %v1493
      %1717 = vmatpush.bf16.msra.mxu0 %v1492
      %1718 = vmatpush.bf16.msra.mxu0 %v1491
      %1719 = vmatpush.bf16.msra.mxu0 %v1490
      %1720 = vmatpush.bf16.msra.mxu0 %v1489
      %1721 = vmatpush.bf16.msra.mxu0 %v1488
      %1722 = vmatmul.bf16.gmra.mxu0 %v968
      %v1723 = vpop.f32.mrf.mxu0
      %v1724 = vadd.f32 %v1675, %v1723
      %v1725 = vpop.f32.mrf.mxu0
      %v1726 = vadd.f32 %v1677, %v1725
      %1727 = vmatmul.bf16.gmra.mxu0 %v971
      %v1728 = vpop.f32.mrf.mxu0
      %v1729 = vadd.f32 %v1680, %v1728
      %v1730 = vpop.f32.mrf.mxu0
      %v1731 = vadd.f32 %v1682, %v1730
      %1732 = vmatmul.bf16.gmra.mxu0 %v974
      %v1733 = vpop.f32.mrf.mxu0
      %v1734 = vadd.f32 %v1685, %v1733
      %v1735 = vpop.f32.mrf.mxu0
      %v1736 = vadd.f32 %v1687, %v1735
      %1737 = vmatmul.bf16.gmra.mxu0 %v977
      %v1738 = vpop.f32.mrf.mxu0
      %v1739 = vadd.f32 %v1690, %v1738
      %v1740 = vpop.f32.mrf.mxu0
      %v1741 = vadd.f32 %v1692, %v1740
      %1742 = vmatmul.bf16.gmra.mxu0 %v980
      %v1743 = vpop.f32.mrf.mxu0
      %v1744 = vadd.f32 %v1695, %v1743
      %v1745 = vpop.f32.mrf.mxu0
      %v1746 = vadd.f32 %v1697, %v1745
      %1747 = vmatmul.bf16.gmra.mxu0 %v983
      %v1748 = vpop.f32.mrf.mxu0
      %v1749 = vadd.f32 %v1700, %v1748
      %v1750 = vpop.f32.mrf.mxu0
      %v1751 = vadd.f32 %v1702, %v1750
      %1752 = vmatmul.bf16.gmra.mxu0 %v986
      %v1753 = vpop.f32.mrf.mxu0
      %v1754 = vadd.f32 %v1705, %v1753
      %v1755 = vpop.f32.mrf.mxu0
      %v1756 = vadd.f32 %v1707, %v1755
      %1757 = vmatmul.bf16.gmra.mxu0 %v989
      %v1758 = vpop.f32.mrf.mxu0
      %v1759 = vadd.f32 %v1710, %v1758
      %v1760 = vpop.f32.mrf.mxu0
      %v1761 = vadd.f32 %v1712, %v1760
      %1762 = vdwg.mxu0
      %1763 = vmatpush.bf16.msra.mxu0 %v1503
      %1764 = vmatpush.bf16.msra.mxu0 %v1502
      %1765 = vmatpush.bf16.msra.mxu0 %v1501
      %1766 = vmatpush.bf16.msra.mxu0 %v1500
      %1767 = vmatpush.bf16.msra.mxu0 %v1499
      %1768 = vmatpush.bf16.msra.mxu0 %v1498
      %1769 = vmatpush.bf16.msra.mxu0 %v1497
      %1770 = vmatpush.bf16.msra.mxu0 %v1496
      %1771 = vmatmul.bf16.gmra.mxu0 %v825
      %v1772 = vpop.f32.mrf.mxu0
      %v1773 = vadd.f32 %v1724, %v1772
      %v1774 = vpop.f32.mrf.mxu0
      %v1775 = vadd.f32 %v1726, %v1774
      %1776 = vmatmul.bf16.gmra.mxu0 %v826
      %v1777 = vpop.f32.mrf.mxu0
      %v1778 = vadd.f32 %v1729, %v1777
      %v1779 = vpop.f32.mrf.mxu0
      %v1780 = vadd.f32 %v1731, %v1779
      %1781 = vmatmul.bf16.gmra.mxu0 %v827
      %v1782 = vpop.f32.mrf.mxu0
      %v1783 = vadd.f32 %v1734, %v1782
      %v1784 = vpop.f32.mrf.mxu0
      %v1785 = vadd.f32 %v1736, %v1784
      %1786 = vmatmul.bf16.gmra.mxu0 %v828
      %v1787 = vpop.f32.mrf.mxu0
      %v1788 = vadd.f32 %v1739, %v1787
      %v1789 = vpop.f32.mrf.mxu0
      %v1790 = vadd.f32 %v1741, %v1789
      %1791 = vmatmul.bf16.gmra.mxu0 %v829
      %v1792 = vpop.f32.mrf.mxu0
      %v1793 = vadd.f32 %v1744, %v1792
      %v1794 = vpop.f32.mrf.mxu0
      %v1795 = vadd.f32 %v1746, %v1794
      %1796 = vmatmul.bf16.gmra.mxu0 %v830
      %v1797 = vpop.f32.mrf.mxu0
      %v1798 = vadd.f32 %v1749, %v1797
      %v1799 = vpop.f32.mrf.mxu0
      %v1800 = vadd.f32 %v1751, %v1799
      %1801 = vmatmul.bf16.gmra.mxu0 %v831
      %v1802 = vpop.f32.mrf.mxu0
      %v1803 = vadd.f32 %v1754, %v1802
      %v1804 = vpop.f32.mrf.mxu0
      %v1805 = vadd.f32 %v1756, %v1804
      %1806 = vmatmul.bf16.gmra.mxu0 %v832
      %v1807 = vpop.f32.mrf.mxu0
      %v1808 = vadd.f32 %v1759, %v1807
      %v1809 = vpop.f32.mrf.mxu0
      %v1810 = vadd.f32 %v1761, %v1809
      %1811 = vdwg.mxu0
      %1812 = vmatpush.bf16.msra.mxu0 %v1511
      %1813 = vmatpush.bf16.msra.mxu0 %v1510
      %1814 = vmatpush.bf16.msra.mxu0 %v1509
      %1815 = vmatpush.bf16.msra.mxu0 %v1508
      %1816 = vmatpush.bf16.msra.mxu0 %v1507
      %1817 = vmatpush.bf16.msra.mxu0 %v1506
      %1818 = vmatpush.bf16.msra.mxu0 %v1505
      %1819 = vmatpush.bf16.msra.mxu0 %v1504
      %1820 = vmatmul.bf16.gmra.mxu0 %v868
      %v1821 = vpop.f32.mrf.mxu0
      %v1822 = vadd.f32 %v1773, %v1821
      %v1823 = vpop.f32.mrf.mxu0
      %v1824 = vadd.f32 %v1775, %v1823
      %1825 = vmatmul.bf16.gmra.mxu0 %v880
      %v1826 = vpop.f32.mrf.mxu0
      %v1827 = vadd.f32 %v1778, %v1826
      %v1828 = vpop.f32.mrf.mxu0
      %v1829 = vadd.f32 %v1780, %v1828
      %1830 = vmatmul.bf16.gmra.mxu0 %v892
      %v1831 = vpop.f32.mrf.mxu0
      %v1832 = vadd.f32 %v1783, %v1831
      %v1833 = vpop.f32.mrf.mxu0
      %v1834 = vadd.f32 %v1785, %v1833
      %1835 = vmatmul.bf16.gmra.mxu0 %v904
      %v1836 = vpop.f32.mrf.mxu0
      %v1837 = vadd.f32 %v1788, %v1836
      %v1838 = vpop.f32.mrf.mxu0
      %v1839 = vadd.f32 %v1790, %v1838
      %1840 = vmatmul.bf16.gmra.mxu0 %v916
      %v1841 = vpop.f32.mrf.mxu0
      %v1842 = vadd.f32 %v1793, %v1841
      %v1843 = vpop.f32.mrf.mxu0
      %v1844 = vadd.f32 %v1795, %v1843
      %1845 = vmatmul.bf16.gmra.mxu0 %v928
      %v1846 = vpop.f32.mrf.mxu0
      %v1847 = vadd.f32 %v1798, %v1846
      %v1848 = vpop.f32.mrf.mxu0
      %v1849 = vadd.f32 %v1800, %v1848
      %1850 = vmatmul.bf16.gmra.mxu0 %v940
      %v1851 = vpop.f32.mrf.mxu0
      %v1852 = vadd.f32 %v1803, %v1851
      %v1853 = vpop.f32.mrf.mxu0
      %v1854 = vadd.f32 %v1805, %v1853
      %1855 = vmatmul.bf16.gmra.mxu0 %v1009
      %v1856 = vpop.f32.mrf.mxu0
      %v1857 = vadd.f32 %v1808, %v1856
      %v1858 = vpop.f32.mrf.mxu0
      %v1859 = vadd.f32 %v1810, %v1858
      %1860 = vdwg.mxu0
      %1861 = vmatpush.bf16.msra.mxu0 %v1519
      %1862 = vmatpush.bf16.msra.mxu0 %v1518
      %1863 = vmatpush.bf16.msra.mxu0 %v1517
      %1864 = vmatpush.bf16.msra.mxu0 %v1516
      %1865 = vmatpush.bf16.msra.mxu0 %v1515
      %1866 = vmatpush.bf16.msra.mxu0 %v1514
      %1867 = vmatpush.bf16.msra.mxu0 %v1513
      %1868 = vmatpush.bf16.msra.mxu0 %v1512
      %1869 = vmatmul.bf16.gmra.mxu0 %v971
      %v1870 = vpop.f32.mrf.mxu0
      %v1871 = vadd.f32 %v1822, %v1870
      %v1872 = vpop.f32.mrf.mxu0
      %v1873 = vadd.f32 %v1824, %v1872
      %1874 = vmatmul.bf16.gmra.mxu0 %v974
      %v1875 = vpop.f32.mrf.mxu0
      %v1876 = vadd.f32 %v1827, %v1875
      %v1877 = vpop.f32.mrf.mxu0
      %v1878 = vadd.f32 %v1829, %v1877
      %1879 = vmatmul.bf16.gmra.mxu0 %v977
      %v1880 = vpop.f32.mrf.mxu0
      %v1881 = vadd.f32 %v1832, %v1880
      %v1882 = vpop.f32.mrf.mxu0
      %v1883 = vadd.f32 %v1834, %v1882
      %1884 = vmatmul.bf16.gmra.mxu0 %v980
      %v1885 = vpop.f32.mrf.mxu0
      %v1886 = vadd.f32 %v1837, %v1885
      %v1887 = vpop.f32.mrf.mxu0
      %v1888 = vadd.f32 %v1839, %v1887
      %1889 = vmatmul.bf16.gmra.mxu0 %v983
      %v1890 = vpop.f32.mrf.mxu0
      %v1891 = vadd.f32 %v1842, %v1890
      %v1892 = vpop.f32.mrf.mxu0
      %v1893 = vadd.f32 %v1844, %v1892
      %1894 = vmatmul.bf16.gmra.mxu0 %v986
      %v1895 = vpop.f32.mrf.mxu0
      %v1896 = vadd.f32 %v1847, %v1895
      %v1897 = vpop.f32.mrf.mxu0
      %v1898 = vadd.f32 %v1849, %v1897
      %1899 = vmatmul.bf16.gmra.mxu0 %v989
      %v1900 = vpop.f32.mrf.mxu0
      %v1901 = vadd.f32 %v1852, %v1900
      %v1902 = vpop.f32.mrf.mxu0
      %v1903 = vadd.f32 %v1854, %v1902
      %1904 = vmatmul.bf16.gmra.mxu0 %v1015
      %v1905 = vpop.f32.mrf.mxu0
      %v1906 = vadd.f32 %v1857, %v1905
      %v1907 = vpop.f32.mrf.mxu0
      %v1908 = vadd.f32 %v1859, %v1907
      %1909 = vdwg.mxu0
      %1910 = vmatpush.bf16.msra.mxu0 %v1527
      %1911 = vmatpush.bf16.msra.mxu0 %v1526
      %1912 = vmatpush.bf16.msra.mxu0 %v1525
      %1913 = vmatpush.bf16.msra.mxu0 %v1524
      %1914 = vmatpush.bf16.msra.mxu0 %v1523
      %1915 = vmatpush.bf16.msra.mxu0 %v1522
      %1916 = vmatpush.bf16.msra.mxu0 %v1521
      %1917 = vmatpush.bf16.msra.mxu0 %v1520
      %1918 = vmatmul.bf16.gmra.mxu0 %v826
      %v1919 = vpop.f32.mrf.mxu0
      %v1920 = vadd.f32 %v1871, %v1919
      %v1921 = vpop.f32.mrf.mxu0
      %v1922 = vadd.f32 %v1873, %v1921
      %1923 = vmatmul.bf16.gmra.mxu0 %v827
      %v1924 = vpop.f32.mrf.mxu0
      %v1925 = vadd.f32 %v1876, %v1924
      %v1926 = vpop.f32.mrf.mxu0
      %v1927 = vadd.f32 %v1878, %v1926
      %1928 = vmatmul.bf16.gmra.mxu0 %v828
      %v1929 = vpop.f32.mrf.mxu0
      %v1930 = vadd.f32 %v1881, %v1929
      %v1931 = vpop.f32.mrf.mxu0
      %v1932 = vadd.f32 %v1883, %v1931
      %1933 = vmatmul.bf16.gmra.mxu0 %v829
      %v1934 = vpop.f32.mrf.mxu0
      %v1935 = vadd.f32 %v1886, %v1934
      %v1936 = vpop.f32.mrf.mxu0
      %v1937 = vadd.f32 %v1888, %v1936
      %1938 = vmatmul.bf16.gmra.mxu0 %v830
      %v1939 = vpop.f32.mrf.mxu0
      %v1940 = vadd.f32 %v1891, %v1939
      %v1941 = vpop.f32.mrf.mxu0
      %v1942 = vadd.f32 %v1893, %v1941
      %1943 = vmatmul.bf16.gmra.mxu0 %v831
      %v1944 = vpop.f32.mrf.mxu0
      %v1945 = vadd.f32 %v1896, %v1944
      %v1946 = vpop.f32.mrf.mxu0
      %v1947 = vadd.f32 %v1898, %v1946
      %1948 = vmatmul.bf16.gmra.mxu0 %v832
      %v1949 = vpop.f32.mrf.mxu0
      %v1950 = vadd.f32 %v1901, %v1949
      %v1951 = vpop.f32.mrf.mxu0
      %v1952 = vadd.f32 %v1903, %v1951
      %1953 = vmatmul.bf16.gmra.mxu0 %v833
      %v1954 = vpop.f32.mrf.mxu0
      %v1955 = vadd.f32 %v1906, %v1954
      %v1956 = vpop.f32.mrf.mxu0
      %v1957 = vadd.f32 %v1908, %v1956
      %1958 = vdwg.mxu0
      %1959 = vmatpush.bf16.msra.mxu0 %v1535
      %1960 = vmatpush.bf16.msra.mxu0 %v1534
      %1961 = vmatpush.bf16.msra.mxu0 %v1533
      %1962 = vmatpush.bf16.msra.mxu0 %v1532
      %1963 = vmatpush.bf16.msra.mxu0 %v1531
      %1964 = vmatpush.bf16.msra.mxu0 %v1530
      %1965 = vmatpush.bf16.msra.mxu0 %v1529
      %1966 = vmatpush.bf16.msra.mxu0 %v1528
      %1967 = vmatmul.bf16.gmra.mxu0 %v880
      %v1968 = vpop.f32.mrf.mxu0
      %v1969 = vadd.f32 %v1920, %v1968
      %v1970 = vpop.f32.mrf.mxu0
      %v1971 = vadd.f32 %v1922, %v1970
      %1972 = vmatmul.bf16.gmra.mxu0 %v892
      %v1973 = vpop.f32.mrf.mxu0
      %v1974 = vadd.f32 %v1925, %v1973
      %v1975 = vpop.f32.mrf.mxu0
      %v1976 = vadd.f32 %v1927, %v1975
      %1977 = vmatmul.bf16.gmra.mxu0 %v904
      %v1978 = vpop.f32.mrf.mxu0
      %v1979 = vadd.f32 %v1930, %v1978
      %v1980 = vpop.f32.mrf.mxu0
      %v1981 = vadd.f32 %v1932, %v1980
      %1982 = vmatmul.bf16.gmra.mxu0 %v916
      %v1983 = vpop.f32.mrf.mxu0
      %v1984 = vadd.f32 %v1935, %v1983
      %v1985 = vpop.f32.mrf.mxu0
      %v1986 = vadd.f32 %v1937, %v1985
      %1987 = vmatmul.bf16.gmra.mxu0 %v928
      %v1988 = vpop.f32.mrf.mxu0
      %v1989 = vadd.f32 %v1940, %v1988
      %v1990 = vpop.f32.mrf.mxu0
      %v1991 = vadd.f32 %v1942, %v1990
      %1992 = vmatmul.bf16.gmra.mxu0 %v940
      %v1993 = vpop.f32.mrf.mxu0
      %v1994 = vadd.f32 %v1945, %v1993
      %v1995 = vpop.f32.mrf.mxu0
      %v1996 = vadd.f32 %v1947, %v1995
      %1997 = vmatmul.bf16.gmra.mxu0 %v1009
      %v1998 = vpop.f32.mrf.mxu0
      %v1999 = vadd.f32 %v1950, %v1998
      %v2000 = vpop.f32.mrf.mxu0
      %v2001 = vadd.f32 %v1952, %v2000
      %2002 = vmatmul.bf16.gmra.mxu0 %v1028
      %v2003 = vpop.f32.mrf.mxu0
      %v2004 = vadd.f32 %v1955, %v2003
      %v2005 = vpop.f32.mrf.mxu0
      %v2006 = vadd.f32 %v1957, %v2005
      %2007 = vdwg.mxu0
      %2008 = vmatpush.bf16.msra.mxu0 %v1543
      %2009 = vmatpush.bf16.msra.mxu0 %v1542
      %2010 = vmatpush.bf16.msra.mxu0 %v1541
      %2011 = vmatpush.bf16.msra.mxu0 %v1540
      %2012 = vmatpush.bf16.msra.mxu0 %v1539
      %2013 = vmatpush.bf16.msra.mxu0 %v1538
      %2014 = vmatpush.bf16.msra.mxu0 %v1537
      %2015 = vmatpush.bf16.msra.mxu0 %v1536
      %2016 = vmatmul.bf16.gmra.mxu0 %v974
      %v2017 = vpop.f32.mrf.mxu0
      %v2018 = vadd.f32 %v1969, %v2017
      %v2019 = vpop.f32.mrf.mxu0
      %v2020 = vadd.f32 %v1971, %v2019
      %2021 = vmatmul.bf16.gmra.mxu0 %v977
      %v2022 = vpop.f32.mrf.mxu0
      %v2023 = vadd.f32 %v1974, %v2022
      %v2024 = vpop.f32.mrf.mxu0
      %v2025 = vadd.f32 %v1976, %v2024
      %2026 = vmatmul.bf16.gmra.mxu0 %v980
      %v2027 = vpop.f32.mrf.mxu0
      %v2028 = vadd.f32 %v1979, %v2027
      %v2029 = vpop.f32.mrf.mxu0
      %v2030 = vadd.f32 %v1981, %v2029
      %2031 = vmatmul.bf16.gmra.mxu0 %v983
      %v2032 = vpop.f32.mrf.mxu0
      %v2033 = vadd.f32 %v1984, %v2032
      %v2034 = vpop.f32.mrf.mxu0
      %v2035 = vadd.f32 %v1986, %v2034
      %2036 = vmatmul.bf16.gmra.mxu0 %v986
      %v2037 = vpop.f32.mrf.mxu0
      %v2038 = vadd.f32 %v1989, %v2037
      %v2039 = vpop.f32.mrf.mxu0
      %v2040 = vadd.f32 %v1991, %v2039
      %2041 = vmatmul.bf16.gmra.mxu0 %v989
      %v2042 = vpop.f32.mrf.mxu0
      %v2043 = vadd.f32 %v1994, %v2042
      %v2044 = vpop.f32.mrf.mxu0
      %v2045 = vadd.f32 %v1996, %v2044
      %2046 = vmatmul.bf16.gmra.mxu0 %v1015
      %v2047 = vpop.f32.mrf.mxu0
      %v2048 = vadd.f32 %v1999, %v2047
      %v2049 = vpop.f32.mrf.mxu0
      %v2050 = vadd.f32 %v2001, %v2049
      %2051 = vmatmul.bf16.gmra.mxu0 %v1034
      %v2052 = vpop.f32.mrf.mxu0
      %v2053 = vadd.f32 %v2004, %v2052
      %v2054 = vpop.f32.mrf.mxu0
      %v2055 = vadd.f32 %v2006, %v2054
      %2056 = vdwg.mxu0
      %v2057 = vpack.c.bf16 %v2018, %v2018
      %v2058 = vpack.c.bf16 %v2020, %v2020
      %v2059 = vpack.c.bf16 %v2023, %v2023
      %v2060 = vpack.c.bf16 %v2025, %v2025
      %v2061 = vpack.c.bf16 %v2028, %v2028
      %v2062 = vpack.c.bf16 %v2030, %v2030
      %v2063 = vpack.c.bf16 %v2033, %v2033
      %v2064 = vpack.c.bf16 %v2035, %v2035
      %v2065 = vpack.c.bf16 %v2038, %v2038
      %v2066 = vpack.c.bf16 %v2040, %v2040
      %v2067 = vpack.c.bf16 %v2043, %v2043
      %v2068 = vpack.c.bf16 %v2045, %v2045
      %v2069 = vpack.c.bf16 %v2048, %v2048
      %v2070 = vpack.c.bf16 %v2050, %v2050
      %v2071 = vpack.c.bf16 %v2053, %v2053
      %v2072 = vpack.c.bf16 %v2055, %v2055
      %2073 = vst [vmem:[%s530] sm:$0xf] %v2057
      %2074 = vst [vmem:[%s530 + $0x4] sm:$0xf] %v2058
      %2075 = vst [vmem:[%s530 + $0x8] sm:$0xf] %v2059
      %2076 = vst [vmem:[%s530 + $0xc] sm:$0xf] %v2060
      %2077 = vst [vmem:[%s530 + $0x10] sm:$0xf] %v2061
      %2078 = vst [vmem:[%s530 + $0x14] sm:$0xf] %v2062
      %2079 = vst [vmem:[%s530 + $0x18] sm:$0xf] %v2063
      %2080 = vst [vmem:[%s530 + $0x1c] sm:$0xf] %v2064
      %2081 = vst [vmem:[%s530 + $0x20] sm:$0xf] %v2065
      %2082 = vst [vmem:[%s530 + $0x24] sm:$0xf] %v2066
      %2083 = vst [vmem:[%s530 + $0x28] sm:$0xf] %v2067
      %2084 = vst [vmem:[%s530 + $0x2c] sm:$0xf] %v2068
      %2085 = vst [vmem:[%s530 + $0x30] sm:$0xf] %v2069
      %2086 = vst [vmem:[%s530 + $0x34] sm:$0xf] %v2070
      %2087 = vst [vmem:[%s530 + $0x38] sm:$0xf] %v2071
      %2088 = vst [vmem:[%s530 + $0x3c] sm:$0xf] %v2072
      %v2089 = vadd.f32 %v2018, %v2020
      %v2090 = vadd.f32 %v2089, %v2023
      %v2091 = vadd.f32 %v2090, %v2025
      %v2092 = vadd.f32 %v2091, %v2028
      %v2093 = vadd.f32 %v2092, %v2030
      %v2094 = vadd.f32 %v2093, %v2033
      %v2095 = vadd.f32 %v2094, %v2035
      %v2096 = vadd.f32 %v2095, %v2038
      %v2097 = vadd.f32 %v2096, %v2040
      %v2098 = vadd.f32 %v2097, %v2043
      %v2099 = vadd.f32 %v2098, %v2045
      %v2100 = vadd.f32 %v2099, %v2048
      %v2101 = vadd.f32 %v2100, %v2050
      %v2102 = vadd.f32 %v2101, %v2053
      %v2103 = vadd.f32 %v2102, %v2055
      %v2104 = vrot.slane %v2103, 4
      %v2105 = vadd.f32 %v2103, %v2104
      %v2106 = vrot.slane %v2105, 2
      %v2107 = vadd.f32 %v2105, %v2106
      %v2108 = vrot.slane %v2107, 1
      %v2109 = vadd.f32 %v2107, %v2108
      %v2110 = vmul.f32 %v2018, %v2018
      %v2111 = vmul.f32 %v2020, %v2020
      %v2112 = vmul.f32 %v2023, %v2023
      %v2113 = vmul.f32 %v2025, %v2025
      %v2114 = vmul.f32 %v2028, %v2028
      %v2115 = vmul.f32 %v2030, %v2030
      %v2116 = vmul.f32 %v2033, %v2033
      %v2117 = vmul.f32 %v2035, %v2035
      %v2118 = vmul.f32 %v2038, %v2038
      %v2119 = vmul.f32 %v2040, %v2040
      %v2120 = vmul.f32 %v2043, %v2043
      %v2121 = vmul.f32 %v2045, %v2045
      %v2122 = vmul.f32 %v2048, %v2048
      %v2123 = vmul.f32 %v2050, %v2050
      %v2124 = vmul.f32 %v2053, %v2053
      %v2125 = vmul.f32 %v2055, %v2055
      %v2126 = vadd.f32 %v2110, %v2111
      %v2127 = vadd.f32 %v2126, %v2112
      %v2128 = vadd.f32 %v2127, %v2113
      %v2129 = vadd.f32 %v2128, %v2114
      %v2130 = vadd.f32 %v2129, %v2115
      %v2131 = vadd.f32 %v2130, %v2116
      %v2132 = vadd.f32 %v2131, %v2117
      %v2133 = vadd.f32 %v2132, %v2118
      %v2134 = vadd.f32 %v2133, %v2119
      %v2135 = vadd.f32 %v2134, %v2120
      %v2136 = vadd.f32 %v2135, %v2121
      %v2137 = vadd.f32 %v2136, %v2122
      %v2138 = vadd.f32 %v2137, %v2123
      %v2139 = vadd.f32 %v2138, %v2124
      %v2140 = vadd.f32 %v2139, %v2125
      %v2141 = vrot.slane %v2140, 4
      %v2142 = vadd.f32 %v2140, %v2141
      %v2143 = vrot.slane %v2142, 2
      %v2144 = vadd.f32 %v2142, %v2143
      %v2145 = vrot.slane %v2144, 1
      %v2146 = vadd.f32 %v2144, %v2145
      %p2147 = scmp.eq.s32.totalorder %s27, 0
      // Predicated region
      $region49: #{double_conv.4} parent=47 // pred_check
        %p2148 = pneg %p2147
      $region50: #{double_conv.4} parent=47 // pred_check_branch
        %2150 = sbr.rel (%p2148) target = $region52
      $region51: #{double_conv.4} parent=47 // pred_region
        %2151 = vst [vmem:[%s538] sm:$0x3] 0.0
      $region52: #{double_conv.4} parent=47 // pred_fallthru
        _
      %v2152 = vld [vmem:[%s538] sm:$0x3]
      %vm2153 = vcmask 1040384
      %v2154 = vsel %vm2153, %v2109, %v2146
      %v2155 = vadd.f32 %v2152, %v2154
      %2156 = vst [vmem:[%s538] sm:$0x3] %v2155
      %s2157 = smul.u32 8, %s27
      %p2158 = scmp.lt.s32.totalorder %s25, 1
      %s2159 = scalar_select %p2158, %s25, 1
      %p2160 = scmp.lt.s32.totalorder %s2157, 15
      %s2161 = scalar_select %p2160, %s2157, 15
      %p2162 = scmp.lt.s32.totalorder %s26, 0
      %s2163 = scalar_select %p2162, %s26, 0
      %s2164 = smul.addr %s2161, 2
      %s2165 = sadd.s32 %s2163, %s2164
      %s2166 = smul.addr %s2159, 32
      %s2167 = sadd.s32 %s2165, %s2166
      %s2168 = smul.addr %s2167, 4
      %s2169 = scalar_lea.vmem %s7, %s2168
      %p2170 = scmp.lt.s32.totalorder %s25, 1
      %s2171 = scalar_select %p2170, %s25, 1
      %p2172 = scmp.lt.s32.totalorder %s26, 0
      %s2173 = scalar_select %p2172, %s26, 0
      %s2174 = sadd.s32 %s2173, %s2171
      %s2175 = smul.addr %s2174, 2
      %s2176 = scalar_lea.vmem %s8, %s2175
      // Predicated region
      $region53: #{double_conv.4} parent=47 // pred_check
        %p2177 = pneg %p255
      $region54: #{double_conv.4} parent=47 // pred_check_branch
        %2179 = sbr.rel (%p2177) target = $region56
      $region55: #{double_conv.4} parent=47 // pred_region
        %s2180 = smul.u32 8, %s27
      $region56: #{double_conv.4} parent=47 // pred_fallthru
        _
      // Predicated region
      $region57: #{double_conv.4} parent=47 // pred_check
        %p2181 = pneg %p283
      $region58: #{double_conv.4} parent=47 // pred_check_branch
        %2183 = sbr.rel (%p2181) target = $region60
      $region59: #{double_conv.4} parent=47 // pred_region
        _
      $region60: #{double_conv.4} parent=47 // pred_fallthru
        _
    $region48: #{double_conv.4} parent=5 // pred_fallthru
      _
    %p2184 = scmp.le.s32.totalorder 2, %s15
    // Predicated region
    $region61: #{double_conv.4} parent=5 // pred_check
      %p2185 = pneg %p2184
    $region62: #{double_conv.4} parent=5 // pred_check_branch
      %2187 = sbr.rel (%p2185) target = $region64
    $region63: #{double_conv.4} parent=5 // pred_region
      %s2188 = ssub.s32 %s15, 2
      // Predicated region
      $region65: #{double_conv.4} parent=63 // pred_check
        %p2189 = pneg %p261
      $region66: #{double_conv.4} parent=63 // pred_check_branch
        %2191 = sbr.rel (%p2189) target = $region68
      $region67: #{double_conv.4} parent=63 // pred_region
        %s2192 = smul.u32 8, %s30
        %p2193 = scmp.lt.s32.totalorder %s28, 1
        %s2194 = scalar_select %p2193, %s28, 1
        %p2195 = scmp.lt.s32.totalorder %s2192, 15
        %s2196 = scalar_select %p2195, %s2192, 15
        %p2197 = scmp.lt.s32.totalorder %s29, 0
        %s2198 = scalar_select %p2197, %s29, 0
        %s2199 = smul.addr %s2196, 2
        %s2200 = sadd.s32 %s2198, %s2199
        %s2201 = smul.addr %s2194, 32
        %s2202 = sadd.s32 %s2200, %s2201
        %s2203 = smul.addr %s2202, 4
        %s2204 = scalar_lea.vmem %s7, %s2203
      $region68: #{double_conv.4} parent=63 // pred_fallthru
        _
      // Predicated region
      $region69: #{double_conv.4} parent=63 // pred_check
        %p2205 = pneg %p289
      $region70: #{double_conv.4} parent=63 // pred_check_branch
        %2207 = sbr.rel (%p2205) target = $region72
      $region71: #{double_conv.4} parent=63 // pred_region
        %p2208 = scmp.lt.s32.totalorder %s28, 1
        %s2209 = scalar_select %p2208, %s28, 1
        %p2210 = scmp.lt.s32.totalorder %s29, 0
        %s2211 = scalar_select %p2210, %s29, 0
        %s2212 = sadd.s32 %s2211, %s2209
        %s2213 = smul.addr %s2212, 2
        %s2214 = scalar_lea.vmem %s8, %s2213
      $region72: #{double_conv.4} parent=63 // pred_fallthru
        _
    $region64: #{double_conv.4} parent=5 // pred_fallthru
      _
  $region6: #{double_conv.4} parent=0 // loop_footer
    %s19 = sadd.s32 1, %s15
  $region7: #{double_conv.4} parent=0 // loop_footer_branch
    %14 = sbr.rel target = $region3
  $region8: #{double_conv.4} parent=0 // loop_exit
    _

</llo_original>
